<compile_context>
chip_gen: v7x
topology: tpu7x:2x2x1
jax: 0.10.0
libtpu: 0.0.40
codegen_flags: <defaults>
</compile_context>

<pallas_src>
import numpy as np
import jax
import jax.numpy as jnp
from jax.experimental import pallas as pl
from jax.experimental.pallas import tpu as pltpu

# ----------------------------- module config (small, synthetic) -------------
N_LEVELS = 4                # n_levels
N_FEATURES = 2              # n_features_per_level
LOG2_HASHMAP_SIZE = 10      # kept small so the table fits comfortably in VMEM
BASE_RES = 16
FINEST_RES = 128
BOX_MIN = (-1.0, -1.0, -1.0)
BOX_MAX = (1.0, 1.0, 1.0)

T = 2 ** LOG2_HASHMAP_SIZE
HASH_MASK = T - 1
PRIMES = (73856093, 19349663, 83492791)
BOX_OFFSETS = [(i, j, k) for i in (0, 1) for j in (0, 1) for k in (0, 1)]

FPAD = 8        # feature dim padded to a full sublane group (aligned MXU/stores)
CHUNK = 128     # rows of the hash table processed per inner step (16+16 vregs)


# ----------------------------- Pallas kernel --------------------------------
def hash_embed_kernel(res_ref, x_ref, emb_ref, out_ref):
    """One grid step == one hash-grid level.

    res_ref : SMEM (n_levels,) int32     -- floor(base * b**l) per level
    x_ref   : VMEM (3, B)      float32   -- sample coordinates, B on lanes
    emb_ref : VMEM (1, FPAD, T) float32  -- this level's table, feature-major
    out_ref : VMEM (1, FPAD, B) float32  -- interpolated features, B on lanes
    """
    l = pl.program_id(0)
    res = res_ref[l].astype(jnp.float32)
    B = x_ref.shape[1]

    # Per-axis voxel index (int) and trilinear weight, all (1, B) lane-dense.
    bl = []
    w = []
    for j in range(3):
        inv_gs = res * (1.0 / (BOX_MAX[j] - BOX_MIN[j]))     # scalar, no divide
        xj = x_ref[j:j + 1, :]                               # (1, B)
        xj_c = jnp.clip(xj, BOX_MIN[j], BOX_MAX[j])          # clamp (as in torch)
        tj = (xj_c - BOX_MIN[j]) * inv_gs
        blj = jnp.floor(tj).astype(jnp.int32)                # bottom-left index
        # NOTE: torch uses the *unclamped* x for the interpolation weights.
        #       (x - vmin)/gs  ==  (x - box_min)*inv_gs - bl
        w.append((xj - BOX_MIN[j]) * inv_gs - blj.astype(jnp.float32))
        bl.append(blj)

    wx, wy, wz = w
    omx, omy, omz = 1.0 - wx, 1.0 - wy, 1.0 - wz

    # Per-corner hash index and trilinear weight product, each (1, B).
    hashes = []
    weights = []
    for (oi, oj, ok) in BOX_OFFSETS:
        h = ((bl[0] + oi) * jnp.int32(PRIMES[0])
             ^ (bl[1] + oj) * jnp.int32(PRIMES[1])
             ^ (bl[2] + ok) * jnp.int32(PRIMES[2])) & jnp.int32(HASH_MASK)
        wc = ((wx if oi else omx) * (wy if oj else omy) * (wz if ok else omz))
        hashes.append(h)
        weights.append(wc)

    # Row iota built ONCE; the chunk offset is folded into the (1, B) hashes.
    row_iota = jax.lax.broadcasted_iota(jnp.int32, (CHUNK, B), 0)

    # Weighted one-hot gather + interpolation as a single accumulated matmul:
    #   out[f, b] = sum_t table[f, t] * sum_corners w_c[b] * [t == h_c[b]]
    acc = jnp.zeros((FPAD, B), jnp.float32)
    for c in range(T // CHUNK):                      # static, fully visible loop
        row0 = c * CHUNK
        oneh = jnp.where(row_iota == (hashes[0] - row0), weights[0], 0.0)
        for h, wc in zip(hashes[1:], weights[1:]):
            # additive accumulate: corners that collide into the same bucket
            # must SUM their weights (matches gather-then-interpolate).
            oneh = oneh + jnp.where(row_iota == (h - row0), wc, 0.0)
        tbl = emb_ref[0, :, row0:row0 + CHUNK]       # (FPAD, CHUNK), static slice
        acc = acc + jnp.dot(tbl, oneh, preferred_element_type=jnp.float32)

    out_ref[0] = acc.astype(out_ref.dtype)


# ----------------------------- wrapper ---------------------------------------
def hash_embedder_forward(x, embeddings, resolutions):
    """x: (B, 3) f32; embeddings: (n_levels, T, F) f32; resolutions: (n_levels,) i32."""
    B = x.shape[0]
    assert B % 128 == 0, "B must be a multiple of 128 (lane-dense layout)"

    # Layout plumbing (outside the kernel): B on lanes, features on sublanes,
    # feature dim zero-padded to FPAD=8 for aligned MXU operands / stores.
    x_t = jnp.transpose(x)                                    # (3, B)
    emb_t = jnp.transpose(embeddings, (0, 2, 1))              # (L, F, T)
    emb_pad = jnp.pad(emb_t, ((0, 0), (0, FPAD - N_FEATURES), (0, 0)))

    out = pl.pallas_call(
        hash_embed_kernel,
        out_shape=jax.ShapeDtypeStruct((N_LEVELS, FPAD, B), jnp.float32),
        grid_spec=pltpu.PrefetchScalarGridSpec(
            num_scalar_prefetch=1,
            grid=(N_LEVELS,),
            in_specs=[
                pl.BlockSpec((3, B), lambda l, res: (0, 0)),
                pl.BlockSpec((1, FPAD, T), lambda l, res: (l, 0, 0)),
            ],
            out_specs=pl.BlockSpec((1, FPAD, B), lambda l, res: (l, 0, 0)),
        ),
        compiler_params=pltpu.CompilerParams(
            # levels are independent -> 2x on v7x's 2 TensorCores
            dimension_semantics=("parallel",)),
    )(resolutions, x_t, emb_pad)

    # (L, FPAD, B) -> drop pad rows -> (B, L*F)  == torch.cat(x_embedded_all, -1)
    out = out[:, :N_FEATURES, :]
    return jnp.transpose(out, (2, 0, 1)).reshape(B, N_LEVELS * N_FEATURES)


# ----------------------------- pure-JAX reference ----------------------------
def reference_forward(x, embeddings, resolutions):
    offsets = jnp.array(BOX_OFFSETS, dtype=jnp.int32)
    box_min = jnp.array(BOX_MIN, dtype=jnp.float32)
    box_max = jnp.array(BOX_MAX, dtype=jnp.float32)
    outs = []
    for i in range(N_LEVELS):
        res = resolutions[i].astype(jnp.float32)
        inv_gs = res * (1.0 / (box_max - box_min))
        xc = jnp.clip(x, box_min, box_max)
        bl = jnp.floor((xc - box_min) * inv_gs).astype(jnp.int32)
        w = (x - box_min) * inv_gs - bl.astype(jnp.float32)   # == (x - vmin)/gs
        vidx = bl[:, None, :] + offsets[None, :, :]                 # (B, 8, 3)
        h = HASH_MASK & (vidx[..., 0] * 73856093
                         ^ vidx[..., 1] * 19349663
                         ^ vidx[..., 2] * 83492791)                 # (B, 8)
        ve = embeddings[i][h]                                       # (B, 8, F)
        wx, wy, wz = w[:, 0:1], w[:, 1:2], w[:, 2:3]
        c00 = ve[:, 0] * (1 - wx) + ve[:, 4] * wx
        c01 = ve[:, 1] * (1 - wx) + ve[:, 5] * wx
        c10 = ve[:, 2] * (1 - wx) + ve[:, 6] * wx
        c11 = ve[:, 3] * (1 - wx) + ve[:, 7] * wx
        c0 = c00 * (1 - wy) + c10 * wy
        c1 = c01 * (1 - wy) + c11 * wy
        outs.append(c0 * (1 - wz) + c1 * wz)
    return jnp.concatenate(outs, axis=-1)


# ----------------------------- main -------------------------------------------
if __name__ == "__main__":
    key = jax.random.PRNGKey(0)
    k_x, k_emb = jax.random.split(key)

    B = 128
    # sample points strictly inside the bounding box
    x = jax.random.uniform(k_x, (B, 3), dtype=jnp.float32,
                           minval=-0.9, maxval=0.9)

    # nn.Embedding tables, init uniform(-1e-4, 1e-4) as in the module
    embeddings = jax.random.uniform(
        k_emb, (N_LEVELS, T, N_FEATURES), dtype=jnp.float32,
        minval=-1e-4, maxval=1e-4)

    # per-level resolution: floor(base * b**l), b = exp((ln(fin)-ln(base))/(L-1))
    b = np.exp((np.log(FINEST_RES) - np.log(BASE_RES)) / (N_LEVELS - 1))
    resolutions = jnp.asarray(
        np.floor(BASE_RES * b ** np.arange(N_LEVELS)).astype(np.int32))

    out = hash_embedder_forward(x, embeddings, resolutions)
    jax.block_until_ready(out)

    ref = reference_forward(x, embeddings, resolutions)
    np.testing.assert_allclose(np.asarray(out), np.asarray(ref),
                               rtol=1e-4, atol=1e-6)

    assert out.shape == (B, N_LEVELS * N_FEATURES)
    print("KERNEL_OK")
</pallas_src>

<mosaic_0001>
module attributes {stable_mosaic.version = 11 : i64} {
  func.func @hash_embed_kernel(%arg0: i32, %arg1: memref<4xi32, #tpu.memory_space<smem>>, %arg2: memref<3x128xf32, #tpu.memory_space<vmem>>, %arg3: memref<1x8x1024xf32, #tpu.memory_space<vmem>>, %arg4: memref<1x8x128xf32, #tpu.memory_space<vmem>>) attributes {dimension_semantics = [#tpu.dimension_semantics<parallel>], iteration_bounds = array<i64: 4>, scalar_prefetch = 1 : i64, scratch_operands = 0 : i64, tpu.core_type = #tpu.core_type<tc>, window_params = [{pipeline_mode = #tpu.pipeline_mode<synchronous>, transform_indices = @transform_0, window_bounds = array<i64: 3, 128>}, {transform_indices = @transform_1, window_bounds = array<i64: 1, 8, 1024>}, {transform_indices = @transform_2, window_bounds = array<i64: 1, 8, 128>}]} {
    %0 = arith.index_cast %arg0 : i32 to index
    %1 = memref.load %arg1[%0] : memref<4xi32, #tpu.memory_space<smem>>
    %2 = arith.sitofp %1 : i32 to f32
    %cst = arith.constant 5.000000e-01 : f32
    %3 = arith.mulf %2, %cst : f32
    %c0 = arith.constant 0 : index
    %c0_0 = arith.constant 0 : index
    %4 = vector.load %arg2[%c0, %c0_0] : memref<3x128xf32, #tpu.memory_space<vmem>>, vector<1x128xf32>
    %cst_1 = arith.constant -1.000000e+00 : f32
    %cst_2 = arith.constant 1.000000e+00 : f32
    %5 = vector.broadcast %cst_1 : f32 to vector<1x128xf32>
    %6 = arith.maximumf %5, %4 : vector<1x128xf32>
    %7 = vector.broadcast %cst_2 : f32 to vector<1x128xf32>
    %8 = arith.minimumf %7, %6 : vector<1x128xf32>
    %cst_3 = arith.constant -1.000000e+00 : f32
    %9 = vector.broadcast %cst_3 : f32 to vector<1x128xf32>
    %10 = arith.subf %8, %9 : vector<1x128xf32>
    %11 = vector.broadcast %3 : f32 to vector<1x128xf32>
    %12 = arith.mulf %10, %11 : vector<1x128xf32>
    %13 = math.floor %12 : vector<1x128xf32>
    %14 = arith.fptosi %13 : vector<1x128xf32> to vector<1x128xi32>
    %cst_4 = arith.constant -1.000000e+00 : f32
    %15 = vector.broadcast %cst_4 : f32 to vector<1x128xf32>
    %16 = arith.subf %4, %15 : vector<1x128xf32>
    %17 = vector.broadcast %3 : f32 to vector<1x128xf32>
    %18 = arith.mulf %16, %17 : vector<1x128xf32>
    %19 = arith.sitofp %14 : vector<1x128xi32> to vector<1x128xf32>
    %20 = arith.subf %18, %19 : vector<1x128xf32>
    %cst_5 = arith.constant 5.000000e-01 : f32
    %21 = arith.mulf %2, %cst_5 : f32
    %c1 = arith.constant 1 : index
    %c0_6 = arith.constant 0 : index
    %22 = vector.load %arg2[%c1, %c0_6] : memref<3x128xf32, #tpu.memory_space<vmem>>, vector<1x128xf32>
    %cst_7 = arith.constant -1.000000e+00 : f32
    %cst_8 = arith.constant 1.000000e+00 : f32
    %23 = vector.broadcast %cst_7 : f32 to vector<1x128xf32>
    %24 = arith.maximumf %23, %22 : vector<1x128xf32>
    %25 = vector.broadcast %cst_8 : f32 to vector<1x128xf32>
    %26 = arith.minimumf %25, %24 : vector<1x128xf32>
    %cst_9 = arith.constant -1.000000e+00 : f32
    %27 = vector.broadcast %cst_9 : f32 to vector<1x128xf32>
    %28 = arith.subf %26, %27 : vector<1x128xf32>
    %29 = vector.broadcast %21 : f32 to vector<1x128xf32>
    %30 = arith.mulf %28, %29 : vector<1x128xf32>
    %31 = math.floor %30 : vector<1x128xf32>
    %32 = arith.fptosi %31 : vector<1x128xf32> to vector<1x128xi32>
    %cst_10 = arith.constant -1.000000e+00 : f32
    %33 = vector.broadcast %cst_10 : f32 to vector<1x128xf32>
    %34 = arith.subf %22, %33 : vector<1x128xf32>
    %35 = vector.broadcast %21 : f32 to vector<1x128xf32>
    %36 = arith.mulf %34, %35 : vector<1x128xf32>
    %37 = arith.sitofp %32 : vector<1x128xi32> to vector<1x128xf32>
    %38 = arith.subf %36, %37 : vector<1x128xf32>
    %cst_11 = arith.constant 5.000000e-01 : f32
    %39 = arith.mulf %2, %cst_11 : f32
    %c2 = arith.constant 2 : index
    %c0_12 = arith.constant 0 : index
    %40 = vector.load %arg2[%c2, %c0_12] : memref<3x128xf32, #tpu.memory_space<vmem>>, vector<1x128xf32>
    %cst_13 = arith.constant -1.000000e+00 : f32
    %cst_14 = arith.constant 1.000000e+00 : f32
    %41 = vector.broadcast %cst_13 : f32 to vector<1x128xf32>
    %42 = arith.maximumf %41, %40 : vector<1x128xf32>
    %43 = vector.broadcast %cst_14 : f32 to vector<1x128xf32>
    %44 = arith.minimumf %43, %42 : vector<1x128xf32>
    %cst_15 = arith.constant -1.000000e+00 : f32
    %45 = vector.broadcast %cst_15 : f32 to vector<1x128xf32>
    %46 = arith.subf %44, %45 : vector<1x128xf32>
    %47 = vector.broadcast %39 : f32 to vector<1x128xf32>
    %48 = arith.mulf %46, %47 : vector<1x128xf32>
    %49 = math.floor %48 : vector<1x128xf32>
    %50 = arith.fptosi %49 : vector<1x128xf32> to vector<1x128xi32>
    %cst_16 = arith.constant -1.000000e+00 : f32
    %51 = vector.broadcast %cst_16 : f32 to vector<1x128xf32>
    %52 = arith.subf %40, %51 : vector<1x128xf32>
    %53 = vector.broadcast %39 : f32 to vector<1x128xf32>
    %54 = arith.mulf %52, %53 : vector<1x128xf32>
    %55 = arith.sitofp %50 : vector<1x128xi32> to vector<1x128xf32>
    %56 = arith.subf %54, %55 : vector<1x128xf32>
    %cst_17 = arith.constant 1.000000e+00 : f32
    %57 = vector.broadcast %cst_17 : f32 to vector<1x128xf32>
    %58 = arith.subf %57, %20 : vector<1x128xf32>
    %cst_18 = arith.constant 1.000000e+00 : f32
    %59 = vector.broadcast %cst_18 : f32 to vector<1x128xf32>
    %60 = arith.subf %59, %38 : vector<1x128xf32>
    %cst_19 = arith.constant 1.000000e+00 : f32
    %61 = vector.broadcast %cst_19 : f32 to vector<1x128xf32>
    %62 = arith.subf %61, %56 : vector<1x128xf32>
    %c0_i32 = arith.constant 0 : i32
    %63 = vector.broadcast %c0_i32 : i32 to vector<1x128xi32>
    %64 = arith.addi %14, %63 : vector<1x128xi32>
    %c73856093_i32 = arith.constant 73856093 : i32
    %65 = vector.broadcast %c73856093_i32 : i32 to vector<1x128xi32>
    %66 = arith.muli %64, %65 : vector<1x128xi32>
    %c0_i32_20 = arith.constant 0 : i32
    %67 = vector.broadcast %c0_i32_20 : i32 to vector<1x128xi32>
    %68 = arith.addi %32, %67 : vector<1x128xi32>
    %c19349663_i32 = arith.constant 19349663 : i32
    %69 = vector.broadcast %c19349663_i32 : i32 to vector<1x128xi32>
    %70 = arith.muli %68, %69 : vector<1x128xi32>
    %71 = arith.xori %66, %70 : vector<1x128xi32>
    %c0_i32_21 = arith.constant 0 : i32
    %72 = vector.broadcast %c0_i32_21 : i32 to vector<1x128xi32>
    %73 = arith.addi %50, %72 : vector<1x128xi32>
    %c83492791_i32 = arith.constant 83492791 : i32
    %74 = vector.broadcast %c83492791_i32 : i32 to vector<1x128xi32>
    %75 = arith.muli %73, %74 : vector<1x128xi32>
    %76 = arith.xori %71, %75 : vector<1x128xi32>
    %c1023_i32 = arith.constant 1023 : i32
    %77 = vector.broadcast %c1023_i32 : i32 to vector<1x128xi32>
    %78 = arith.andi %76, %77 : vector<1x128xi32>
    %79 = arith.mulf %58, %60 : vector<1x128xf32>
    %80 = arith.mulf %79, %62 : vector<1x128xf32>
    %c0_i32_22 = arith.constant 0 : i32
    %81 = vector.broadcast %c0_i32_22 : i32 to vector<1x128xi32>
    %82 = arith.addi %14, %81 : vector<1x128xi32>
    %c73856093_i32_23 = arith.constant 73856093 : i32
    %83 = vector.broadcast %c73856093_i32_23 : i32 to vector<1x128xi32>
    %84 = arith.muli %82, %83 : vector<1x128xi32>
    %c0_i32_24 = arith.constant 0 : i32
    %85 = vector.broadcast %c0_i32_24 : i32 to vector<1x128xi32>
    %86 = arith.addi %32, %85 : vector<1x128xi32>
    %c19349663_i32_25 = arith.constant 19349663 : i32
    %87 = vector.broadcast %c19349663_i32_25 : i32 to vector<1x128xi32>
    %88 = arith.muli %86, %87 : vector<1x128xi32>
    %89 = arith.xori %84, %88 : vector<1x128xi32>
    %c1_i32 = arith.constant 1 : i32
    %90 = vector.broadcast %c1_i32 : i32 to vector<1x128xi32>
    %91 = arith.addi %50, %90 : vector<1x128xi32>
    %c83492791_i32_26 = arith.constant 83492791 : i32
    %92 = vector.broadcast %c83492791_i32_26 : i32 to vector<1x128xi32>
    %93 = arith.muli %91, %92 : vector<1x128xi32>
    %94 = arith.xori %89, %93 : vector<1x128xi32>
    %c1023_i32_27 = arith.constant 1023 : i32
    %95 = vector.broadcast %c1023_i32_27 : i32 to vector<1x128xi32>
    %96 = arith.andi %94, %95 : vector<1x128xi32>
    %97 = arith.mulf %58, %60 : vector<1x128xf32>
    %98 = arith.mulf %97, %56 : vector<1x128xf32>
    %c0_i32_28 = arith.constant 0 : i32
    %99 = vector.broadcast %c0_i32_28 : i32 to vector<1x128xi32>
    %100 = arith.addi %14, %99 : vector<1x128xi32>
    %c73856093_i32_29 = arith.constant 73856093 : i32
    %101 = vector.broadcast %c73856093_i32_29 : i32 to vector<1x128xi32>
    %102 = arith.muli %100, %101 : vector<1x128xi32>
    %c1_i32_30 = arith.constant 1 : i32
    %103 = vector.broadcast %c1_i32_30 : i32 to vector<1x128xi32>
    %104 = arith.addi %32, %103 : vector<1x128xi32>
    %c19349663_i32_31 = arith.constant 19349663 : i32
    %105 = vector.broadcast %c19349663_i32_31 : i32 to vector<1x128xi32>
    %106 = arith.muli %104, %105 : vector<1x128xi32>
    %107 = arith.xori %102, %106 : vector<1x128xi32>
    %c0_i32_32 = arith.constant 0 : i32
    %108 = vector.broadcast %c0_i32_32 : i32 to vector<1x128xi32>
    %109 = arith.addi %50, %108 : vector<1x128xi32>
    %c83492791_i32_33 = arith.constant 83492791 : i32
    %110 = vector.broadcast %c83492791_i32_33 : i32 to vector<1x128xi32>
    %111 = arith.muli %109, %110 : vector<1x128xi32>
    %112 = arith.xori %107, %111 : vector<1x128xi32>
    %c1023_i32_34 = arith.constant 1023 : i32
    %113 = vector.broadcast %c1023_i32_34 : i32 to vector<1x128xi32>
    %114 = arith.andi %112, %113 : vector<1x128xi32>
    %115 = arith.mulf %58, %38 : vector<1x128xf32>
    %116 = arith.mulf %115, %62 : vector<1x128xf32>
    %c0_i32_35 = arith.constant 0 : i32
    %117 = vector.broadcast %c0_i32_35 : i32 to vector<1x128xi32>
    %118 = arith.addi %14, %117 : vector<1x128xi32>
    %c73856093_i32_36 = arith.constant 73856093 : i32
    %119 = vector.broadcast %c73856093_i32_36 : i32 to vector<1x128xi32>
    %120 = arith.muli %118, %119 : vector<1x128xi32>
    %c1_i32_37 = arith.constant 1 : i32
    %121 = vector.broadcast %c1_i32_37 : i32 to vector<1x128xi32>
    %122 = arith.addi %32, %121 : vector<1x128xi32>
    %c19349663_i32_38 = arith.constant 19349663 : i32
    %123 = vector.broadcast %c19349663_i32_38 : i32 to vector<1x128xi32>
    %124 = arith.muli %122, %123 : vector<1x128xi32>
    %125 = arith.xori %120, %124 : vector<1x128xi32>
    %c1_i32_39 = arith.constant 1 : i32
    %126 = vector.broadcast %c1_i32_39 : i32 to vector<1x128xi32>
    %127 = arith.addi %50, %126 : vector<1x128xi32>
    %c83492791_i32_40 = arith.constant 83492791 : i32
    %128 = vector.broadcast %c83492791_i32_40 : i32 to vector<1x128xi32>
    %129 = arith.muli %127, %128 : vector<1x128xi32>
    %130 = arith.xori %125, %129 : vector<1x128xi32>
    %c1023_i32_41 = arith.constant 1023 : i32
    %131 = vector.broadcast %c1023_i32_41 : i32 to vector<1x128xi32>
    %132 = arith.andi %130, %131 : vector<1x128xi32>
    %133 = arith.mulf %58, %38 : vector<1x128xf32>
    %134 = arith.mulf %133, %56 : vector<1x128xf32>
    %c1_i32_42 = arith.constant 1 : i32
    %135 = vector.broadcast %c1_i32_42 : i32 to vector<1x128xi32>
    %136 = arith.addi %14, %135 : vector<1x128xi32>
    %c73856093_i32_43 = arith.constant 73856093 : i32
    %137 = vector.broadcast %c73856093_i32_43 : i32 to vector<1x128xi32>
    %138 = arith.muli %136, %137 : vector<1x128xi32>
    %c0_i32_44 = arith.constant 0 : i32
    %139 = vector.broadcast %c0_i32_44 : i32 to vector<1x128xi32>
    %140 = arith.addi %32, %139 : vector<1x128xi32>
    %c19349663_i32_45 = arith.constant 19349663 : i32
    %141 = vector.broadcast %c19349663_i32_45 : i32 to vector<1x128xi32>
    %142 = arith.muli %140, %141 : vector<1x128xi32>
    %143 = arith.xori %138, %142 : vector<1x128xi32>
    %c0_i32_46 = arith.constant 0 : i32
    %144 = vector.broadcast %c0_i32_46 : i32 to vector<1x128xi32>
    %145 = arith.addi %50, %144 : vector<1x128xi32>
    %c83492791_i32_47 = arith.constant 83492791 : i32
    %146 = vector.broadcast %c83492791_i32_47 : i32 to vector<1x128xi32>
    %147 = arith.muli %145, %146 : vector<1x128xi32>
    %148 = arith.xori %143, %147 : vector<1x128xi32>
    %c1023_i32_48 = arith.constant 1023 : i32
    %149 = vector.broadcast %c1023_i32_48 : i32 to vector<1x128xi32>
    %150 = arith.andi %148, %149 : vector<1x128xi32>
    %151 = arith.mulf %20, %60 : vector<1x128xf32>
    %152 = arith.mulf %151, %62 : vector<1x128xf32>
    %c1_i32_49 = arith.constant 1 : i32
    %153 = vector.broadcast %c1_i32_49 : i32 to vector<1x128xi32>
    %154 = arith.addi %14, %153 : vector<1x128xi32>
    %c73856093_i32_50 = arith.constant 73856093 : i32
    %155 = vector.broadcast %c73856093_i32_50 : i32 to vector<1x128xi32>
    %156 = arith.muli %154, %155 : vector<1x128xi32>
    %c0_i32_51 = arith.constant 0 : i32
    %157 = vector.broadcast %c0_i32_51 : i32 to vector<1x128xi32>
    %158 = arith.addi %32, %157 : vector<1x128xi32>
    %c19349663_i32_52 = arith.constant 19349663 : i32
    %159 = vector.broadcast %c19349663_i32_52 : i32 to vector<1x128xi32>
    %160 = arith.muli %158, %159 : vector<1x128xi32>
    %161 = arith.xori %156, %160 : vector<1x128xi32>
    %c1_i32_53 = arith.constant 1 : i32
    %162 = vector.broadcast %c1_i32_53 : i32 to vector<1x128xi32>
    %163 = arith.addi %50, %162 : vector<1x128xi32>
    %c83492791_i32_54 = arith.constant 83492791 : i32
    %164 = vector.broadcast %c83492791_i32_54 : i32 to vector<1x128xi32>
    %165 = arith.muli %163, %164 : vector<1x128xi32>
    %166 = arith.xori %161, %165 : vector<1x128xi32>
    %c1023_i32_55 = arith.constant 1023 : i32
    %167 = vector.broadcast %c1023_i32_55 : i32 to vector<1x128xi32>
    %168 = arith.andi %166, %167 : vector<1x128xi32>
    %169 = arith.mulf %20, %60 : vector<1x128xf32>
    %170 = arith.mulf %169, %56 : vector<1x128xf32>
    %c1_i32_56 = arith.constant 1 : i32
    %171 = vector.broadcast %c1_i32_56 : i32 to vector<1x128xi32>
    %172 = arith.addi %14, %171 : vector<1x128xi32>
    %c73856093_i32_57 = arith.constant 73856093 : i32
    %173 = vector.broadcast %c73856093_i32_57 : i32 to vector<1x128xi32>
    %174 = arith.muli %172, %173 : vector<1x128xi32>
    %c1_i32_58 = arith.constant 1 : i32
    %175 = vector.broadcast %c1_i32_58 : i32 to vector<1x128xi32>
    %176 = arith.addi %32, %175 : vector<1x128xi32>
    %c19349663_i32_59 = arith.constant 19349663 : i32
    %177 = vector.broadcast %c19349663_i32_59 : i32 to vector<1x128xi32>
    %178 = arith.muli %176, %177 : vector<1x128xi32>
    %179 = arith.xori %174, %178 : vector<1x128xi32>
    %c0_i32_60 = arith.constant 0 : i32
    %180 = vector.broadcast %c0_i32_60 : i32 to vector<1x128xi32>
    %181 = arith.addi %50, %180 : vector<1x128xi32>
    %c83492791_i32_61 = arith.constant 83492791 : i32
    %182 = vector.broadcast %c83492791_i32_61 : i32 to vector<1x128xi32>
    %183 = arith.muli %181, %182 : vector<1x128xi32>
    %184 = arith.xori %179, %183 : vector<1x128xi32>
    %c1023_i32_62 = arith.constant 1023 : i32
    %185 = vector.broadcast %c1023_i32_62 : i32 to vector<1x128xi32>
    %186 = arith.andi %184, %185 : vector<1x128xi32>
    %187 = arith.mulf %20, %38 : vector<1x128xf32>
    %188 = arith.mulf %187, %62 : vector<1x128xf32>
    %c1_i32_63 = arith.constant 1 : i32
    %189 = vector.broadcast %c1_i32_63 : i32 to vector<1x128xi32>
    %190 = arith.addi %14, %189 : vector<1x128xi32>
    %c73856093_i32_64 = arith.constant 73856093 : i32
    %191 = vector.broadcast %c73856093_i32_64 : i32 to vector<1x128xi32>
    %192 = arith.muli %190, %191 : vector<1x128xi32>
    %c1_i32_65 = arith.constant 1 : i32
    %193 = vector.broadcast %c1_i32_65 : i32 to vector<1x128xi32>
    %194 = arith.addi %32, %193 : vector<1x128xi32>
    %c19349663_i32_66 = arith.constant 19349663 : i32
    %195 = vector.broadcast %c19349663_i32_66 : i32 to vector<1x128xi32>
    %196 = arith.muli %194, %195 : vector<1x128xi32>
    %197 = arith.xori %192, %196 : vector<1x128xi32>
    %c1_i32_67 = arith.constant 1 : i32
    %198 = vector.broadcast %c1_i32_67 : i32 to vector<1x128xi32>
    %199 = arith.addi %50, %198 : vector<1x128xi32>
    %c83492791_i32_68 = arith.constant 83492791 : i32
    %200 = vector.broadcast %c83492791_i32_68 : i32 to vector<1x128xi32>
    %201 = arith.muli %199, %200 : vector<1x128xi32>
    %202 = arith.xori %197, %201 : vector<1x128xi32>
    %c1023_i32_69 = arith.constant 1023 : i32
    %203 = vector.broadcast %c1023_i32_69 : i32 to vector<1x128xi32>
    %204 = arith.andi %202, %203 : vector<1x128xi32>
    %205 = arith.mulf %20, %38 : vector<1x128xf32>
    %206 = arith.mulf %205, %56 : vector<1x128xf32>
    %207 = tpu.iota {dimensions = array<i32: 0>} : vector<128x128xi32>
    %cst_70 = arith.constant 0.000000e+00 : f32
    %208 = vector.broadcast %cst_70 : f32 to vector<8x128xf32>
    %c0_i32_71 = arith.constant 0 : i32
    %209 = vector.broadcast %c0_i32_71 : i32 to vector<1x128xi32>
    %210 = arith.subi %78, %209 : vector<1x128xi32>
    %211 = vector.broadcast %210 : vector<1x128xi32> to vector<128x128xi32>
    %212 = arith.cmpi eq, %207, %211 : vector<128x128xi32>
    %cst_72 = arith.constant 0.000000e+00 : f32
    %213 = vector.shape_cast %80 : vector<1x128xf32> to vector<1x128xf32>
    %214 = vector.broadcast %213 : vector<1x128xf32> to vector<128x128xf32>
    %215 = vector.broadcast %cst_72 : f32 to vector<128x128xf32>
    %216 = arith.select %212, %214, %215 : vector<128x128xi1>, vector<128x128xf32>
    %c0_i32_73 = arith.constant 0 : i32
    %217 = vector.broadcast %c0_i32_73 : i32 to vector<1x128xi32>
    %218 = arith.subi %96, %217 : vector<1x128xi32>
    %219 = vector.broadcast %218 : vector<1x128xi32> to vector<128x128xi32>
    %220 = arith.cmpi eq, %207, %219 : vector<128x128xi32>
    %cst_74 = arith.constant 0.000000e+00 : f32
    %221 = vector.shape_cast %98 : vector<1x128xf32> to vector<1x128xf32>
    %222 = vector.broadcast %221 : vector<1x128xf32> to vector<128x128xf32>
    %223 = vector.broadcast %cst_74 : f32 to vector<128x128xf32>
    %224 = arith.select %220, %222, %223 : vector<128x128xi1>, vector<128x128xf32>
    %225 = arith.addf %216, %224 : vector<128x128xf32>
    %c0_i32_75 = arith.constant 0 : i32
    %226 = vector.broadcast %c0_i32_75 : i32 to vector<1x128xi32>
    %227 = arith.subi %114, %226 : vector<1x128xi32>
    %228 = vector.broadcast %227 : vector<1x128xi32> to vector<128x128xi32>
    %229 = arith.cmpi eq, %207, %228 : vector<128x128xi32>
    %cst_76 = arith.constant 0.000000e+00 : f32
    %230 = vector.shape_cast %116 : vector<1x128xf32> to vector<1x128xf32>
    %231 = vector.broadcast %230 : vector<1x128xf32> to vector<128x128xf32>
    %232 = vector.broadcast %cst_76 : f32 to vector<128x128xf32>
    %233 = arith.select %229, %231, %232 : vector<128x128xi1>, vector<128x128xf32>
    %234 = arith.addf %225, %233 : vector<128x128xf32>
    %c0_i32_77 = arith.constant 0 : i32
    %235 = vector.broadcast %c0_i32_77 : i32 to vector<1x128xi32>
    %236 = arith.subi %132, %235 : vector<1x128xi32>
    %237 = vector.broadcast %236 : vector<1x128xi32> to vector<128x128xi32>
    %238 = arith.cmpi eq, %207, %237 : vector<128x128xi32>
    %cst_78 = arith.constant 0.000000e+00 : f32
    %239 = vector.shape_cast %134 : vector<1x128xf32> to vector<1x128xf32>
    %240 = vector.broadcast %239 : vector<1x128xf32> to vector<128x128xf32>
    %241 = vector.broadcast %cst_78 : f32 to vector<128x128xf32>
    %242 = arith.select %238, %240, %241 : vector<128x128xi1>, vector<128x128xf32>
    %243 = arith.addf %234, %242 : vector<128x128xf32>
    %c0_i32_79 = arith.constant 0 : i32
    %244 = vector.broadcast %c0_i32_79 : i32 to vector<1x128xi32>
    %245 = arith.subi %150, %244 : vector<1x128xi32>
    %246 = vector.broadcast %245 : vector<1x128xi32> to vector<128x128xi32>
    %247 = arith.cmpi eq, %207, %246 : vector<128x128xi32>
    %cst_80 = arith.constant 0.000000e+00 : f32
    %248 = vector.shape_cast %152 : vector<1x128xf32> to vector<1x128xf32>
    %249 = vector.broadcast %248 : vector<1x128xf32> to vector<128x128xf32>
    %250 = vector.broadcast %cst_80 : f32 to vector<128x128xf32>
    %251 = arith.select %247, %249, %250 : vector<128x128xi1>, vector<128x128xf32>
    %252 = arith.addf %243, %251 : vector<128x128xf32>
    %c0_i32_81 = arith.constant 0 : i32
    %253 = vector.broadcast %c0_i32_81 : i32 to vector<1x128xi32>
    %254 = arith.subi %168, %253 : vector<1x128xi32>
    %255 = vector.broadcast %254 : vector<1x128xi32> to vector<128x128xi32>
    %256 = arith.cmpi eq, %207, %255 : vector<128x128xi32>
    %cst_82 = arith.constant 0.000000e+00 : f32
    %257 = vector.shape_cast %170 : vector<1x128xf32> to vector<1x128xf32>
    %258 = vector.broadcast %257 : vector<1x128xf32> to vector<128x128xf32>
    %259 = vector.broadcast %cst_82 : f32 to vector<128x128xf32>
    %260 = arith.select %256, %258, %259 : vector<128x128xi1>, vector<128x128xf32>
    %261 = arith.addf %252, %260 : vector<128x128xf32>
    %c0_i32_83 = arith.constant 0 : i32
    %262 = vector.broadcast %c0_i32_83 : i32 to vector<1x128xi32>
    %263 = arith.subi %186, %262 : vector<1x128xi32>
    %264 = vector.broadcast %263 : vector<1x128xi32> to vector<128x128xi32>
    %265 = arith.cmpi eq, %207, %264 : vector<128x128xi32>
    %cst_84 = arith.constant 0.000000e+00 : f32
    %266 = vector.shape_cast %188 : vector<1x128xf32> to vector<1x128xf32>
    %267 = vector.broadcast %266 : vector<1x128xf32> to vector<128x128xf32>
    %268 = vector.broadcast %cst_84 : f32 to vector<128x128xf32>
    %269 = arith.select %265, %267, %268 : vector<128x128xi1>, vector<128x128xf32>
    %270 = arith.addf %261, %269 : vector<128x128xf32>
    %c0_i32_85 = arith.constant 0 : i32
    %271 = vector.broadcast %c0_i32_85 : i32 to vector<1x128xi32>
    %272 = arith.subi %204, %271 : vector<1x128xi32>
    %273 = vector.broadcast %272 : vector<1x128xi32> to vector<128x128xi32>
    %274 = arith.cmpi eq, %207, %273 : vector<128x128xi32>
    %cst_86 = arith.constant 0.000000e+00 : f32
    %275 = vector.shape_cast %206 : vector<1x128xf32> to vector<1x128xf32>
    %276 = vector.broadcast %275 : vector<1x128xf32> to vector<128x128xf32>
    %277 = vector.broadcast %cst_86 : f32 to vector<128x128xf32>
    %278 = arith.select %274, %276, %277 : vector<128x128xi1>, vector<128x128xf32>
    %279 = arith.addf %270, %278 : vector<128x128xf32>
    %c0_87 = arith.constant 0 : index
    %c0_88 = arith.constant 0 : index
    %c0_89 = arith.constant 0 : index
    %280 = vector.load %arg3[%c0_87, %c0_88, %c0_89] : memref<1x8x1024xf32, #tpu.memory_space<vmem>>, vector<1x8x128xf32>
    %281 = vector.shape_cast %280 : vector<1x8x128xf32> to vector<8x128xf32>
    %cst_90 = arith.constant dense<0.000000e+00> : vector<8x128xf32>
    %282 = tpu.matmul %281, %279, %cst_90 {dimension_numbers = #tpu.dot_dimension_numbers<[1], [0], [0], [1], [0, 0, 1, 1], [], []>} : vector<8x128xf32>, vector<128x128xf32>, vector<8x128xf32> -> vector<8x128xf32>
    %283 = arith.addf %208, %282 : vector<8x128xf32>
    %c128_i32 = arith.constant 128 : i32
    %284 = vector.broadcast %c128_i32 : i32 to vector<1x128xi32>
    %285 = arith.subi %78, %284 : vector<1x128xi32>
    %286 = vector.broadcast %285 : vector<1x128xi32> to vector<128x128xi32>
    %287 = arith.cmpi eq, %207, %286 : vector<128x128xi32>
    %cst_91 = arith.constant 0.000000e+00 : f32
    %288 = vector.shape_cast %80 : vector<1x128xf32> to vector<1x128xf32>
    %289 = vector.broadcast %288 : vector<1x128xf32> to vector<128x128xf32>
    %290 = vector.broadcast %cst_91 : f32 to vector<128x128xf32>
    %291 = arith.select %287, %289, %290 : vector<128x128xi1>, vector<128x128xf32>
    %c128_i32_92 = arith.constant 128 : i32
    %292 = vector.broadcast %c128_i32_92 : i32 to vector<1x128xi32>
    %293 = arith.subi %96, %292 : vector<1x128xi32>
    %294 = vector.broadcast %293 : vector<1x128xi32> to vector<128x128xi32>
    %295 = arith.cmpi eq, %207, %294 : vector<128x128xi32>
    %cst_93 = arith.constant 0.000000e+00 : f32
    %296 = vector.shape_cast %98 : vector<1x128xf32> to vector<1x128xf32>
    %297 = vector.broadcast %296 : vector<1x128xf32> to vector<128x128xf32>
    %298 = vector.broadcast %cst_93 : f32 to vector<128x128xf32>
    %299 = arith.select %295, %297, %298 : vector<128x128xi1>, vector<128x128xf32>
    %300 = arith.addf %291, %299 : vector<128x128xf32>
    %c128_i32_94 = arith.constant 128 : i32
    %301 = vector.broadcast %c128_i32_94 : i32 to vector<1x128xi32>
    %302 = arith.subi %114, %301 : vector<1x128xi32>
    %303 = vector.broadcast %302 : vector<1x128xi32> to vector<128x128xi32>
    %304 = arith.cmpi eq, %207, %303 : vector<128x128xi32>
    %cst_95 = arith.constant 0.000000e+00 : f32
    %305 = vector.shape_cast %116 : vector<1x128xf32> to vector<1x128xf32>
    %306 = vector.broadcast %305 : vector<1x128xf32> to vector<128x128xf32>
    %307 = vector.broadcast %cst_95 : f32 to vector<128x128xf32>
    %308 = arith.select %304, %306, %307 : vector<128x128xi1>, vector<128x128xf32>
    %309 = arith.addf %300, %308 : vector<128x128xf32>
    %c128_i32_96 = arith.constant 128 : i32
    %310 = vector.broadcast %c128_i32_96 : i32 to vector<1x128xi32>
    %311 = arith.subi %132, %310 : vector<1x128xi32>
    %312 = vector.broadcast %311 : vector<1x128xi32> to vector<128x128xi32>
    %313 = arith.cmpi eq, %207, %312 : vector<128x128xi32>
    %cst_97 = arith.constant 0.000000e+00 : f32
    %314 = vector.shape_cast %134 : vector<1x128xf32> to vector<1x128xf32>
    %315 = vector.broadcast %314 : vector<1x128xf32> to vector<128x128xf32>
    %316 = vector.broadcast %cst_97 : f32 to vector<128x128xf32>
    %317 = arith.select %313, %315, %316 : vector<128x128xi1>, vector<128x128xf32>
    %318 = arith.addf %309, %317 : vector<128x128xf32>
    %c128_i32_98 = arith.constant 128 : i32
    %319 = vector.broadcast %c128_i32_98 : i32 to vector<1x128xi32>
    %320 = arith.subi %150, %319 : vector<1x128xi32>
    %321 = vector.broadcast %320 : vector<1x128xi32> to vector<128x128xi32>
    %322 = arith.cmpi eq, %207, %321 : vector<128x128xi32>
    %cst_99 = arith.constant 0.000000e+00 : f32
    %323 = vector.shape_cast %152 : vector<1x128xf32> to vector<1x128xf32>
    %324 = vector.broadcast %323 : vector<1x128xf32> to vector<128x128xf32>
    %325 = vector.broadcast %cst_99 : f32 to vector<128x128xf32>
    %326 = arith.select %322, %324, %325 : vector<128x128xi1>, vector<128x128xf32>
    %327 = arith.addf %318, %326 : vector<128x128xf32>
    %c128_i32_100 = arith.constant 128 : i32
    %328 = vector.broadcast %c128_i32_100 : i32 to vector<1x128xi32>
    %329 = arith.subi %168, %328 : vector<1x128xi32>
    %330 = vector.broadcast %329 : vector<1x128xi32> to vector<128x128xi32>
    %331 = arith.cmpi eq, %207, %330 : vector<128x128xi32>
    %cst_101 = arith.constant 0.000000e+00 : f32
    %332 = vector.shape_cast %170 : vector<1x128xf32> to vector<1x128xf32>
    %333 = vector.broadcast %332 : vector<1x128xf32> to vector<128x128xf32>
    %334 = vector.broadcast %cst_101 : f32 to vector<128x128xf32>
    %335 = arith.select %331, %333, %334 : vector<128x128xi1>, vector<128x128xf32>
    %336 = arith.addf %327, %335 : vector<128x128xf32>
    %c128_i32_102 = arith.constant 128 : i32
    %337 = vector.broadcast %c128_i32_102 : i32 to vector<1x128xi32>
    %338 = arith.subi %186, %337 : vector<1x128xi32>
    %339 = vector.broadcast %338 : vector<1x128xi32> to vector<128x128xi32>
    %340 = arith.cmpi eq, %207, %339 : vector<128x128xi32>
    %cst_103 = arith.constant 0.000000e+00 : f32
    %341 = vector.shape_cast %188 : vector<1x128xf32> to vector<1x128xf32>
    %342 = vector.broadcast %341 : vector<1x128xf32> to vector<128x128xf32>
    %343 = vector.broadcast %cst_103 : f32 to vector<128x128xf32>
    %344 = arith.select %340, %342, %343 : vector<128x128xi1>, vector<128x128xf32>
    %345 = arith.addf %336, %344 : vector<128x128xf32>
    %c128_i32_104 = arith.constant 128 : i32
    %346 = vector.broadcast %c128_i32_104 : i32 to vector<1x128xi32>
    %347 = arith.subi %204, %346 : vector<1x128xi32>
    %348 = vector.broadcast %347 : vector<1x128xi32> to vector<128x128xi32>
    %349 = arith.cmpi eq, %207, %348 : vector<128x128xi32>
    %cst_105 = arith.constant 0.000000e+00 : f32
    %350 = vector.shape_cast %206 : vector<1x128xf32> to vector<1x128xf32>
    %351 = vector.broadcast %350 : vector<1x128xf32> to vector<128x128xf32>
    %352 = vector.broadcast %cst_105 : f32 to vector<128x128xf32>
    %353 = arith.select %349, %351, %352 : vector<128x128xi1>, vector<128x128xf32>
    %354 = arith.addf %345, %353 : vector<128x128xf32>
    %c0_106 = arith.constant 0 : index
    %c0_107 = arith.constant 0 : index
    %c128 = arith.constant 128 : index
    %355 = vector.load %arg3[%c0_106, %c0_107, %c128] : memref<1x8x1024xf32, #tpu.memory_space<vmem>>, vector<1x8x128xf32>
    %356 = vector.shape_cast %355 : vector<1x8x128xf32> to vector<8x128xf32>
    %cst_108 = arith.constant dense<0.000000e+00> : vector<8x128xf32>
    %357 = tpu.matmul %356, %354, %cst_108 {dimension_numbers = #tpu.dot_dimension_numbers<[1], [0], [0], [1], [0, 0, 1, 1], [], []>} : vector<8x128xf32>, vector<128x128xf32>, vector<8x128xf32> -> vector<8x128xf32>
    %358 = arith.addf %283, %357 : vector<8x128xf32>
    %c256_i32 = arith.constant 256 : i32
    %359 = vector.broadcast %c256_i32 : i32 to vector<1x128xi32>
    %360 = arith.subi %78, %359 : vector<1x128xi32>
    %361 = vector.broadcast %360 : vector<1x128xi32> to vector<128x128xi32>
    %362 = arith.cmpi eq, %207, %361 : vector<128x128xi32>
    %cst_109 = arith.constant 0.000000e+00 : f32
    %363 = vector.shape_cast %80 : vector<1x128xf32> to vector<1x128xf32>
    %364 = vector.broadcast %363 : vector<1x128xf32> to vector<128x128xf32>
    %365 = vector.broadcast %cst_109 : f32 to vector<128x128xf32>
    %366 = arith.select %362, %364, %365 : vector<128x128xi1>, vector<128x128xf32>
    %c256_i32_110 = arith.constant 256 : i32
    %367 = vector.broadcast %c256_i32_110 : i32 to vector<1x128xi32>
    %368 = arith.subi %96, %367 : vector<1x128xi32>
    %369 = vector.broadcast %368 : vector<1x128xi32> to vector<128x128xi32>
    %370 = arith.cmpi eq, %207, %369 : vector<128x128xi32>
    %cst_111 = arith.constant 0.000000e+00 : f32
    %371 = vector.shape_cast %98 : vector<1x128xf32> to vector<1x128xf32>
    %372 = vector.broadcast %371 : vector<1x128xf32> to vector<128x128xf32>
    %373 = vector.broadcast %cst_111 : f32 to vector<128x128xf32>
    %374 = arith.select %370, %372, %373 : vector<128x128xi1>, vector<128x128xf32>
    %375 = arith.addf %366, %374 : vector<128x128xf32>
    %c256_i32_112 = arith.constant 256 : i32
    %376 = vector.broadcast %c256_i32_112 : i32 to vector<1x128xi32>
    %377 = arith.subi %114, %376 : vector<1x128xi32>
    %378 = vector.broadcast %377 : vector<1x128xi32> to vector<128x128xi32>
    %379 = arith.cmpi eq, %207, %378 : vector<128x128xi32>
    %cst_113 = arith.constant 0.000000e+00 : f32
    %380 = vector.shape_cast %116 : vector<1x128xf32> to vector<1x128xf32>
    %381 = vector.broadcast %380 : vector<1x128xf32> to vector<128x128xf32>
    %382 = vector.broadcast %cst_113 : f32 to vector<128x128xf32>
    %383 = arith.select %379, %381, %382 : vector<128x128xi1>, vector<128x128xf32>
    %384 = arith.addf %375, %383 : vector<128x128xf32>
    %c256_i32_114 = arith.constant 256 : i32
    %385 = vector.broadcast %c256_i32_114 : i32 to vector<1x128xi32>
    %386 = arith.subi %132, %385 : vector<1x128xi32>
    %387 = vector.broadcast %386 : vector<1x128xi32> to vector<128x128xi32>
    %388 = arith.cmpi eq, %207, %387 : vector<128x128xi32>
    %cst_115 = arith.constant 0.000000e+00 : f32
    %389 = vector.shape_cast %134 : vector<1x128xf32> to vector<1x128xf32>
    %390 = vector.broadcast %389 : vector<1x128xf32> to vector<128x128xf32>
    %391 = vector.broadcast %cst_115 : f32 to vector<128x128xf32>
    %392 = arith.select %388, %390, %391 : vector<128x128xi1>, vector<128x128xf32>
    %393 = arith.addf %384, %392 : vector<128x128xf32>
    %c256_i32_116 = arith.constant 256 : i32
    %394 = vector.broadcast %c256_i32_116 : i32 to vector<1x128xi32>
    %395 = arith.subi %150, %394 : vector<1x128xi32>
    %396 = vector.broadcast %395 : vector<1x128xi32> to vector<128x128xi32>
    %397 = arith.cmpi eq, %207, %396 : vector<128x128xi32>
    %cst_117 = arith.constant 0.000000e+00 : f32
    %398 = vector.shape_cast %152 : vector<1x128xf32> to vector<1x128xf32>
    %399 = vector.broadcast %398 : vector<1x128xf32> to vector<128x128xf32>
    %400 = vector.broadcast %cst_117 : f32 to vector<128x128xf32>
    %401 = arith.select %397, %399, %400 : vector<128x128xi1>, vector<128x128xf32>
    %402 = arith.addf %393, %401 : vector<128x128xf32>
    %c256_i32_118 = arith.constant 256 : i32
    %403 = vector.broadcast %c256_i32_118 : i32 to vector<1x128xi32>
    %404 = arith.subi %168, %403 : vector<1x128xi32>
    %405 = vector.broadcast %404 : vector<1x128xi32> to vector<128x128xi32>
    %406 = arith.cmpi eq, %207, %405 : vector<128x128xi32>
    %cst_119 = arith.constant 0.000000e+00 : f32
    %407 = vector.shape_cast %170 : vector<1x128xf32> to vector<1x128xf32>
    %408 = vector.broadcast %407 : vector<1x128xf32> to vector<128x128xf32>
    %409 = vector.broadcast %cst_119 : f32 to vector<128x128xf32>
    %410 = arith.select %406, %408, %409 : vector<128x128xi1>, vector<128x128xf32>
    %411 = arith.addf %402, %410 : vector<128x128xf32>
    %c256_i32_120 = arith.constant 256 : i32
    %412 = vector.broadcast %c256_i32_120 : i32 to vector<1x128xi32>
    %413 = arith.subi %186, %412 : vector<1x128xi32>
    %414 = vector.broadcast %413 : vector<1x128xi32> to vector<128x128xi32>
    %415 = arith.cmpi eq, %207, %414 : vector<128x128xi32>
    %cst_121 = arith.constant 0.000000e+00 : f32
    %416 = vector.shape_cast %188 : vector<1x128xf32> to vector<1x128xf32>
    %417 = vector.broadcast %416 : vector<1x128xf32> to vector<128x128xf32>
    %418 = vector.broadcast %cst_121 : f32 to vector<128x128xf32>
    %419 = arith.select %415, %417, %418 : vector<128x128xi1>, vector<128x128xf32>
    %420 = arith.addf %411, %419 : vector<128x128xf32>
    %c256_i32_122 = arith.constant 256 : i32
    %421 = vector.broadcast %c256_i32_122 : i32 to vector<1x128xi32>
    %422 = arith.subi %204, %421 : vector<1x128xi32>
    %423 = vector.broadcast %422 : vector<1x128xi32> to vector<128x128xi32>
    %424 = arith.cmpi eq, %207, %423 : vector<128x128xi32>
    %cst_123 = arith.constant 0.000000e+00 : f32
    %425 = vector.shape_cast %206 : vector<1x128xf32> to vector<1x128xf32>
    %426 = vector.broadcast %425 : vector<1x128xf32> to vector<128x128xf32>
    %427 = vector.broadcast %cst_123 : f32 to vector<128x128xf32>
    %428 = arith.select %424, %426, %427 : vector<128x128xi1>, vector<128x128xf32>
    %429 = arith.addf %420, %428 : vector<128x128xf32>
    %c0_124 = arith.constant 0 : index
    %c0_125 = arith.constant 0 : index
    %c256 = arith.constant 256 : index
    %430 = vector.load %arg3[%c0_124, %c0_125, %c256] : memref<1x8x1024xf32, #tpu.memory_space<vmem>>, vector<1x8x128xf32>
    %431 = vector.shape_cast %430 : vector<1x8x128xf32> to vector<8x128xf32>
    %cst_126 = arith.constant dense<0.000000e+00> : vector<8x128xf32>
    %432 = tpu.matmul %431, %429, %cst_126 {dimension_numbers = #tpu.dot_dimension_numbers<[1], [0], [0], [1], [0, 0, 1, 1], [], []>} : vector<8x128xf32>, vector<128x128xf32>, vector<8x128xf32> -> vector<8x128xf32>
    %433 = arith.addf %358, %432 : vector<8x128xf32>
    %c384_i32 = arith.constant 384 : i32
    %434 = vector.broadcast %c384_i32 : i32 to vector<1x128xi32>
    %435 = arith.subi %78, %434 : vector<1x128xi32>
    %436 = vector.broadcast %435 : vector<1x128xi32> to vector<128x128xi32>
    %437 = arith.cmpi eq, %207, %436 : vector<128x128xi32>
    %cst_127 = arith.constant 0.000000e+00 : f32
    %438 = vector.shape_cast %80 : vector<1x128xf32> to vector<1x128xf32>
    %439 = vector.broadcast %438 : vector<1x128xf32> to vector<128x128xf32>
    %440 = vector.broadcast %cst_127 : f32 to vector<128x128xf32>
    %441 = arith.select %437, %439, %440 : vector<128x128xi1>, vector<128x128xf32>
    %c384_i32_128 = arith.constant 384 : i32
    %442 = vector.broadcast %c384_i32_128 : i32 to vector<1x128xi32>
    %443 = arith.subi %96, %442 : vector<1x128xi32>
    %444 = vector.broadcast %443 : vector<1x128xi32> to vector<128x128xi32>
    %445 = arith.cmpi eq, %207, %444 : vector<128x128xi32>
    %cst_129 = arith.constant 0.000000e+00 : f32
    %446 = vector.shape_cast %98 : vector<1x128xf32> to vector<1x128xf32>
    %447 = vector.broadcast %446 : vector<1x128xf32> to vector<128x128xf32>
    %448 = vector.broadcast %cst_129 : f32 to vector<128x128xf32>
    %449 = arith.select %445, %447, %448 : vector<128x128xi1>, vector<128x128xf32>
    %450 = arith.addf %441, %449 : vector<128x128xf32>
    %c384_i32_130 = arith.constant 384 : i32
    %451 = vector.broadcast %c384_i32_130 : i32 to vector<1x128xi32>
    %452 = arith.subi %114, %451 : vector<1x128xi32>
    %453 = vector.broadcast %452 : vector<1x128xi32> to vector<128x128xi32>
    %454 = arith.cmpi eq, %207, %453 : vector<128x128xi32>
    %cst_131 = arith.constant 0.000000e+00 : f32
    %455 = vector.shape_cast %116 : vector<1x128xf32> to vector<1x128xf32>
    %456 = vector.broadcast %455 : vector<1x128xf32> to vector<128x128xf32>
    %457 = vector.broadcast %cst_131 : f32 to vector<128x128xf32>
    %458 = arith.select %454, %456, %457 : vector<128x128xi1>, vector<128x128xf32>
    %459 = arith.addf %450, %458 : vector<128x128xf32>
    %c384_i32_132 = arith.constant 384 : i32
    %460 = vector.broadcast %c384_i32_132 : i32 to vector<1x128xi32>
    %461 = arith.subi %132, %460 : vector<1x128xi32>
    %462 = vector.broadcast %461 : vector<1x128xi32> to vector<128x128xi32>
    %463 = arith.cmpi eq, %207, %462 : vector<128x128xi32>
    %cst_133 = arith.constant 0.000000e+00 : f32
    %464 = vector.shape_cast %134 : vector<1x128xf32> to vector<1x128xf32>
    %465 = vector.broadcast %464 : vector<1x128xf32> to vector<128x128xf32>
    %466 = vector.broadcast %cst_133 : f32 to vector<128x128xf32>
    %467 = arith.select %463, %465, %466 : vector<128x128xi1>, vector<128x128xf32>
    %468 = arith.addf %459, %467 : vector<128x128xf32>
    %c384_i32_134 = arith.constant 384 : i32
    %469 = vector.broadcast %c384_i32_134 : i32 to vector<1x128xi32>
    %470 = arith.subi %150, %469 : vector<1x128xi32>
    %471 = vector.broadcast %470 : vector<1x128xi32> to vector<128x128xi32>
    %472 = arith.cmpi eq, %207, %471 : vector<128x128xi32>
    %cst_135 = arith.constant 0.000000e+00 : f32
    %473 = vector.shape_cast %152 : vector<1x128xf32> to vector<1x128xf32>
    %474 = vector.broadcast %473 : vector<1x128xf32> to vector<128x128xf32>
    %475 = vector.broadcast %cst_135 : f32 to vector<128x128xf32>
    %476 = arith.select %472, %474, %475 : vector<128x128xi1>, vector<128x128xf32>
    %477 = arith.addf %468, %476 : vector<128x128xf32>
    %c384_i32_136 = arith.constant 384 : i32
    %478 = vector.broadcast %c384_i32_136 : i32 to vector<1x128xi32>
    %479 = arith.subi %168, %478 : vector<1x128xi32>
    %480 = vector.broadcast %479 : vector<1x128xi32> to vector<128x128xi32>
    %481 = arith.cmpi eq, %207, %480 : vector<128x128xi32>
    %cst_137 = arith.constant 0.000000e+00 : f32
    %482 = vector.shape_cast %170 : vector<1x128xf32> to vector<1x128xf32>
    %483 = vector.broadcast %482 : vector<1x128xf32> to vector<128x128xf32>
    %484 = vector.broadcast %cst_137 : f32 to vector<128x128xf32>
    %485 = arith.select %481, %483, %484 : vector<128x128xi1>, vector<128x128xf32>
    %486 = arith.addf %477, %485 : vector<128x128xf32>
    %c384_i32_138 = arith.constant 384 : i32
    %487 = vector.broadcast %c384_i32_138 : i32 to vector<1x128xi32>
    %488 = arith.subi %186, %487 : vector<1x128xi32>
    %489 = vector.broadcast %488 : vector<1x128xi32> to vector<128x128xi32>
    %490 = arith.cmpi eq, %207, %489 : vector<128x128xi32>
    %cst_139 = arith.constant 0.000000e+00 : f32
    %491 = vector.shape_cast %188 : vector<1x128xf32> to vector<1x128xf32>
    %492 = vector.broadcast %491 : vector<1x128xf32> to vector<128x128xf32>
    %493 = vector.broadcast %cst_139 : f32 to vector<128x128xf32>
    %494 = arith.select %490, %492, %493 : vector<128x128xi1>, vector<128x128xf32>
    %495 = arith.addf %486, %494 : vector<128x128xf32>
    %c384_i32_140 = arith.constant 384 : i32
    %496 = vector.broadcast %c384_i32_140 : i32 to vector<1x128xi32>
    %497 = arith.subi %204, %496 : vector<1x128xi32>
    %498 = vector.broadcast %497 : vector<1x128xi32> to vector<128x128xi32>
    %499 = arith.cmpi eq, %207, %498 : vector<128x128xi32>
    %cst_141 = arith.constant 0.000000e+00 : f32
    %500 = vector.shape_cast %206 : vector<1x128xf32> to vector<1x128xf32>
    %501 = vector.broadcast %500 : vector<1x128xf32> to vector<128x128xf32>
    %502 = vector.broadcast %cst_141 : f32 to vector<128x128xf32>
    %503 = arith.select %499, %501, %502 : vector<128x128xi1>, vector<128x128xf32>
    %504 = arith.addf %495, %503 : vector<128x128xf32>
    %c0_142 = arith.constant 0 : index
    %c0_143 = arith.constant 0 : index
    %c384 = arith.constant 384 : index
    %505 = vector.load %arg3[%c0_142, %c0_143, %c384] : memref<1x8x1024xf32, #tpu.memory_space<vmem>>, vector<1x8x128xf32>
    %506 = vector.shape_cast %505 : vector<1x8x128xf32> to vector<8x128xf32>
    %cst_144 = arith.constant dense<0.000000e+00> : vector<8x128xf32>
    %507 = tpu.matmul %506, %504, %cst_144 {dimension_numbers = #tpu.dot_dimension_numbers<[1], [0], [0], [1], [0, 0, 1, 1], [], []>} : vector<8x128xf32>, vector<128x128xf32>, vector<8x128xf32> -> vector<8x128xf32>
    %508 = arith.addf %433, %507 : vector<8x128xf32>
    %c512_i32 = arith.constant 512 : i32
    %509 = vector.broadcast %c512_i32 : i32 to vector<1x128xi32>
    %510 = arith.subi %78, %509 : vector<1x128xi32>
    %511 = vector.broadcast %510 : vector<1x128xi32> to vector<128x128xi32>
    %512 = arith.cmpi eq, %207, %511 : vector<128x128xi32>
    %cst_145 = arith.constant 0.000000e+00 : f32
    %513 = vector.shape_cast %80 : vector<1x128xf32> to vector<1x128xf32>
    %514 = vector.broadcast %513 : vector<1x128xf32> to vector<128x128xf32>
    %515 = vector.broadcast %cst_145 : f32 to vector<128x128xf32>
    %516 = arith.select %512, %514, %515 : vector<128x128xi1>, vector<128x128xf32>
    %c512_i32_146 = arith.constant 512 : i32
    %517 = vector.broadcast %c512_i32_146 : i32 to vector<1x128xi32>
    %518 = arith.subi %96, %517 : vector<1x128xi32>
    %519 = vector.broadcast %518 : vector<1x128xi32> to vector<128x128xi32>
    %520 = arith.cmpi eq, %207, %519 : vector<128x128xi32>
    %cst_147 = arith.constant 0.000000e+00 : f32
    %521 = vector.shape_cast %98 : vector<1x128xf32> to vector<1x128xf32>
    %522 = vector.broadcast %521 : vector<1x128xf32> to vector<128x128xf32>
    %523 = vector.broadcast %cst_147 : f32 to vector<128x128xf32>
    %524 = arith.select %520, %522, %523 : vector<128x128xi1>, vector<128x128xf32>
    %525 = arith.addf %516, %524 : vector<128x128xf32>
    %c512_i32_148 = arith.constant 512 : i32
    %526 = vector.broadcast %c512_i32_148 : i32 to vector<1x128xi32>
    %527 = arith.subi %114, %526 : vector<1x128xi32>
    %528 = vector.broadcast %527 : vector<1x128xi32> to vector<128x128xi32>
    %529 = arith.cmpi eq, %207, %528 : vector<128x128xi32>
    %cst_149 = arith.constant 0.000000e+00 : f32
    %530 = vector.shape_cast %116 : vector<1x128xf32> to vector<1x128xf32>
    %531 = vector.broadcast %530 : vector<1x128xf32> to vector<128x128xf32>
    %532 = vector.broadcast %cst_149 : f32 to vector<128x128xf32>
    %533 = arith.select %529, %531, %532 : vector<128x128xi1>, vector<128x128xf32>
    %534 = arith.addf %525, %533 : vector<128x128xf32>
    %c512_i32_150 = arith.constant 512 : i32
    %535 = vector.broadcast %c512_i32_150 : i32 to vector<1x128xi32>
    %536 = arith.subi %132, %535 : vector<1x128xi32>
    %537 = vector.broadcast %536 : vector<1x128xi32> to vector<128x128xi32>
    %538 = arith.cmpi eq, %207, %537 : vector<128x128xi32>
    %cst_151 = arith.constant 0.000000e+00 : f32
    %539 = vector.shape_cast %134 : vector<1x128xf32> to vector<1x128xf32>
    %540 = vector.broadcast %539 : vector<1x128xf32> to vector<128x128xf32>
    %541 = vector.broadcast %cst_151 : f32 to vector<128x128xf32>
    %542 = arith.select %538, %540, %541 : vector<128x128xi1>, vector<128x128xf32>
    %543 = arith.addf %534, %542 : vector<128x128xf32>
    %c512_i32_152 = arith.constant 512 : i32
    %544 = vector.broadcast %c512_i32_152 : i32 to vector<1x128xi32>
    %545 = arith.subi %150, %544 : vector<1x128xi32>
    %546 = vector.broadcast %545 : vector<1x128xi32> to vector<128x128xi32>
    %547 = arith.cmpi eq, %207, %546 : vector<128x128xi32>
    %cst_153 = arith.constant 0.000000e+00 : f32
    %548 = vector.shape_cast %152 : vector<1x128xf32> to vector<1x128xf32>
    %549 = vector.broadcast %548 : vector<1x128xf32> to vector<128x128xf32>
    %550 = vector.broadcast %cst_153 : f32 to vector<128x128xf32>
    %551 = arith.select %547, %549, %550 : vector<128x128xi1>, vector<128x128xf32>
    %552 = arith.addf %543, %551 : vector<128x128xf32>
    %c512_i32_154 = arith.constant 512 : i32
    %553 = vector.broadcast %c512_i32_154 : i32 to vector<1x128xi32>
    %554 = arith.subi %168, %553 : vector<1x128xi32>
    %555 = vector.broadcast %554 : vector<1x128xi32> to vector<128x128xi32>
    %556 = arith.cmpi eq, %207, %555 : vector<128x128xi32>
    %cst_155 = arith.constant 0.000000e+00 : f32
    %557 = vector.shape_cast %170 : vector<1x128xf32> to vector<1x128xf32>
    %558 = vector.broadcast %557 : vector<1x128xf32> to vector<128x128xf32>
    %559 = vector.broadcast %cst_155 : f32 to vector<128x128xf32>
    %560 = arith.select %556, %558, %559 : vector<128x128xi1>, vector<128x128xf32>
    %561 = arith.addf %552, %560 : vector<128x128xf32>
    %c512_i32_156 = arith.constant 512 : i32
    %562 = vector.broadcast %c512_i32_156 : i32 to vector<1x128xi32>
    %563 = arith.subi %186, %562 : vector<1x128xi32>
    %564 = vector.broadcast %563 : vector<1x128xi32> to vector<128x128xi32>
    %565 = arith.cmpi eq, %207, %564 : vector<128x128xi32>
    %cst_157 = arith.constant 0.000000e+00 : f32
    %566 = vector.shape_cast %188 : vector<1x128xf32> to vector<1x128xf32>
    %567 = vector.broadcast %566 : vector<1x128xf32> to vector<128x128xf32>
    %568 = vector.broadcast %cst_157 : f32 to vector<128x128xf32>
    %569 = arith.select %565, %567, %568 : vector<128x128xi1>, vector<128x128xf32>
    %570 = arith.addf %561, %569 : vector<128x128xf32>
    %c512_i32_158 = arith.constant 512 : i32
    %571 = vector.broadcast %c512_i32_158 : i32 to vector<1x128xi32>
    %572 = arith.subi %204, %571 : vector<1x128xi32>
    %573 = vector.broadcast %572 : vector<1x128xi32> to vector<128x128xi32>
    %574 = arith.cmpi eq, %207, %573 : vector<128x128xi32>
    %cst_159 = arith.constant 0.000000e+00 : f32
    %575 = vector.shape_cast %206 : vector<1x128xf32> to vector<1x128xf32>
    %576 = vector.broadcast %575 : vector<1x128xf32> to vector<128x128xf32>
    %577 = vector.broadcast %cst_159 : f32 to vector<128x128xf32>
    %578 = arith.select %574, %576, %577 : vector<128x128xi1>, vector<128x128xf32>
    %579 = arith.addf %570, %578 : vector<128x128xf32>
    %c0_160 = arith.constant 0 : index
    %c0_161 = arith.constant 0 : index
    %c512 = arith.constant 512 : index
    %580 = vector.load %arg3[%c0_160, %c0_161, %c512] : memref<1x8x1024xf32, #tpu.memory_space<vmem>>, vector<1x8x128xf32>
    %581 = vector.shape_cast %580 : vector<1x8x128xf32> to vector<8x128xf32>
    %cst_162 = arith.constant dense<0.000000e+00> : vector<8x128xf32>
    %582 = tpu.matmul %581, %579, %cst_162 {dimension_numbers = #tpu.dot_dimension_numbers<[1], [0], [0], [1], [0, 0, 1, 1], [], []>} : vector<8x128xf32>, vector<128x128xf32>, vector<8x128xf32> -> vector<8x128xf32>
    %583 = arith.addf %508, %582 : vector<8x128xf32>
    %c640_i32 = arith.constant 640 : i32
    %584 = vector.broadcast %c640_i32 : i32 to vector<1x128xi32>
    %585 = arith.subi %78, %584 : vector<1x128xi32>
    %586 = vector.broadcast %585 : vector<1x128xi32> to vector<128x128xi32>
    %587 = arith.cmpi eq, %207, %586 : vector<128x128xi32>
    %cst_163 = arith.constant 0.000000e+00 : f32
    %588 = vector.shape_cast %80 : vector<1x128xf32> to vector<1x128xf32>
    %589 = vector.broadcast %588 : vector<1x128xf32> to vector<128x128xf32>
    %590 = vector.broadcast %cst_163 : f32 to vector<128x128xf32>
    %591 = arith.select %587, %589, %590 : vector<128x128xi1>, vector<128x128xf32>
    %c640_i32_164 = arith.constant 640 : i32
    %592 = vector.broadcast %c640_i32_164 : i32 to vector<1x128xi32>
    %593 = arith.subi %96, %592 : vector<1x128xi32>
    %594 = vector.broadcast %593 : vector<1x128xi32> to vector<128x128xi32>
    %595 = arith.cmpi eq, %207, %594 : vector<128x128xi32>
    %cst_165 = arith.constant 0.000000e+00 : f32
    %596 = vector.shape_cast %98 : vector<1x128xf32> to vector<1x128xf32>
    %597 = vector.broadcast %596 : vector<1x128xf32> to vector<128x128xf32>
    %598 = vector.broadcast %cst_165 : f32 to vector<128x128xf32>
    %599 = arith.select %595, %597, %598 : vector<128x128xi1>, vector<128x128xf32>
    %600 = arith.addf %591, %599 : vector<128x128xf32>
    %c640_i32_166 = arith.constant 640 : i32
    %601 = vector.broadcast %c640_i32_166 : i32 to vector<1x128xi32>
    %602 = arith.subi %114, %601 : vector<1x128xi32>
    %603 = vector.broadcast %602 : vector<1x128xi32> to vector<128x128xi32>
    %604 = arith.cmpi eq, %207, %603 : vector<128x128xi32>
    %cst_167 = arith.constant 0.000000e+00 : f32
    %605 = vector.shape_cast %116 : vector<1x128xf32> to vector<1x128xf32>
    %606 = vector.broadcast %605 : vector<1x128xf32> to vector<128x128xf32>
    %607 = vector.broadcast %cst_167 : f32 to vector<128x128xf32>
    %608 = arith.select %604, %606, %607 : vector<128x128xi1>, vector<128x128xf32>
    %609 = arith.addf %600, %608 : vector<128x128xf32>
    %c640_i32_168 = arith.constant 640 : i32
    %610 = vector.broadcast %c640_i32_168 : i32 to vector<1x128xi32>
    %611 = arith.subi %132, %610 : vector<1x128xi32>
    %612 = vector.broadcast %611 : vector<1x128xi32> to vector<128x128xi32>
    %613 = arith.cmpi eq, %207, %612 : vector<128x128xi32>
    %cst_169 = arith.constant 0.000000e+00 : f32
    %614 = vector.shape_cast %134 : vector<1x128xf32> to vector<1x128xf32>
    %615 = vector.broadcast %614 : vector<1x128xf32> to vector<128x128xf32>
    %616 = vector.broadcast %cst_169 : f32 to vector<128x128xf32>
    %617 = arith.select %613, %615, %616 : vector<128x128xi1>, vector<128x128xf32>
    %618 = arith.addf %609, %617 : vector<128x128xf32>
    %c640_i32_170 = arith.constant 640 : i32
    %619 = vector.broadcast %c640_i32_170 : i32 to vector<1x128xi32>
    %620 = arith.subi %150, %619 : vector<1x128xi32>
    %621 = vector.broadcast %620 : vector<1x128xi32> to vector<128x128xi32>
    %622 = arith.cmpi eq, %207, %621 : vector<128x128xi32>
    %cst_171 = arith.constant 0.000000e+00 : f32
    %623 = vector.shape_cast %152 : vector<1x128xf32> to vector<1x128xf32>
    %624 = vector.broadcast %623 : vector<1x128xf32> to vector<128x128xf32>
    %625 = vector.broadcast %cst_171 : f32 to vector<128x128xf32>
    %626 = arith.select %622, %624, %625 : vector<128x128xi1>, vector<128x128xf32>
    %627 = arith.addf %618, %626 : vector<128x128xf32>
    %c640_i32_172 = arith.constant 640 : i32
    %628 = vector.broadcast %c640_i32_172 : i32 to vector<1x128xi32>
    %629 = arith.subi %168, %628 : vector<1x128xi32>
    %630 = vector.broadcast %629 : vector<1x128xi32> to vector<128x128xi32>
    %631 = arith.cmpi eq, %207, %630 : vector<128x128xi32>
    %cst_173 = arith.constant 0.000000e+00 : f32
    %632 = vector.shape_cast %170 : vector<1x128xf32> to vector<1x128xf32>
    %633 = vector.broadcast %632 : vector<1x128xf32> to vector<128x128xf32>
    %634 = vector.broadcast %cst_173 : f32 to vector<128x128xf32>
    %635 = arith.select %631, %633, %634 : vector<128x128xi1>, vector<128x128xf32>
    %636 = arith.addf %627, %635 : vector<128x128xf32>
    %c640_i32_174 = arith.constant 640 : i32
    %637 = vector.broadcast %c640_i32_174 : i32 to vector<1x128xi32>
    %638 = arith.subi %186, %637 : vector<1x128xi32>
    %639 = vector.broadcast %638 : vector<1x128xi32> to vector<128x128xi32>
    %640 = arith.cmpi eq, %207, %639 : vector<128x128xi32>
    %cst_175 = arith.constant 0.000000e+00 : f32
    %641 = vector.shape_cast %188 : vector<1x128xf32> to vector<1x128xf32>
    %642 = vector.broadcast %641 : vector<1x128xf32> to vector<128x128xf32>
    %643 = vector.broadcast %cst_175 : f32 to vector<128x128xf32>
    %644 = arith.select %640, %642, %643 : vector<128x128xi1>, vector<128x128xf32>
    %645 = arith.addf %636, %644 : vector<128x128xf32>
    %c640_i32_176 = arith.constant 640 : i32
    %646 = vector.broadcast %c640_i32_176 : i32 to vector<1x128xi32>
    %647 = arith.subi %204, %646 : vector<1x128xi32>
    %648 = vector.broadcast %647 : vector<1x128xi32> to vector<128x128xi32>
    %649 = arith.cmpi eq, %207, %648 : vector<128x128xi32>
    %cst_177 = arith.constant 0.000000e+00 : f32
    %650 = vector.shape_cast %206 : vector<1x128xf32> to vector<1x128xf32>
    %651 = vector.broadcast %650 : vector<1x128xf32> to vector<128x128xf32>
    %652 = vector.broadcast %cst_177 : f32 to vector<128x128xf32>
    %653 = arith.select %649, %651, %652 : vector<128x128xi1>, vector<128x128xf32>
    %654 = arith.addf %645, %653 : vector<128x128xf32>
    %c0_178 = arith.constant 0 : index
    %c0_179 = arith.constant 0 : index
    %c640 = arith.constant 640 : index
    %655 = vector.load %arg3[%c0_178, %c0_179, %c640] : memref<1x8x1024xf32, #tpu.memory_space<vmem>>, vector<1x8x128xf32>
    %656 = vector.shape_cast %655 : vector<1x8x128xf32> to vector<8x128xf32>
    %cst_180 = arith.constant dense<0.000000e+00> : vector<8x128xf32>
    %657 = tpu.matmul %656, %654, %cst_180 {dimension_numbers = #tpu.dot_dimension_numbers<[1], [0], [0], [1], [0, 0, 1, 1], [], []>} : vector<8x128xf32>, vector<128x128xf32>, vector<8x128xf32> -> vector<8x128xf32>
    %658 = arith.addf %583, %657 : vector<8x128xf32>
    %c768_i32 = arith.constant 768 : i32
    %659 = vector.broadcast %c768_i32 : i32 to vector<1x128xi32>
    %660 = arith.subi %78, %659 : vector<1x128xi32>
    %661 = vector.broadcast %660 : vector<1x128xi32> to vector<128x128xi32>
    %662 = arith.cmpi eq, %207, %661 : vector<128x128xi32>
    %cst_181 = arith.constant 0.000000e+00 : f32
    %663 = vector.shape_cast %80 : vector<1x128xf32> to vector<1x128xf32>
    %664 = vector.broadcast %663 : vector<1x128xf32> to vector<128x128xf32>
    %665 = vector.broadcast %cst_181 : f32 to vector<128x128xf32>
    %666 = arith.select %662, %664, %665 : vector<128x128xi1>, vector<128x128xf32>
    %c768_i32_182 = arith.constant 768 : i32
    %667 = vector.broadcast %c768_i32_182 : i32 to vector<1x128xi32>
    %668 = arith.subi %96, %667 : vector<1x128xi32>
    %669 = vector.broadcast %668 : vector<1x128xi32> to vector<128x128xi32>
    %670 = arith.cmpi eq, %207, %669 : vector<128x128xi32>
    %cst_183 = arith.constant 0.000000e+00 : f32
    %671 = vector.shape_cast %98 : vector<1x128xf32> to vector<1x128xf32>
    %672 = vector.broadcast %671 : vector<1x128xf32> to vector<128x128xf32>
    %673 = vector.broadcast %cst_183 : f32 to vector<128x128xf32>
    %674 = arith.select %670, %672, %673 : vector<128x128xi1>, vector<128x128xf32>
    %675 = arith.addf %666, %674 : vector<128x128xf32>
    %c768_i32_184 = arith.constant 768 : i32
    %676 = vector.broadcast %c768_i32_184 : i32 to vector<1x128xi32>
    %677 = arith.subi %114, %676 : vector<1x128xi32>
    %678 = vector.broadcast %677 : vector<1x128xi32> to vector<128x128xi32>
    %679 = arith.cmpi eq, %207, %678 : vector<128x128xi32>
    %cst_185 = arith.constant 0.000000e+00 : f32
    %680 = vector.shape_cast %116 : vector<1x128xf32> to vector<1x128xf32>
    %681 = vector.broadcast %680 : vector<1x128xf32> to vector<128x128xf32>
    %682 = vector.broadcast %cst_185 : f32 to vector<128x128xf32>
    %683 = arith.select %679, %681, %682 : vector<128x128xi1>, vector<128x128xf32>
    %684 = arith.addf %675, %683 : vector<128x128xf32>
    %c768_i32_186 = arith.constant 768 : i32
    %685 = vector.broadcast %c768_i32_186 : i32 to vector<1x128xi32>
    %686 = arith.subi %132, %685 : vector<1x128xi32>
    %687 = vector.broadcast %686 : vector<1x128xi32> to vector<128x128xi32>
    %688 = arith.cmpi eq, %207, %687 : vector<128x128xi32>
    %cst_187 = arith.constant 0.000000e+00 : f32
    %689 = vector.shape_cast %134 : vector<1x128xf32> to vector<1x128xf32>
    %690 = vector.broadcast %689 : vector<1x128xf32> to vector<128x128xf32>
    %691 = vector.broadcast %cst_187 : f32 to vector<128x128xf32>
    %692 = arith.select %688, %690, %691 : vector<128x128xi1>, vector<128x128xf32>
    %693 = arith.addf %684, %692 : vector<128x128xf32>
    %c768_i32_188 = arith.constant 768 : i32
    %694 = vector.broadcast %c768_i32_188 : i32 to vector<1x128xi32>
    %695 = arith.subi %150, %694 : vector<1x128xi32>
    %696 = vector.broadcast %695 : vector<1x128xi32> to vector<128x128xi32>
    %697 = arith.cmpi eq, %207, %696 : vector<128x128xi32>
    %cst_189 = arith.constant 0.000000e+00 : f32
    %698 = vector.shape_cast %152 : vector<1x128xf32> to vector<1x128xf32>
    %699 = vector.broadcast %698 : vector<1x128xf32> to vector<128x128xf32>
    %700 = vector.broadcast %cst_189 : f32 to vector<128x128xf32>
    %701 = arith.select %697, %699, %700 : vector<128x128xi1>, vector<128x128xf32>
    %702 = arith.addf %693, %701 : vector<128x128xf32>
    %c768_i32_190 = arith.constant 768 : i32
    %703 = vector.broadcast %c768_i32_190 : i32 to vector<1x128xi32>
    %704 = arith.subi %168, %703 : vector<1x128xi32>
    %705 = vector.broadcast %704 : vector<1x128xi32> to vector<128x128xi32>
    %706 = arith.cmpi eq, %207, %705 : vector<128x128xi32>
    %cst_191 = arith.constant 0.000000e+00 : f32
    %707 = vector.shape_cast %170 : vector<1x128xf32> to vector<1x128xf32>
    %708 = vector.broadcast %707 : vector<1x128xf32> to vector<128x128xf32>
    %709 = vector.broadcast %cst_191 : f32 to vector<128x128xf32>
    %710 = arith.select %706, %708, %709 : vector<128x128xi1>, vector<128x128xf32>
    %711 = arith.addf %702, %710 : vector<128x128xf32>
    %c768_i32_192 = arith.constant 768 : i32
    %712 = vector.broadcast %c768_i32_192 : i32 to vector<1x128xi32>
    %713 = arith.subi %186, %712 : vector<1x128xi32>
    %714 = vector.broadcast %713 : vector<1x128xi32> to vector<128x128xi32>
    %715 = arith.cmpi eq, %207, %714 : vector<128x128xi32>
    %cst_193 = arith.constant 0.000000e+00 : f32
    %716 = vector.shape_cast %188 : vector<1x128xf32> to vector<1x128xf32>
    %717 = vector.broadcast %716 : vector<1x128xf32> to vector<128x128xf32>
    %718 = vector.broadcast %cst_193 : f32 to vector<128x128xf32>
    %719 = arith.select %715, %717, %718 : vector<128x128xi1>, vector<128x128xf32>
    %720 = arith.addf %711, %719 : vector<128x128xf32>
    %c768_i32_194 = arith.constant 768 : i32
    %721 = vector.broadcast %c768_i32_194 : i32 to vector<1x128xi32>
    %722 = arith.subi %204, %721 : vector<1x128xi32>
    %723 = vector.broadcast %722 : vector<1x128xi32> to vector<128x128xi32>
    %724 = arith.cmpi eq, %207, %723 : vector<128x128xi32>
    %cst_195 = arith.constant 0.000000e+00 : f32
    %725 = vector.shape_cast %206 : vector<1x128xf32> to vector<1x128xf32>
    %726 = vector.broadcast %725 : vector<1x128xf32> to vector<128x128xf32>
    %727 = vector.broadcast %cst_195 : f32 to vector<128x128xf32>
    %728 = arith.select %724, %726, %727 : vector<128x128xi1>, vector<128x128xf32>
    %729 = arith.addf %720, %728 : vector<128x128xf32>
    %c0_196 = arith.constant 0 : index
    %c0_197 = arith.constant 0 : index
    %c768 = arith.constant 768 : index
    %730 = vector.load %arg3[%c0_196, %c0_197, %c768] : memref<1x8x1024xf32, #tpu.memory_space<vmem>>, vector<1x8x128xf32>
    %731 = vector.shape_cast %730 : vector<1x8x128xf32> to vector<8x128xf32>
    %cst_198 = arith.constant dense<0.000000e+00> : vector<8x128xf32>
    %732 = tpu.matmul %731, %729, %cst_198 {dimension_numbers = #tpu.dot_dimension_numbers<[1], [0], [0], [1], [0, 0, 1, 1], [], []>} : vector<8x128xf32>, vector<128x128xf32>, vector<8x128xf32> -> vector<8x128xf32>
    %733 = arith.addf %658, %732 : vector<8x128xf32>
    %c896_i32 = arith.constant 896 : i32
    %734 = vector.broadcast %c896_i32 : i32 to vector<1x128xi32>
    %735 = arith.subi %78, %734 : vector<1x128xi32>
    %736 = vector.broadcast %735 : vector<1x128xi32> to vector<128x128xi32>
    %737 = arith.cmpi eq, %207, %736 : vector<128x128xi32>
    %cst_199 = arith.constant 0.000000e+00 : f32
    %738 = vector.shape_cast %80 : vector<1x128xf32> to vector<1x128xf32>
    %739 = vector.broadcast %738 : vector<1x128xf32> to vector<128x128xf32>
    %740 = vector.broadcast %cst_199 : f32 to vector<128x128xf32>
    %741 = arith.select %737, %739, %740 : vector<128x128xi1>, vector<128x128xf32>
    %c896_i32_200 = arith.constant 896 : i32
    %742 = vector.broadcast %c896_i32_200 : i32 to vector<1x128xi32>
    %743 = arith.subi %96, %742 : vector<1x128xi32>
    %744 = vector.broadcast %743 : vector<1x128xi32> to vector<128x128xi32>
    %745 = arith.cmpi eq, %207, %744 : vector<128x128xi32>
    %cst_201 = arith.constant 0.000000e+00 : f32
    %746 = vector.shape_cast %98 : vector<1x128xf32> to vector<1x128xf32>
    %747 = vector.broadcast %746 : vector<1x128xf32> to vector<128x128xf32>
    %748 = vector.broadcast %cst_201 : f32 to vector<128x128xf32>
    %749 = arith.select %745, %747, %748 : vector<128x128xi1>, vector<128x128xf32>
    %750 = arith.addf %741, %749 : vector<128x128xf32>
    %c896_i32_202 = arith.constant 896 : i32
    %751 = vector.broadcast %c896_i32_202 : i32 to vector<1x128xi32>
    %752 = arith.subi %114, %751 : vector<1x128xi32>
    %753 = vector.broadcast %752 : vector<1x128xi32> to vector<128x128xi32>
    %754 = arith.cmpi eq, %207, %753 : vector<128x128xi32>
    %cst_203 = arith.constant 0.000000e+00 : f32
    %755 = vector.shape_cast %116 : vector<1x128xf32> to vector<1x128xf32>
    %756 = vector.broadcast %755 : vector<1x128xf32> to vector<128x128xf32>
    %757 = vector.broadcast %cst_203 : f32 to vector<128x128xf32>
    %758 = arith.select %754, %756, %757 : vector<128x128xi1>, vector<128x128xf32>
    %759 = arith.addf %750, %758 : vector<128x128xf32>
    %c896_i32_204 = arith.constant 896 : i32
    %760 = vector.broadcast %c896_i32_204 : i32 to vector<1x128xi32>
    %761 = arith.subi %132, %760 : vector<1x128xi32>
    %762 = vector.broadcast %761 : vector<1x128xi32> to vector<128x128xi32>
    %763 = arith.cmpi eq, %207, %762 : vector<128x128xi32>
    %cst_205 = arith.constant 0.000000e+00 : f32
    %764 = vector.shape_cast %134 : vector<1x128xf32> to vector<1x128xf32>
    %765 = vector.broadcast %764 : vector<1x128xf32> to vector<128x128xf32>
    %766 = vector.broadcast %cst_205 : f32 to vector<128x128xf32>
    %767 = arith.select %763, %765, %766 : vector<128x128xi1>, vector<128x128xf32>
    %768 = arith.addf %759, %767 : vector<128x128xf32>
    %c896_i32_206 = arith.constant 896 : i32
    %769 = vector.broadcast %c896_i32_206 : i32 to vector<1x128xi32>
    %770 = arith.subi %150, %769 : vector<1x128xi32>
    %771 = vector.broadcast %770 : vector<1x128xi32> to vector<128x128xi32>
    %772 = arith.cmpi eq, %207, %771 : vector<128x128xi32>
    %cst_207 = arith.constant 0.000000e+00 : f32
    %773 = vector.shape_cast %152 : vector<1x128xf32> to vector<1x128xf32>
    %774 = vector.broadcast %773 : vector<1x128xf32> to vector<128x128xf32>
    %775 = vector.broadcast %cst_207 : f32 to vector<128x128xf32>
    %776 = arith.select %772, %774, %775 : vector<128x128xi1>, vector<128x128xf32>
    %777 = arith.addf %768, %776 : vector<128x128xf32>
    %c896_i32_208 = arith.constant 896 : i32
    %778 = vector.broadcast %c896_i32_208 : i32 to vector<1x128xi32>
    %779 = arith.subi %168, %778 : vector<1x128xi32>
    %780 = vector.broadcast %779 : vector<1x128xi32> to vector<128x128xi32>
    %781 = arith.cmpi eq, %207, %780 : vector<128x128xi32>
    %cst_209 = arith.constant 0.000000e+00 : f32
    %782 = vector.shape_cast %170 : vector<1x128xf32> to vector<1x128xf32>
    %783 = vector.broadcast %782 : vector<1x128xf32> to vector<128x128xf32>
    %784 = vector.broadcast %cst_209 : f32 to vector<128x128xf32>
    %785 = arith.select %781, %783, %784 : vector<128x128xi1>, vector<128x128xf32>
    %786 = arith.addf %777, %785 : vector<128x128xf32>
    %c896_i32_210 = arith.constant 896 : i32
    %787 = vector.broadcast %c896_i32_210 : i32 to vector<1x128xi32>
    %788 = arith.subi %186, %787 : vector<1x128xi32>
    %789 = vector.broadcast %788 : vector<1x128xi32> to vector<128x128xi32>
    %790 = arith.cmpi eq, %207, %789 : vector<128x128xi32>
    %cst_211 = arith.constant 0.000000e+00 : f32
    %791 = vector.shape_cast %188 : vector<1x128xf32> to vector<1x128xf32>
    %792 = vector.broadcast %791 : vector<1x128xf32> to vector<128x128xf32>
    %793 = vector.broadcast %cst_211 : f32 to vector<128x128xf32>
    %794 = arith.select %790, %792, %793 : vector<128x128xi1>, vector<128x128xf32>
    %795 = arith.addf %786, %794 : vector<128x128xf32>
    %c896_i32_212 = arith.constant 896 : i32
    %796 = vector.broadcast %c896_i32_212 : i32 to vector<1x128xi32>
    %797 = arith.subi %204, %796 : vector<1x128xi32>
    %798 = vector.broadcast %797 : vector<1x128xi32> to vector<128x128xi32>
    %799 = arith.cmpi eq, %207, %798 : vector<128x128xi32>
    %cst_213 = arith.constant 0.000000e+00 : f32
    %800 = vector.shape_cast %206 : vector<1x128xf32> to vector<1x128xf32>
    %801 = vector.broadcast %800 : vector<1x128xf32> to vector<128x128xf32>
    %802 = vector.broadcast %cst_213 : f32 to vector<128x128xf32>
    %803 = arith.select %799, %801, %802 : vector<128x128xi1>, vector<128x128xf32>
    %804 = arith.addf %795, %803 : vector<128x128xf32>
    %c0_214 = arith.constant 0 : index
    %c0_215 = arith.constant 0 : index
    %c896 = arith.constant 896 : index
    %805 = vector.load %arg3[%c0_214, %c0_215, %c896] : memref<1x8x1024xf32, #tpu.memory_space<vmem>>, vector<1x8x128xf32>
    %806 = vector.shape_cast %805 : vector<1x8x128xf32> to vector<8x128xf32>
    %cst_216 = arith.constant dense<0.000000e+00> : vector<8x128xf32>
    %807 = tpu.matmul %806, %804, %cst_216 {dimension_numbers = #tpu.dot_dimension_numbers<[1], [0], [0], [1], [0, 0, 1, 1], [], []>} : vector<8x128xf32>, vector<128x128xf32>, vector<8x128xf32> -> vector<8x128xf32>
    %808 = arith.addf %733, %807 : vector<8x128xf32>
    %c0_217 = arith.constant 0 : index
    %c0_218 = arith.constant 0 : index
    %c0_219 = arith.constant 0 : index
    %809 = vector.load %arg4[%c0_217, %c0_218, %c0_219] : memref<1x8x128xf32, #tpu.memory_space<vmem>>, vector<1x8x128xf32>
    %810 = vector.shape_cast %809 : vector<1x8x128xf32> to vector<8x128xf32>
    %811 = vector.shape_cast %808 : vector<8x128xf32> to vector<1x8x128xf32>
    tpu.vector_store %arg4[%c0_217, %c0_218, %c0_219], %811 {strides = array<i32>} : memref<1x8x128xf32, #tpu.memory_space<vmem>>, vector<1x8x128xf32>,
    return
  }
  func.func @transform_0(%arg0: i32, %arg1: memref<4xi32, #tpu.memory_space<smem>>) -> (i32, i32) {
    %c0_i32 = arith.constant 0 : i32
    %c0_i32_0 = arith.constant 0 : i32
    %c0_i32_1 = arith.constant 0 : i32
    return %c0_i32, %c0_i32_0 : i32, i32
  }
  func.func @transform_1(%arg0: i32, %arg1: memref<4xi32, #tpu.memory_space<smem>>) -> (i32, i32, i32) {
    %c0_i32 = arith.constant 0 : i32
    %c0_i32_0 = arith.constant 0 : i32
    %c0_i32_1 = arith.constant 0 : i32
    return %arg0, %c0_i32, %c0_i32_0 : i32, i32, i32
  }
  func.func @transform_2(%arg0: i32, %arg1: memref<4xi32, #tpu.memory_space<smem>>) -> (i32, i32, i32) {
    %c0_i32 = arith.constant 0 : i32
    %c0_i32_0 = arith.constant 0 : i32
    %c0_i32_1 = arith.constant 0 : i32
    return %arg0, %c0_i32, %c0_i32_0 : i32, i32, i32
  }
}

</mosaic_0001>

<llo_original>
// kernel: tpu_custom_call.1
$region0: #{tpu_custom_call.1}
  #allocation0 [shape = 'u32[]', space=smem, size = 0x4, offset = 0x4, fixed_abs, tag = 'smem constant byte address 0x4 - core index']
  #allocation1 [shape = 'u32[144,128]{1,0:T(1,128)}', space=vmem, size = 0x12000, scoped, tag = 'internal scratch']
  #allocation2 [shape = 's32[1]{0}', space=sflag, size = 0x4, scoped, tag = 'scoped memory for tpu_custom_call.1']
  #allocation3 [shape = 'u8[512]{0}', space=smem, size = 0x200, scoped, tag = 'prefetched SMEM operand 0']
  %s0 = inlined_call_operand.hbm [shape: s32[4], index: 0, kind: input, shape index: {}]
  %s1 = inlined_call_operand.hbm [shape: f32[3,128], index: 1, kind: input, shape index: {}]
  %s2 = inlined_call_operand.hbm [shape: f32[4,8,1024], index: 2, kind: input, shape index: {}]
  %s3 = inlined_call_operand.hbm [shape: f32[4,8,128], index: 3, kind: output, shape index: {}]
  %s4 = sld [smem:[#allocation0]]
  $region49: #{tpu_custom_call.1} parent=0
    _
  %s6 = ssub.s32 1, %s4
  %s7 = scalar_select 0, %s6, %s4
  %9 = dma.hbm_to_smem %s0, 16, [#allocation3], [#allocation2]
  %10 = dma.done [#allocation2], 16
  %11 = sfence
  $region1: #{tpu_custom_call.1} parent=0
    #allocation4 [shape = 'u8[2048]{0}', space=vmem, size = 0x800, scoped, tag = 'input window, operand 1, single buffered']
    #allocation5 [shape = 's32[2]{0}', space=sflag, size = 0x8, scoped, tag = 'scoped memory for tpu_custom_call.1']
    #allocation6 [shape = 's32[2]{0}', space=sflag, size = 0x8, scoped, tag = 'scoped memory for tpu_custom_call.1']
    #allocation7 [shape = 'u8[65536]{0}', space=vmem, size = 0x10000, scoped, tag = 'input window, operand 2']
    #allocation8 [shape = 's32[2]{0}', space=sflag, size = 0x8, scoped, tag = 'scoped memory for tpu_custom_call.1']
    #allocation9 [shape = 'u8[8192]{0}', space=vmem, size = 0x2000, scoped, tag = 'output window, operand 0']
    %12 = vsyncpa [#allocation5], 0
    %13 = vsyncpa [#allocation8], 0
    %s14 = scalar_lea.sflag [#allocation8], 1
    %15 = vsyncpa %s14, 0
    %16 = vsyncpa [#allocation6], 0
    %s17 = scalar_lea.sflag [#allocation6], 1
    %18 = vsyncpa %s17, 0
    loop: start=0, step=1, limit=6
    $region2: #{tpu_custom_call.1} parent=1 // loop_pre_header
      _
    $region3: #{tpu_custom_call.1} parent=1 // loop_header
      %s20 = sphi 0, %s24
      %p21 = scmp.ge.s32.totalorder %s20, 6
      %s28 = sphi 0, %s28
      %s30 = sphi 0, %s28
      %s31 = sphi 0, %s30
      %s45 = sphi 0, %s31
      %s51 = sphi 0, %s53
      %s54 = sphi 0, %s51
      %s55 = sphi 0, %s54
      %s71 = sphi 0, %s55
      %s77 = sphi 0, %s79
      %s80 = sphi 0, %s77
      %s81 = sphi 0, %s80
      %s97 = sphi 0, %s81
    $region4: #{tpu_custom_call.1} parent=1 // loop_header_branch
      %23 = sbr.rel (%p21) target = $region8
    $region5: #{tpu_custom_call.1} parent=1 // loop_body
      %s25 = ssub.s32 %s20, 1
      %s26 = ssub.s32 %s20, 2
      %s27 = sadd.s32 %s20, 1
      %s29 = sadd.s32 %s28, 1
      %p32 = scmp.eq.s32.totalorder %s20, 3
      %p33 = scmp.ne.s32.totalorder %s28, %s30
      %p34 = scmp.eq.s32.totalorder %s20, 0
      %p35 = por %p33, %p34
      %p36 = scmp.ne.s32.totalorder %s28, %s30
      %p37 = scmp.eq.s32.totalorder %s25, 3
      %p38 = por %p36, %p37
      %p39 = scmp.ne.s32.totalorder %s30, %s31
      %p40 = scmp.eq.s32.totalorder %s25, 0
      %p41 = por %p39, %p40
      %p42 = scmp.ne.s32.totalorder %s30, %s31
      %p43 = scmp.eq.s32.totalorder %s26, 3
      %p44 = por %p42, %p43
      %p46 = scmp.ne.s32.totalorder %s31, %s45
      %p47 = scmp.eq.s32.totalorder %s26, 0
      %p48 = por %p46, %p47
      %s49 = ssub.s32 %s20, %s27
      %p50 = scmp.eq.s32.totalorder %s49, 0
      %s52 = sadd.s32 %s51, 1
      %s53 = scalar_select %p50, %s51, %s52
      %p56 = pneg %p50
      %p57 = scmp.eq.s32.totalorder %s20, 3
      %p58 = por %p56, %p57
      %p59 = scmp.ne.s32.totalorder %s51, %s54
      %p60 = scmp.eq.s32.totalorder %s20, 0
      %p61 = por %p59, %p60
      %p62 = scmp.ne.s32.totalorder %s51, %s54
      %p63 = scmp.eq.s32.totalorder %s25, 3
      %p64 = por %p62, %p63
      %p65 = scmp.ne.s32.totalorder %s54, %s55
      %p66 = scmp.eq.s32.totalorder %s25, 0
      %p67 = por %p65, %p66
      %p68 = scmp.ne.s32.totalorder %s54, %s55
      %p69 = scmp.eq.s32.totalorder %s26, 3
      %p70 = por %p68, %p69
      %p72 = scmp.ne.s32.totalorder %s55, %s71
      %p73 = scmp.eq.s32.totalorder %s26, 0
      %p74 = por %p72, %p73
      %s75 = ssub.s32 %s20, %s27
      %p76 = scmp.eq.s32.totalorder %s75, 0
      %s78 = sadd.s32 %s77, 1
      %s79 = scalar_select %p76, %s77, %s78
      %p82 = pneg %p76
      %p83 = scmp.eq.s32.totalorder %s20, 3
      %p84 = por %p82, %p83
      %p85 = scmp.ne.s32.totalorder %s77, %s80
      %p86 = scmp.eq.s32.totalorder %s20, 0
      %p87 = por %p85, %p86
      %p88 = scmp.ne.s32.totalorder %s77, %s80
      %p89 = scmp.eq.s32.totalorder %s25, 3
      %p90 = por %p88, %p89
      %p91 = scmp.ne.s32.totalorder %s80, %s81
      %p92 = scmp.eq.s32.totalorder %s25, 0
      %p93 = por %p91, %p92
      %p94 = scmp.ne.s32.totalorder %s80, %s81
      %p95 = scmp.eq.s32.totalorder %s26, 3
      %p96 = por %p94, %p95
      %p98 = scmp.ne.s32.totalorder %s81, %s97
      %p99 = scmp.eq.s32.totalorder %s26, 0
      %p100 = por %p98, %p99
      %p101 = scmp.le.s32.totalorder 1, %s20
      %p102 = scmp.lt.s32.totalorder %s20, 5
      %p103 = pnand %p101, %p102
      %p104 = pneg %p103
      // Predicated region
      $region9: #{tpu_custom_call.1} parent=5 // pred_check
        _
      $region10: #{tpu_custom_call.1} parent=5 // pred_check_branch
        %106 = sbr.rel (%p103) target = $region12
      $region11: #{tpu_custom_call.1} parent=5 // pred_region
        %s107 = ssub.s32 %s20, 1
        // Predicated region
        $region13: #{tpu_custom_call.1} parent=11 // pred_check
          %p108 = pneg %p41
        $region14: #{tpu_custom_call.1} parent=11 // pred_check_branch
          %110 = sbr.rel (%p108) target = $region16
        $region15: #{tpu_custom_call.1} parent=11 // pred_region
          %s112 = ssub.s32 64, 64
          %113 = vsyncadd [#allocation5], %s112
          %s115 = sshll.u32 [#allocation4], 4
          %s116 = int_to_ptr.vmem [resolvable:$true] %s115
          %118 = dma.hbm_to_vmem [thread:$0]  %s1, 64, %s116, [#allocation5]
        $region16: #{tpu_custom_call.1} parent=11 // pred_fallthru
          _
      $region12: #{tpu_custom_call.1} parent=5 // pred_fallthru
        _
      %p119 = scmp.lt.s32.totalorder %s20, 4
      // Predicated region
      $region17: #{tpu_custom_call.1} parent=5 // pred_check
        %p120 = pneg %p119
      $region18: #{tpu_custom_call.1} parent=5 // pred_check_branch
        %122 = sbr.rel (%p120) target = $region20
      $region19: #{tpu_custom_call.1} parent=5 // pred_region
        // Predicated region
        $region21: #{tpu_custom_call.1} parent=19 // pred_check
          %p123 = pneg %p61
        $region22: #{tpu_custom_call.1} parent=19 // pred_check_branch
          %125 = sbr.rel (%p123) target = $region24
        $region23: #{tpu_custom_call.1} parent=19 // pred_region
          %s126 = sand.u32 %s51, 1
          %s127 = scalar_lea.sflag [#allocation8], %s126
          %s128 = sand.u32 %s51, 1
          %s129 = smul.addr %s128, 64
          %s130 = scalar_lea.vmem [#allocation7], %s129
          %s132 = ssub.s32 1024, 1024
          %133 = vsyncadd %s127, %s132
          %s134 = smul.addr %s20, 8
          %s135 = smul.addr %s134, 128
          %s136 = scalar_lea.hbm %s2, %s135
          %s138 = sshll.u32 %s130, 4
          %s139 = int_to_ptr.vmem [resolvable:$true] %s138
          %141 = dma.hbm_to_vmem [thread:$0]  %s136, 1024, %s139, %s127
        $region24: #{tpu_custom_call.1} parent=19 // pred_fallthru
          _
      $region20: #{tpu_custom_call.1} parent=5 // pred_fallthru
        _
      %p142 = scmp.le.s32.totalorder 1, %s20
      %p143 = scmp.lt.s32.totalorder %s20, 5
      %p144 = pnand %p142, %p143
      %p145 = pneg %p144
      // Predicated region
      $region25: #{tpu_custom_call.1} parent=5 // pred_check
        _
      $region26: #{tpu_custom_call.1} parent=5 // pred_check_branch
        %147 = sbr.rel (%p144) target = $region28
      $region27: #{tpu_custom_call.1} parent=5 // pred_region
        %s148 = ssub.s32 %s20, 1
        // Predicated region
        $region29: #{tpu_custom_call.1} parent=27 // pred_check
          %p149 = pneg %p41
        $region30: #{tpu_custom_call.1} parent=27 // pred_check_branch
          %151 = sbr.rel (%p149) target = $region32
        $region31: #{tpu_custom_call.1} parent=27 // pred_region
          %152 = dma.done [#allocation5], 64
        $region32: #{tpu_custom_call.1} parent=27 // pred_fallthru
          _
        %s153 = sand.u32 %s54, 1
        %s154 = scalar_lea.sflag [#allocation8], %s153
        %s155 = sand.u32 %s54, 1
        %s156 = smul.addr %s155, 64
        %s157 = scalar_lea.vmem [#allocation7], %s156
        // Predicated region
        $region33: #{tpu_custom_call.1} parent=27 // pred_check
          %p158 = pneg %p67
        $region34: #{tpu_custom_call.1} parent=27 // pred_check_branch
          %160 = sbr.rel (%p158) target = $region36
        $region35: #{tpu_custom_call.1} parent=27 // pred_region
          %161 = dma.done %s154, 1024
        $region36: #{tpu_custom_call.1} parent=27 // pred_fallthru
          _
        %p162 = pneg %p41
        %p163 = pneg %p38
        %s164 = sand.u32 %s54, 1
        %s165 = scalar_lea.sflag [#allocation8], %s164
        %s166 = sand.u32 %s54, 1
        %s167 = smul.addr %s166, 64
        %s168 = scalar_lea.vmem [#allocation7], %s167
        %p169 = pneg %p67
        %p170 = pneg %p64
        %p171 = pneg %p93
        %p172 = pneg %p90
        %s173 = sand.u32 %s80, 1
        %s174 = scalar_lea.sflag [#allocation6], %s173
        %s175 = sand.u32 %s80, 1
        %s176 = smul.addr %s175, 8
        %s177 = scalar_lea.vmem [#allocation9], %s176
        %s178 = sld [smem:[#allocation3 + %s25]]
        %s179 = scvt.s32.f32 %s178
        %s180 = smul.f32 %s179, 0.5
        %v181 = vld [vmem:[#allocation4] sm:$0x1]
        %v182 = vmax.f32 %v181, -1.0
        %v183 = vmin.f32 %v182, 1.0
        %v184 = vsub.f32 %v183, -1.0
        %v185 = vstv %s180
        %v186 = vmul.f32 %v184, %v185
        %v187 = vfloor.f32 %v186
        %v188 = vcvt.f32.s32.to.zero.pseudo %v187
        %v189 = vsub.f32 %v181, -1.0
        %v190 = vmul.f32 %v189, %v185
        %v191 = vcvt.s32.f32 %v188
        %v192 = vsub.f32 %v190, %v191
        %v193 = vld [vmem:[#allocation4 + $0x1] sm:$0x1]
        %v194 = vmax.f32 %v193, -1.0
        %v195 = vmin.f32 %v194, 1.0
        %v196 = vsub.f32 %v195, -1.0
        %v197 = vmul.f32 %v196, %v185
        %v198 = vfloor.f32 %v197
        %v199 = vcvt.f32.s32.to.zero.pseudo %v198
        %v200 = vsub.f32 %v193, -1.0
        %v201 = vmul.f32 %v200, %v185
        %v202 = vcvt.s32.f32 %v199
        %v203 = vsub.f32 %v201, %v202
        %v204 = vld [vmem:[#allocation4 + $0x2] sm:$0x1]
        %v205 = vmax.f32 %v204, -1.0
        %v206 = vmin.f32 %v205, 1.0
        %v207 = vsub.f32 %v206, -1.0
        %v208 = vmul.f32 %v207, %v185
        %v209 = vfloor.f32 %v208
        %v210 = vcvt.f32.s32.to.zero.pseudo %v209
        %v211 = vsub.f32 %v204, -1.0
        %v212 = vmul.f32 %v211, %v185
        %v213 = vcvt.s32.f32 %v210
        %v214 = vsub.f32 %v212, %v213
        %v215 = vsub.f32 1.0, %v192
        %v216 = vsub.f32 1.0, %v203
        %v217 = vsub.f32 1.0, %v214
        %v218 = vmul.u32 %v188, 73856093
        %v219 = vmul.u32 %v199, 19349663
        %v220 = vxor.u32 %v218, %v219
        %v221 = vmul.u32 %v210, 83492791
        %v222 = vxor.u32 %v220, %v221
        %v223 = vand.u32 %v222, 1023
        %v224 = vmul.f32 %v215, %v216
        %v225 = vmul.f32 %v224, %v217
        %v226 = vadd.s32 %v210, 1
        %v227 = vmul.u32 %v226, 83492791
        %v228 = vxor.u32 %v220, %v227
        %v229 = vand.u32 %v228, 1023
        %v230 = vmul.f32 %v224, %v214
        %v231 = vadd.s32 %v199, 1
        %v232 = vmul.u32 %v231, 19349663
        %v233 = vxor.u32 %v218, %v232
        %v234 = vxor.u32 %v233, %v221
        %v235 = vand.u32 %v234, 1023
        %v236 = vmul.f32 %v215, %v203
        %v237 = vmul.f32 %v236, %v217
        %v238 = vxor.u32 %v233, %v227
        %v239 = vand.u32 %v238, 1023
        %v240 = vmul.f32 %v236, %v214
        %v241 = vadd.s32 %v188, 1
        %v242 = vmul.u32 %v241, 73856093
        %v243 = vxor.u32 %v242, %v219
        %v244 = vxor.u32 %v243, %v221
        %v245 = vand.u32 %v244, 1023
        %v246 = vmul.f32 %v192, %v216
        %v247 = vmul.f32 %v246, %v217
        %v248 = vxor.u32 %v243, %v227
        %v249 = vand.u32 %v248, 1023
        %v250 = vmul.f32 %v246, %v214
        %v251 = vxor.u32 %v242, %v232
        %v252 = vxor.u32 %v251, %v221
        %v253 = vand.u32 %v252, 1023
        %v254 = vmul.f32 %v192, %v203
        %v255 = vmul.f32 %v254, %v217
        %v256 = vxor.u32 %v251, %v227
        %v257 = vand.u32 %v256, 1023
        %v258 = vmul.f32 %v254, %v214
        %v259 = vlaneseq
        %v260 = vshrl.u32 %v259, 7
        %v261 = vadd.s32 %v260, 8
        %v262 = vadd.s32 %v260, 16
        %v263 = vadd.s32 %v260, 24
        %v264 = vadd.s32 %v260, 32
        %v265 = vadd.s32 %v260, 40
        %v266 = vadd.s32 %v260, 48
        %v267 = vadd.s32 %v260, 56
        %v268 = vadd.s32 %v260, 64
        %v269 = vadd.s32 %v260, 72
        %v270 = vadd.s32 %v260, 80
        %v271 = vadd.s32 %v260, 88
        %v272 = vadd.s32 %v260, 96
        %v273 = vadd.s32 %v260, 104
        %v274 = vadd.s32 %v260, 112
        %v275 = vadd.s32 %v260, 120
        %v276 = vlaneseq
        %v277 = vshrl.u32 %v276, 7
        %v278 = vsub.s32 0, %v277
        %v279 = vrot.slane %v223, %v278
        %vm280 = vcmp.eq.s32.totalorder %v260, %v279
        %vm281 = vcmp.eq.s32.totalorder %v261, %v279
        %vm282 = vcmp.eq.s32.totalorder %v262, %v279
        %vm283 = vcmp.eq.s32.totalorder %v263, %v279
        %vm284 = vcmp.eq.s32.totalorder %v264, %v279
        %vm285 = vcmp.eq.s32.totalorder %v265, %v279
        %vm286 = vcmp.eq.s32.totalorder %v266, %v279
        %vm287 = vcmp.eq.s32.totalorder %v267, %v279
        %vm288 = vcmp.eq.s32.totalorder %v268, %v279
        %vm289 = vcmp.eq.s32.totalorder %v269, %v279
        %vm290 = vcmp.eq.s32.totalorder %v270, %v279
        %vm291 = vcmp.eq.s32.totalorder %v271, %v279
        %vm292 = vcmp.eq.s32.totalorder %v272, %v279
        %vm293 = vcmp.eq.s32.totalorder %v273, %v279
        %vm294 = vcmp.eq.s32.totalorder %v274, %v279
        %vm295 = vcmp.eq.s32.totalorder %v275, %v279
        %v296 = vlaneseq
        %v297 = vshrl.u32 %v296, 7
        %v298 = vsub.s32 0, %v297
        %v299 = vrot.slane %v225, %v298
        %v300 = vsel %vm280, %v299, 0.0
        %v301 = vsel %vm281, %v299, 0.0
        %v302 = vsel %vm282, %v299, 0.0
        %v303 = vsel %vm283, %v299, 0.0
        %v304 = vsel %vm284, %v299, 0.0
        %v305 = vsel %vm285, %v299, 0.0
        %v306 = vsel %vm286, %v299, 0.0
        %v307 = vsel %vm287, %v299, 0.0
        %v308 = vsel %vm288, %v299, 0.0
        %v309 = vsel %vm289, %v299, 0.0
        %v310 = vsel %vm290, %v299, 0.0
        %v311 = vsel %vm291, %v299, 0.0
        %v312 = vsel %vm292, %v299, 0.0
        %v313 = vsel %vm293, %v299, 0.0
        %v314 = vsel %vm294, %v299, 0.0
        %v315 = vsel %vm295, %v299, 0.0
        %v316 = vlaneseq
        %v317 = vshrl.u32 %v316, 7
        %v318 = vsub.s32 0, %v317
        %v319 = vrot.slane %v229, %v318
        %vm320 = vcmp.eq.s32.totalorder %v260, %v319
        %vm321 = vcmp.eq.s32.totalorder %v261, %v319
        %vm322 = vcmp.eq.s32.totalorder %v262, %v319
        %vm323 = vcmp.eq.s32.totalorder %v263, %v319
        %vm324 = vcmp.eq.s32.totalorder %v264, %v319
        %vm325 = vcmp.eq.s32.totalorder %v265, %v319
        %vm326 = vcmp.eq.s32.totalorder %v266, %v319
        %vm327 = vcmp.eq.s32.totalorder %v267, %v319
        %vm328 = vcmp.eq.s32.totalorder %v268, %v319
        %vm329 = vcmp.eq.s32.totalorder %v269, %v319
        %vm330 = vcmp.eq.s32.totalorder %v270, %v319
        %vm331 = vcmp.eq.s32.totalorder %v271, %v319
        %vm332 = vcmp.eq.s32.totalorder %v272, %v319
        %vm333 = vcmp.eq.s32.totalorder %v273, %v319
        %vm334 = vcmp.eq.s32.totalorder %v274, %v319
        %vm335 = vcmp.eq.s32.totalorder %v275, %v319
        %v336 = vlaneseq
        %v337 = vshrl.u32 %v336, 7
        %v338 = vsub.s32 0, %v337
        %v339 = vrot.slane %v230, %v338
        %v340 = vsel %vm320, %v339, 0.0
        %v341 = vsel %vm321, %v339, 0.0
        %v342 = vsel %vm322, %v339, 0.0
        %v343 = vsel %vm323, %v339, 0.0
        %v344 = vsel %vm324, %v339, 0.0
        %v345 = vsel %vm325, %v339, 0.0
        %v346 = vsel %vm326, %v339, 0.0
        %v347 = vsel %vm327, %v339, 0.0
        %v348 = vsel %vm328, %v339, 0.0
        %v349 = vsel %vm329, %v339, 0.0
        %v350 = vsel %vm330, %v339, 0.0
        %v351 = vsel %vm331, %v339, 0.0
        %v352 = vsel %vm332, %v339, 0.0
        %v353 = vsel %vm333, %v339, 0.0
        %v354 = vsel %vm334, %v339, 0.0
        %v355 = vsel %vm335, %v339, 0.0
        %v356 = vadd.f32 %v300, %v340
        %v357 = vadd.f32 %v301, %v341
        %v358 = vadd.f32 %v302, %v342
        %v359 = vadd.f32 %v303, %v343
        %v360 = vadd.f32 %v304, %v344
        %v361 = vadd.f32 %v305, %v345
        %v362 = vadd.f32 %v306, %v346
        %v363 = vadd.f32 %v307, %v347
        %v364 = vadd.f32 %v308, %v348
        %v365 = vadd.f32 %v309, %v349
        %v366 = vadd.f32 %v310, %v350
        %v367 = vadd.f32 %v311, %v351
        %v368 = vadd.f32 %v312, %v352
        %v369 = vadd.f32 %v313, %v353
        %v370 = vadd.f32 %v314, %v354
        %v371 = vadd.f32 %v315, %v355
        %v372 = vlaneseq
        %v373 = vshrl.u32 %v372, 7
        %v374 = vsub.s32 0, %v373
        %v375 = vrot.slane %v235, %v374
        %vm376 = vcmp.eq.s32.totalorder %v260, %v375
        %vm377 = vcmp.eq.s32.totalorder %v261, %v375
        %vm378 = vcmp.eq.s32.totalorder %v262, %v375
        %vm379 = vcmp.eq.s32.totalorder %v263, %v375
        %vm380 = vcmp.eq.s32.totalorder %v264, %v375
        %vm381 = vcmp.eq.s32.totalorder %v265, %v375
        %vm382 = vcmp.eq.s32.totalorder %v266, %v375
        %vm383 = vcmp.eq.s32.totalorder %v267, %v375
        %vm384 = vcmp.eq.s32.totalorder %v268, %v375
        %vm385 = vcmp.eq.s32.totalorder %v269, %v375
        %vm386 = vcmp.eq.s32.totalorder %v270, %v375
        %vm387 = vcmp.eq.s32.totalorder %v271, %v375
        %vm388 = vcmp.eq.s32.totalorder %v272, %v375
        %vm389 = vcmp.eq.s32.totalorder %v273, %v375
        %vm390 = vcmp.eq.s32.totalorder %v274, %v375
        %vm391 = vcmp.eq.s32.totalorder %v275, %v375
        %v392 = vlaneseq
        %v393 = vshrl.u32 %v392, 7
        %v394 = vsub.s32 0, %v393
        %v395 = vrot.slane %v237, %v394
        %v396 = vsel %vm376, %v395, 0.0
        %v397 = vsel %vm377, %v395, 0.0
        %v398 = vsel %vm378, %v395, 0.0
        %v399 = vsel %vm379, %v395, 0.0
        %v400 = vsel %vm380, %v395, 0.0
        %v401 = vsel %vm381, %v395, 0.0
        %v402 = vsel %vm382, %v395, 0.0
        %v403 = vsel %vm383, %v395, 0.0
        %v404 = vsel %vm384, %v395, 0.0
        %v405 = vsel %vm385, %v395, 0.0
        %v406 = vsel %vm386, %v395, 0.0
        %v407 = vsel %vm387, %v395, 0.0
        %v408 = vsel %vm388, %v395, 0.0
        %v409 = vsel %vm389, %v395, 0.0
        %v410 = vsel %vm390, %v395, 0.0
        %v411 = vsel %vm391, %v395, 0.0
        %v412 = vadd.f32 %v356, %v396
        %v413 = vadd.f32 %v357, %v397
        %v414 = vadd.f32 %v358, %v398
        %v415 = vadd.f32 %v359, %v399
        %v416 = vadd.f32 %v360, %v400
        %v417 = vadd.f32 %v361, %v401
        %v418 = vadd.f32 %v362, %v402
        %v419 = vadd.f32 %v363, %v403
        %v420 = vadd.f32 %v364, %v404
        %v421 = vadd.f32 %v365, %v405
        %v422 = vadd.f32 %v366, %v406
        %v423 = vadd.f32 %v367, %v407
        %v424 = vadd.f32 %v368, %v408
        %v425 = vadd.f32 %v369, %v409
        %v426 = vadd.f32 %v370, %v410
        %v427 = vadd.f32 %v371, %v411
        %v428 = vlaneseq
        %v429 = vshrl.u32 %v428, 7
        %v430 = vsub.s32 0, %v429
        %v431 = vrot.slane %v239, %v430
        %vm432 = vcmp.eq.s32.totalorder %v260, %v431
        %vm433 = vcmp.eq.s32.totalorder %v261, %v431
        %vm434 = vcmp.eq.s32.totalorder %v262, %v431
        %vm435 = vcmp.eq.s32.totalorder %v263, %v431
        %vm436 = vcmp.eq.s32.totalorder %v264, %v431
        %vm437 = vcmp.eq.s32.totalorder %v265, %v431
        %vm438 = vcmp.eq.s32.totalorder %v266, %v431
        %vm439 = vcmp.eq.s32.totalorder %v267, %v431
        %vm440 = vcmp.eq.s32.totalorder %v268, %v431
        %vm441 = vcmp.eq.s32.totalorder %v269, %v431
        %vm442 = vcmp.eq.s32.totalorder %v270, %v431
        %vm443 = vcmp.eq.s32.totalorder %v271, %v431
        %vm444 = vcmp.eq.s32.totalorder %v272, %v431
        %vm445 = vcmp.eq.s32.totalorder %v273, %v431
        %vm446 = vcmp.eq.s32.totalorder %v274, %v431
        %vm447 = vcmp.eq.s32.totalorder %v275, %v431
        %v448 = vlaneseq
        %v449 = vshrl.u32 %v448, 7
        %v450 = vsub.s32 0, %v449
        %v451 = vrot.slane %v240, %v450
        %v452 = vsel %vm432, %v451, 0.0
        %v453 = vsel %vm433, %v451, 0.0
        %v454 = vsel %vm434, %v451, 0.0
        %v455 = vsel %vm435, %v451, 0.0
        %v456 = vsel %vm436, %v451, 0.0
        %v457 = vsel %vm437, %v451, 0.0
        %v458 = vsel %vm438, %v451, 0.0
        %v459 = vsel %vm439, %v451, 0.0
        %v460 = vsel %vm440, %v451, 0.0
        %v461 = vsel %vm441, %v451, 0.0
        %v462 = vsel %vm442, %v451, 0.0
        %v463 = vsel %vm443, %v451, 0.0
        %v464 = vsel %vm444, %v451, 0.0
        %v465 = vsel %vm445, %v451, 0.0
        %v466 = vsel %vm446, %v451, 0.0
        %v467 = vsel %vm447, %v451, 0.0
        %v468 = vadd.f32 %v412, %v452
        %v469 = vadd.f32 %v413, %v453
        %v470 = vadd.f32 %v414, %v454
        %v471 = vadd.f32 %v415, %v455
        %v472 = vadd.f32 %v416, %v456
        %v473 = vadd.f32 %v417, %v457
        %v474 = vadd.f32 %v418, %v458
        %v475 = vadd.f32 %v419, %v459
        %v476 = vadd.f32 %v420, %v460
        %v477 = vadd.f32 %v421, %v461
        %v478 = vadd.f32 %v422, %v462
        %v479 = vadd.f32 %v423, %v463
        %v480 = vadd.f32 %v424, %v464
        %v481 = vadd.f32 %v425, %v465
        %v482 = vadd.f32 %v426, %v466
        %v483 = vadd.f32 %v427, %v467
        %v484 = vlaneseq
        %v485 = vshrl.u32 %v484, 7
        %v486 = vsub.s32 0, %v485
        %v487 = vrot.slane %v245, %v486
        %vm488 = vcmp.eq.s32.totalorder %v260, %v487
        %vm489 = vcmp.eq.s32.totalorder %v261, %v487
        %vm490 = vcmp.eq.s32.totalorder %v262, %v487
        %vm491 = vcmp.eq.s32.totalorder %v263, %v487
        %vm492 = vcmp.eq.s32.totalorder %v264, %v487
        %vm493 = vcmp.eq.s32.totalorder %v265, %v487
        %vm494 = vcmp.eq.s32.totalorder %v266, %v487
        %vm495 = vcmp.eq.s32.totalorder %v267, %v487
        %vm496 = vcmp.eq.s32.totalorder %v268, %v487
        %vm497 = vcmp.eq.s32.totalorder %v269, %v487
        %vm498 = vcmp.eq.s32.totalorder %v270, %v487
        %vm499 = vcmp.eq.s32.totalorder %v271, %v487
        %vm500 = vcmp.eq.s32.totalorder %v272, %v487
        %vm501 = vcmp.eq.s32.totalorder %v273, %v487
        %vm502 = vcmp.eq.s32.totalorder %v274, %v487
        %vm503 = vcmp.eq.s32.totalorder %v275, %v487
        %v504 = vlaneseq
        %v505 = vshrl.u32 %v504, 7
        %v506 = vsub.s32 0, %v505
        %v507 = vrot.slane %v247, %v506
        %v508 = vsel %vm488, %v507, 0.0
        %v509 = vsel %vm489, %v507, 0.0
        %v510 = vsel %vm490, %v507, 0.0
        %v511 = vsel %vm491, %v507, 0.0
        %v512 = vsel %vm492, %v507, 0.0
        %v513 = vsel %vm493, %v507, 0.0
        %v514 = vsel %vm494, %v507, 0.0
        %v515 = vsel %vm495, %v507, 0.0
        %v516 = vsel %vm496, %v507, 0.0
        %v517 = vsel %vm497, %v507, 0.0
        %v518 = vsel %vm498, %v507, 0.0
        %v519 = vsel %vm499, %v507, 0.0
        %v520 = vsel %vm500, %v507, 0.0
        %v521 = vsel %vm501, %v507, 0.0
        %v522 = vsel %vm502, %v507, 0.0
        %v523 = vsel %vm503, %v507, 0.0
        %v524 = vadd.f32 %v468, %v508
        %v525 = vadd.f32 %v469, %v509
        %v526 = vadd.f32 %v470, %v510
        %v527 = vadd.f32 %v471, %v511
        %v528 = vadd.f32 %v472, %v512
        %v529 = vadd.f32 %v473, %v513
        %v530 = vadd.f32 %v474, %v514
        %v531 = vadd.f32 %v475, %v515
        %v532 = vadd.f32 %v476, %v516
        %v533 = vadd.f32 %v477, %v517
        %v534 = vadd.f32 %v478, %v518
        %v535 = vadd.f32 %v479, %v519
        %v536 = vadd.f32 %v480, %v520
        %v537 = vadd.f32 %v481, %v521
        %v538 = vadd.f32 %v482, %v522
        %v539 = vadd.f32 %v483, %v523
        %v540 = vlaneseq
        %v541 = vshrl.u32 %v540, 7
        %v542 = vsub.s32 0, %v541
        %v543 = vrot.slane %v249, %v542
        %vm544 = vcmp.eq.s32.totalorder %v260, %v543
        %vm545 = vcmp.eq.s32.totalorder %v261, %v543
        %vm546 = vcmp.eq.s32.totalorder %v262, %v543
        %vm547 = vcmp.eq.s32.totalorder %v263, %v543
        %vm548 = vcmp.eq.s32.totalorder %v264, %v543
        %vm549 = vcmp.eq.s32.totalorder %v265, %v543
        %vm550 = vcmp.eq.s32.totalorder %v266, %v543
        %vm551 = vcmp.eq.s32.totalorder %v267, %v543
        %vm552 = vcmp.eq.s32.totalorder %v268, %v543
        %vm553 = vcmp.eq.s32.totalorder %v269, %v543
        %vm554 = vcmp.eq.s32.totalorder %v270, %v543
        %vm555 = vcmp.eq.s32.totalorder %v271, %v543
        %vm556 = vcmp.eq.s32.totalorder %v272, %v543
        %vm557 = vcmp.eq.s32.totalorder %v273, %v543
        %vm558 = vcmp.eq.s32.totalorder %v274, %v543
        %vm559 = vcmp.eq.s32.totalorder %v275, %v543
        %v560 = vlaneseq
        %v561 = vshrl.u32 %v560, 7
        %v562 = vsub.s32 0, %v561
        %v563 = vrot.slane %v250, %v562
        %v564 = vsel %vm544, %v563, 0.0
        %v565 = vsel %vm545, %v563, 0.0
        %v566 = vsel %vm546, %v563, 0.0
        %v567 = vsel %vm547, %v563, 0.0
        %v568 = vsel %vm548, %v563, 0.0
        %v569 = vsel %vm549, %v563, 0.0
        %v570 = vsel %vm550, %v563, 0.0
        %v571 = vsel %vm551, %v563, 0.0
        %v572 = vsel %vm552, %v563, 0.0
        %v573 = vsel %vm553, %v563, 0.0
        %v574 = vsel %vm554, %v563, 0.0
        %v575 = vsel %vm555, %v563, 0.0
        %v576 = vsel %vm556, %v563, 0.0
        %v577 = vsel %vm557, %v563, 0.0
        %v578 = vsel %vm558, %v563, 0.0
        %v579 = vsel %vm559, %v563, 0.0
        %v580 = vadd.f32 %v524, %v564
        %v581 = vadd.f32 %v525, %v565
        %v582 = vadd.f32 %v526, %v566
        %v583 = vadd.f32 %v527, %v567
        %v584 = vadd.f32 %v528, %v568
        %v585 = vadd.f32 %v529, %v569
        %v586 = vadd.f32 %v530, %v570
        %v587 = vadd.f32 %v531, %v571
        %v588 = vadd.f32 %v532, %v572
        %v589 = vadd.f32 %v533, %v573
        %v590 = vadd.f32 %v534, %v574
        %v591 = vadd.f32 %v535, %v575
        %v592 = vadd.f32 %v536, %v576
        %v593 = vadd.f32 %v537, %v577
        %v594 = vadd.f32 %v538, %v578
        %v595 = vadd.f32 %v539, %v579
        %v596 = vlaneseq
        %v597 = vshrl.u32 %v596, 7
        %v598 = vsub.s32 0, %v597
        %v599 = vrot.slane %v253, %v598
        %vm600 = vcmp.eq.s32.totalorder %v260, %v599
        %vm601 = vcmp.eq.s32.totalorder %v261, %v599
        %vm602 = vcmp.eq.s32.totalorder %v262, %v599
        %vm603 = vcmp.eq.s32.totalorder %v263, %v599
        %vm604 = vcmp.eq.s32.totalorder %v264, %v599
        %vm605 = vcmp.eq.s32.totalorder %v265, %v599
        %vm606 = vcmp.eq.s32.totalorder %v266, %v599
        %vm607 = vcmp.eq.s32.totalorder %v267, %v599
        %vm608 = vcmp.eq.s32.totalorder %v268, %v599
        %vm609 = vcmp.eq.s32.totalorder %v269, %v599
        %vm610 = vcmp.eq.s32.totalorder %v270, %v599
        %vm611 = vcmp.eq.s32.totalorder %v271, %v599
        %vm612 = vcmp.eq.s32.totalorder %v272, %v599
        %vm613 = vcmp.eq.s32.totalorder %v273, %v599
        %vm614 = vcmp.eq.s32.totalorder %v274, %v599
        %vm615 = vcmp.eq.s32.totalorder %v275, %v599
        %v616 = vlaneseq
        %v617 = vshrl.u32 %v616, 7
        %v618 = vsub.s32 0, %v617
        %v619 = vrot.slane %v255, %v618
        %v620 = vsel %vm600, %v619, 0.0
        %v621 = vsel %vm601, %v619, 0.0
        %v622 = vsel %vm602, %v619, 0.0
        %v623 = vsel %vm603, %v619, 0.0
        %v624 = vsel %vm604, %v619, 0.0
        %v625 = vsel %vm605, %v619, 0.0
        %v626 = vsel %vm606, %v619, 0.0
        %v627 = vsel %vm607, %v619, 0.0
        %v628 = vsel %vm608, %v619, 0.0
        %v629 = vsel %vm609, %v619, 0.0
        %v630 = vsel %vm610, %v619, 0.0
        %v631 = vsel %vm611, %v619, 0.0
        %v632 = vsel %vm612, %v619, 0.0
        %v633 = vsel %vm613, %v619, 0.0
        %v634 = vsel %vm614, %v619, 0.0
        %v635 = vsel %vm615, %v619, 0.0
        %v636 = vadd.f32 %v580, %v620
        %v637 = vadd.f32 %v581, %v621
        %v638 = vadd.f32 %v582, %v622
        %v639 = vadd.f32 %v583, %v623
        %v640 = vadd.f32 %v584, %v624
        %v641 = vadd.f32 %v585, %v625
        %v642 = vadd.f32 %v586, %v626
        %v643 = vadd.f32 %v587, %v627
        %v644 = vadd.f32 %v588, %v628
        %v645 = vadd.f32 %v589, %v629
        %v646 = vadd.f32 %v590, %v630
        %v647 = vadd.f32 %v591, %v631
        %v648 = vadd.f32 %v592, %v632
        %v649 = vadd.f32 %v593, %v633
        %v650 = vadd.f32 %v594, %v634
        %v651 = vadd.f32 %v595, %v635
        %v652 = vlaneseq
        %v653 = vshrl.u32 %v652, 7
        %v654 = vsub.s32 0, %v653
        %v655 = vrot.slane %v257, %v654
        %vm656 = vcmp.eq.s32.totalorder %v260, %v655
        %vm657 = vcmp.eq.s32.totalorder %v261, %v655
        %vm658 = vcmp.eq.s32.totalorder %v262, %v655
        %vm659 = vcmp.eq.s32.totalorder %v263, %v655
        %vm660 = vcmp.eq.s32.totalorder %v264, %v655
        %vm661 = vcmp.eq.s32.totalorder %v265, %v655
        %vm662 = vcmp.eq.s32.totalorder %v266, %v655
        %vm663 = vcmp.eq.s32.totalorder %v267, %v655
        %vm664 = vcmp.eq.s32.totalorder %v268, %v655
        %vm665 = vcmp.eq.s32.totalorder %v269, %v655
        %vm666 = vcmp.eq.s32.totalorder %v270, %v655
        %vm667 = vcmp.eq.s32.totalorder %v271, %v655
        %vm668 = vcmp.eq.s32.totalorder %v272, %v655
        %vm669 = vcmp.eq.s32.totalorder %v273, %v655
        %vm670 = vcmp.eq.s32.totalorder %v274, %v655
        %vm671 = vcmp.eq.s32.totalorder %v275, %v655
        %v672 = vlaneseq
        %v673 = vshrl.u32 %v672, 7
        %v674 = vsub.s32 0, %v673
        %v675 = vrot.slane %v258, %v674
        %v676 = vsel %vm656, %v675, 0.0
        %v677 = vsel %vm657, %v675, 0.0
        %v678 = vsel %vm658, %v675, 0.0
        %v679 = vsel %vm659, %v675, 0.0
        %v680 = vsel %vm660, %v675, 0.0
        %v681 = vsel %vm661, %v675, 0.0
        %v682 = vsel %vm662, %v675, 0.0
        %v683 = vsel %vm663, %v675, 0.0
        %v684 = vsel %vm664, %v675, 0.0
        %v685 = vsel %vm665, %v675, 0.0
        %v686 = vsel %vm666, %v675, 0.0
        %v687 = vsel %vm667, %v675, 0.0
        %v688 = vsel %vm668, %v675, 0.0
        %v689 = vsel %vm669, %v675, 0.0
        %v690 = vsel %vm670, %v675, 0.0
        %v691 = vsel %vm671, %v675, 0.0
        %v692 = vadd.f32 %v636, %v676
        %v693 = vadd.f32 %v637, %v677
        %v694 = vadd.f32 %v638, %v678
        %v695 = vadd.f32 %v639, %v679
        %v696 = vadd.f32 %v640, %v680
        %v697 = vadd.f32 %v641, %v681
        %v698 = vadd.f32 %v642, %v682
        %v699 = vadd.f32 %v643, %v683
        %v700 = vadd.f32 %v644, %v684
        %v701 = vadd.f32 %v645, %v685
        %v702 = vadd.f32 %v646, %v686
        %v703 = vadd.f32 %v647, %v687
        %v704 = vadd.f32 %v648, %v688
        %v705 = vadd.f32 %v649, %v689
        %v706 = vadd.f32 %v650, %v690
        %v707 = vadd.f32 %v651, %v691
        %v708 = vld [vmem:[%s157] sm:$0xff]
        %v709 = vsub.s32 %v223, 128
        %v710 = vlaneseq
        %v711 = vshrl.u32 %v710, 7
        %v712 = vsub.s32 0, %v711
        %v713 = vrot.slane %v709, %v712
        %vm714 = vcmp.eq.s32.totalorder %v260, %v713
        %vm715 = vcmp.eq.s32.totalorder %v261, %v713
        %vm716 = vcmp.eq.s32.totalorder %v262, %v713
        %vm717 = vcmp.eq.s32.totalorder %v263, %v713
        %vm718 = vcmp.eq.s32.totalorder %v264, %v713
        %vm719 = vcmp.eq.s32.totalorder %v265, %v713
        %vm720 = vcmp.eq.s32.totalorder %v266, %v713
        %vm721 = vcmp.eq.s32.totalorder %v267, %v713
        %vm722 = vcmp.eq.s32.totalorder %v268, %v713
        %vm723 = vcmp.eq.s32.totalorder %v269, %v713
        %vm724 = vcmp.eq.s32.totalorder %v270, %v713
        %vm725 = vcmp.eq.s32.totalorder %v271, %v713
        %vm726 = vcmp.eq.s32.totalorder %v272, %v713
        %vm727 = vcmp.eq.s32.totalorder %v273, %v713
        %vm728 = vcmp.eq.s32.totalorder %v274, %v713
        %vm729 = vcmp.eq.s32.totalorder %v275, %v713
        %v730 = vsel %vm714, %v299, 0.0
        %v731 = vsel %vm715, %v299, 0.0
        %v732 = vsel %vm716, %v299, 0.0
        %v733 = vsel %vm717, %v299, 0.0
        %v734 = vsel %vm718, %v299, 0.0
        %v735 = vsel %vm719, %v299, 0.0
        %v736 = vsel %vm720, %v299, 0.0
        %v737 = vsel %vm721, %v299, 0.0
        %v738 = vsel %vm722, %v299, 0.0
        %v739 = vsel %vm723, %v299, 0.0
        %v740 = vsel %vm724, %v299, 0.0
        %v741 = vsel %vm725, %v299, 0.0
        %v742 = vsel %vm726, %v299, 0.0
        %v743 = vsel %vm727, %v299, 0.0
        %v744 = vsel %vm728, %v299, 0.0
        %v745 = vsel %vm729, %v299, 0.0
        %v746 = vsub.s32 %v229, 128
        %v747 = vlaneseq
        %v748 = vshrl.u32 %v747, 7
        %v749 = vsub.s32 0, %v748
        %v750 = vrot.slane %v746, %v749
        %vm751 = vcmp.eq.s32.totalorder %v260, %v750
        %vm752 = vcmp.eq.s32.totalorder %v261, %v750
        %vm753 = vcmp.eq.s32.totalorder %v262, %v750
        %vm754 = vcmp.eq.s32.totalorder %v263, %v750
        %vm755 = vcmp.eq.s32.totalorder %v264, %v750
        %vm756 = vcmp.eq.s32.totalorder %v265, %v750
        %vm757 = vcmp.eq.s32.totalorder %v266, %v750
        %vm758 = vcmp.eq.s32.totalorder %v267, %v750
        %vm759 = vcmp.eq.s32.totalorder %v268, %v750
        %vm760 = vcmp.eq.s32.totalorder %v269, %v750
        %vm761 = vcmp.eq.s32.totalorder %v270, %v750
        %vm762 = vcmp.eq.s32.totalorder %v271, %v750
        %vm763 = vcmp.eq.s32.totalorder %v272, %v750
        %vm764 = vcmp.eq.s32.totalorder %v273, %v750
        %vm765 = vcmp.eq.s32.totalorder %v274, %v750
        %vm766 = vcmp.eq.s32.totalorder %v275, %v750
        %v767 = vsel %vm751, %v339, 0.0
        %v768 = vsel %vm752, %v339, 0.0
        %v769 = vsel %vm753, %v339, 0.0
        %v770 = vsel %vm754, %v339, 0.0
        %v771 = vsel %vm755, %v339, 0.0
        %v772 = vsel %vm756, %v339, 0.0
        %v773 = vsel %vm757, %v339, 0.0
        %v774 = vsel %vm758, %v339, 0.0
        %v775 = vsel %vm759, %v339, 0.0
        %v776 = vsel %vm760, %v339, 0.0
        %v777 = vsel %vm761, %v339, 0.0
        %v778 = vsel %vm762, %v339, 0.0
        %v779 = vsel %vm763, %v339, 0.0
        %v780 = vsel %vm764, %v339, 0.0
        %v781 = vsel %vm765, %v339, 0.0
        %v782 = vsel %vm766, %v339, 0.0
        %v783 = vadd.f32 %v730, %v767
        %v784 = vadd.f32 %v731, %v768
        %v785 = vadd.f32 %v732, %v769
        %v786 = vadd.f32 %v733, %v770
        %v787 = vadd.f32 %v734, %v771
        %v788 = vadd.f32 %v735, %v772
        %v789 = vadd.f32 %v736, %v773
        %v790 = vadd.f32 %v737, %v774
        %v791 = vadd.f32 %v738, %v775
        %v792 = vadd.f32 %v739, %v776
        %v793 = vadd.f32 %v740, %v777
        %v794 = vadd.f32 %v741, %v778
        %v795 = vadd.f32 %v742, %v779
        %v796 = vadd.f32 %v743, %v780
        %v797 = vadd.f32 %v744, %v781
        %v798 = vadd.f32 %v745, %v782
        %v799 = vsub.s32 %v235, 128
        %v800 = vlaneseq
        %v801 = vshrl.u32 %v800, 7
        %v802 = vsub.s32 0, %v801
        %v803 = vrot.slane %v799, %v802
        %vm804 = vcmp.eq.s32.totalorder %v260, %v803
        %vm805 = vcmp.eq.s32.totalorder %v261, %v803
        %vm806 = vcmp.eq.s32.totalorder %v262, %v803
        %vm807 = vcmp.eq.s32.totalorder %v263, %v803
        %vm808 = vcmp.eq.s32.totalorder %v264, %v803
        %vm809 = vcmp.eq.s32.totalorder %v265, %v803
        %vm810 = vcmp.eq.s32.totalorder %v266, %v803
        %vm811 = vcmp.eq.s32.totalorder %v267, %v803
        %vm812 = vcmp.eq.s32.totalorder %v268, %v803
        %vm813 = vcmp.eq.s32.totalorder %v269, %v803
        %vm814 = vcmp.eq.s32.totalorder %v270, %v803
        %vm815 = vcmp.eq.s32.totalorder %v271, %v803
        %vm816 = vcmp.eq.s32.totalorder %v272, %v803
        %vm817 = vcmp.eq.s32.totalorder %v273, %v803
        %vm818 = vcmp.eq.s32.totalorder %v274, %v803
        %vm819 = vcmp.eq.s32.totalorder %v275, %v803
        %v820 = vsel %vm804, %v395, 0.0
        %v821 = vsel %vm805, %v395, 0.0
        %v822 = vsel %vm806, %v395, 0.0
        %v823 = vsel %vm807, %v395, 0.0
        %v824 = vsel %vm808, %v395, 0.0
        %v825 = vsel %vm809, %v395, 0.0
        %v826 = vsel %vm810, %v395, 0.0
        %v827 = vsel %vm811, %v395, 0.0
        %v828 = vsel %vm812, %v395, 0.0
        %v829 = vsel %vm813, %v395, 0.0
        %v830 = vsel %vm814, %v395, 0.0
        %v831 = vsel %vm815, %v395, 0.0
        %v832 = vsel %vm816, %v395, 0.0
        %v833 = vsel %vm817, %v395, 0.0
        %v834 = vsel %vm818, %v395, 0.0
        %v835 = vsel %vm819, %v395, 0.0
        %v836 = vadd.f32 %v783, %v820
        %v837 = vadd.f32 %v784, %v821
        %v838 = vadd.f32 %v785, %v822
        %v839 = vadd.f32 %v786, %v823
        %v840 = vadd.f32 %v787, %v824
        %v841 = vadd.f32 %v788, %v825
        %v842 = vadd.f32 %v789, %v826
        %v843 = vadd.f32 %v790, %v827
        %v844 = vadd.f32 %v791, %v828
        %v845 = vadd.f32 %v792, %v829
        %v846 = vadd.f32 %v793, %v830
        %v847 = vadd.f32 %v794, %v831
        %v848 = vadd.f32 %v795, %v832
        %v849 = vadd.f32 %v796, %v833
        %v850 = vadd.f32 %v797, %v834
        %v851 = vadd.f32 %v798, %v835
        %v852 = vsub.s32 %v239, 128
        %v853 = vlaneseq
        %v854 = vshrl.u32 %v853, 7
        %v855 = vsub.s32 0, %v854
        %v856 = vrot.slane %v852, %v855
        %vm857 = vcmp.eq.s32.totalorder %v260, %v856
        %vm858 = vcmp.eq.s32.totalorder %v261, %v856
        %vm859 = vcmp.eq.s32.totalorder %v262, %v856
        %vm860 = vcmp.eq.s32.totalorder %v263, %v856
        %vm861 = vcmp.eq.s32.totalorder %v264, %v856
        %vm862 = vcmp.eq.s32.totalorder %v265, %v856
        %vm863 = vcmp.eq.s32.totalorder %v266, %v856
        %vm864 = vcmp.eq.s32.totalorder %v267, %v856
        %vm865 = vcmp.eq.s32.totalorder %v268, %v856
        %vm866 = vcmp.eq.s32.totalorder %v269, %v856
        %vm867 = vcmp.eq.s32.totalorder %v270, %v856
        %vm868 = vcmp.eq.s32.totalorder %v271, %v856
        %vm869 = vcmp.eq.s32.totalorder %v272, %v856
        %vm870 = vcmp.eq.s32.totalorder %v273, %v856
        %vm871 = vcmp.eq.s32.totalorder %v274, %v856
        %vm872 = vcmp.eq.s32.totalorder %v275, %v856
        %v873 = vsel %vm857, %v451, 0.0
        %v874 = vsel %vm858, %v451, 0.0
        %v875 = vsel %vm859, %v451, 0.0
        %v876 = vsel %vm860, %v451, 0.0
        %v877 = vsel %vm861, %v451, 0.0
        %v878 = vsel %vm862, %v451, 0.0
        %v879 = vsel %vm863, %v451, 0.0
        %v880 = vsel %vm864, %v451, 0.0
        %v881 = vsel %vm865, %v451, 0.0
        %v882 = vsel %vm866, %v451, 0.0
        %v883 = vsel %vm867, %v451, 0.0
        %v884 = vsel %vm868, %v451, 0.0
        %v885 = vsel %vm869, %v451, 0.0
        %v886 = vsel %vm870, %v451, 0.0
        %v887 = vsel %vm871, %v451, 0.0
        %v888 = vsel %vm872, %v451, 0.0
        %v889 = vadd.f32 %v836, %v873
        %v890 = vadd.f32 %v837, %v874
        %v891 = vadd.f32 %v838, %v875
        %v892 = vadd.f32 %v839, %v876
        %v893 = vadd.f32 %v840, %v877
        %v894 = vadd.f32 %v841, %v878
        %v895 = vadd.f32 %v842, %v879
        %v896 = vadd.f32 %v843, %v880
        %v897 = vadd.f32 %v844, %v881
        %v898 = vadd.f32 %v845, %v882
        %v899 = vadd.f32 %v846, %v883
        %v900 = vadd.f32 %v847, %v884
        %v901 = vadd.f32 %v848, %v885
        %v902 = vadd.f32 %v849, %v886
        %v903 = vadd.f32 %v850, %v887
        %v904 = vadd.f32 %v851, %v888
        %v905 = vsub.s32 %v245, 128
        %v906 = vlaneseq
        %v907 = vshrl.u32 %v906, 7
        %v908 = vsub.s32 0, %v907
        %v909 = vrot.slane %v905, %v908
        %vm910 = vcmp.eq.s32.totalorder %v260, %v909
        %vm911 = vcmp.eq.s32.totalorder %v261, %v909
        %vm912 = vcmp.eq.s32.totalorder %v262, %v909
        %vm913 = vcmp.eq.s32.totalorder %v263, %v909
        %vm914 = vcmp.eq.s32.totalorder %v264, %v909
        %vm915 = vcmp.eq.s32.totalorder %v265, %v909
        %vm916 = vcmp.eq.s32.totalorder %v266, %v909
        %vm917 = vcmp.eq.s32.totalorder %v267, %v909
        %vm918 = vcmp.eq.s32.totalorder %v268, %v909
        %vm919 = vcmp.eq.s32.totalorder %v269, %v909
        %vm920 = vcmp.eq.s32.totalorder %v270, %v909
        %vm921 = vcmp.eq.s32.totalorder %v271, %v909
        %vm922 = vcmp.eq.s32.totalorder %v272, %v909
        %vm923 = vcmp.eq.s32.totalorder %v273, %v909
        %vm924 = vcmp.eq.s32.totalorder %v274, %v909
        %vm925 = vcmp.eq.s32.totalorder %v275, %v909
        %v926 = vsel %vm910, %v507, 0.0
        %v927 = vsel %vm911, %v507, 0.0
        %v928 = vsel %vm912, %v507, 0.0
        %v929 = vsel %vm913, %v507, 0.0
        %v930 = vsel %vm914, %v507, 0.0
        %v931 = vsel %vm915, %v507, 0.0
        %v932 = vsel %vm916, %v507, 0.0
        %v933 = vsel %vm917, %v507, 0.0
        %v934 = vsel %vm918, %v507, 0.0
        %v935 = vsel %vm919, %v507, 0.0
        %v936 = vsel %vm920, %v507, 0.0
        %v937 = vsel %vm921, %v507, 0.0
        %v938 = vsel %vm922, %v507, 0.0
        %v939 = vsel %vm923, %v507, 0.0
        %v940 = vsel %vm924, %v507, 0.0
        %v941 = vsel %vm925, %v507, 0.0
        %v942 = vadd.f32 %v889, %v926
        %v943 = vadd.f32 %v890, %v927
        %v944 = vadd.f32 %v891, %v928
        %v945 = vadd.f32 %v892, %v929
        %v946 = vadd.f32 %v893, %v930
        %v947 = vadd.f32 %v894, %v931
        %v948 = vadd.f32 %v895, %v932
        %v949 = vadd.f32 %v896, %v933
        %v950 = vadd.f32 %v897, %v934
        %v951 = vadd.f32 %v898, %v935
        %v952 = vadd.f32 %v899, %v936
        %v953 = vadd.f32 %v900, %v937
        %v954 = vadd.f32 %v901, %v938
        %v955 = vadd.f32 %v902, %v939
        %v956 = vadd.f32 %v903, %v940
        %v957 = vadd.f32 %v904, %v941
        %v958 = vsub.s32 %v249, 128
        %v959 = vlaneseq
        %v960 = vshrl.u32 %v959, 7
        %v961 = vsub.s32 0, %v960
        %v962 = vrot.slane %v958, %v961
        %vm963 = vcmp.eq.s32.totalorder %v260, %v962
        %vm964 = vcmp.eq.s32.totalorder %v261, %v962
        %vm965 = vcmp.eq.s32.totalorder %v262, %v962
        %vm966 = vcmp.eq.s32.totalorder %v263, %v962
        %vm967 = vcmp.eq.s32.totalorder %v264, %v962
        %vm968 = vcmp.eq.s32.totalorder %v265, %v962
        %vm969 = vcmp.eq.s32.totalorder %v266, %v962
        %vm970 = vcmp.eq.s32.totalorder %v267, %v962
        %vm971 = vcmp.eq.s32.totalorder %v268, %v962
        %vm972 = vcmp.eq.s32.totalorder %v269, %v962
        %vm973 = vcmp.eq.s32.totalorder %v270, %v962
        %vm974 = vcmp.eq.s32.totalorder %v271, %v962
        %vm975 = vcmp.eq.s32.totalorder %v272, %v962
        %vm976 = vcmp.eq.s32.totalorder %v273, %v962
        %vm977 = vcmp.eq.s32.totalorder %v274, %v962
        %vm978 = vcmp.eq.s32.totalorder %v275, %v962
        %v979 = vsel %vm963, %v563, 0.0
        %v980 = vsel %vm964, %v563, 0.0
        %v981 = vsel %vm965, %v563, 0.0
        %v982 = vsel %vm966, %v563, 0.0
        %v983 = vsel %vm967, %v563, 0.0
        %v984 = vsel %vm968, %v563, 0.0
        %v985 = vsel %vm969, %v563, 0.0
        %v986 = vsel %vm970, %v563, 0.0
        %v987 = vsel %vm971, %v563, 0.0
        %v988 = vsel %vm972, %v563, 0.0
        %v989 = vsel %vm973, %v563, 0.0
        %v990 = vsel %vm974, %v563, 0.0
        %v991 = vsel %vm975, %v563, 0.0
        %v992 = vsel %vm976, %v563, 0.0
        %v993 = vsel %vm977, %v563, 0.0
        %v994 = vsel %vm978, %v563, 0.0
        %v995 = vadd.f32 %v942, %v979
        %v996 = vadd.f32 %v943, %v980
        %v997 = vadd.f32 %v944, %v981
        %v998 = vadd.f32 %v945, %v982
        %v999 = vadd.f32 %v946, %v983
        %v1000 = vadd.f32 %v947, %v984
        %v1001 = vadd.f32 %v948, %v985
        %v1002 = vadd.f32 %v949, %v986
        %v1003 = vadd.f32 %v950, %v987
        %v1004 = vadd.f32 %v951, %v988
        %v1005 = vadd.f32 %v952, %v989
        %v1006 = vadd.f32 %v953, %v990
        %v1007 = vadd.f32 %v954, %v991
        %v1008 = vadd.f32 %v955, %v992
        %v1009 = vadd.f32 %v956, %v993
        %v1010 = vadd.f32 %v957, %v994
        %v1011 = vsub.s32 %v253, 128
        %v1012 = vlaneseq
        %v1013 = vshrl.u32 %v1012, 7
        %v1014 = vsub.s32 0, %v1013
        %v1015 = vrot.slane %v1011, %v1014
        %vm1016 = vcmp.eq.s32.totalorder %v260, %v1015
        %vm1017 = vcmp.eq.s32.totalorder %v261, %v1015
        %vm1018 = vcmp.eq.s32.totalorder %v262, %v1015
        %vm1019 = vcmp.eq.s32.totalorder %v263, %v1015
        %vm1020 = vcmp.eq.s32.totalorder %v264, %v1015
        %vm1021 = vcmp.eq.s32.totalorder %v265, %v1015
        %vm1022 = vcmp.eq.s32.totalorder %v266, %v1015
        %vm1023 = vcmp.eq.s32.totalorder %v267, %v1015
        %vm1024 = vcmp.eq.s32.totalorder %v268, %v1015
        %vm1025 = vcmp.eq.s32.totalorder %v269, %v1015
        %vm1026 = vcmp.eq.s32.totalorder %v270, %v1015
        %vm1027 = vcmp.eq.s32.totalorder %v271, %v1015
        %vm1028 = vcmp.eq.s32.totalorder %v272, %v1015
        %vm1029 = vcmp.eq.s32.totalorder %v273, %v1015
        %vm1030 = vcmp.eq.s32.totalorder %v274, %v1015
        %vm1031 = vcmp.eq.s32.totalorder %v275, %v1015
        %v1032 = vsel %vm1016, %v619, 0.0
        %v1033 = vsel %vm1017, %v619, 0.0
        %v1034 = vsel %vm1018, %v619, 0.0
        %v1035 = vsel %vm1019, %v619, 0.0
        %v1036 = vsel %vm1020, %v619, 0.0
        %v1037 = vsel %vm1021, %v619, 0.0
        %v1038 = vsel %vm1022, %v619, 0.0
        %v1039 = vsel %vm1023, %v619, 0.0
        %v1040 = vsel %vm1024, %v619, 0.0
        %v1041 = vsel %vm1025, %v619, 0.0
        %v1042 = vsel %vm1026, %v619, 0.0
        %v1043 = vsel %vm1027, %v619, 0.0
        %v1044 = vsel %vm1028, %v619, 0.0
        %v1045 = vsel %vm1029, %v619, 0.0
        %v1046 = vsel %vm1030, %v619, 0.0
        %v1047 = vsel %vm1031, %v619, 0.0
        %v1048 = vadd.f32 %v995, %v1032
        %v1049 = vadd.f32 %v996, %v1033
        %v1050 = vadd.f32 %v997, %v1034
        %v1051 = vadd.f32 %v998, %v1035
        %v1052 = vadd.f32 %v999, %v1036
        %v1053 = vadd.f32 %v1000, %v1037
        %v1054 = vadd.f32 %v1001, %v1038
        %v1055 = vadd.f32 %v1002, %v1039
        %v1056 = vadd.f32 %v1003, %v1040
        %v1057 = vadd.f32 %v1004, %v1041
        %v1058 = vadd.f32 %v1005, %v1042
        %v1059 = vadd.f32 %v1006, %v1043
        %v1060 = vadd.f32 %v1007, %v1044
        %v1061 = vadd.f32 %v1008, %v1045
        %v1062 = vadd.f32 %v1009, %v1046
        %v1063 = vadd.f32 %v1010, %v1047
        %v1064 = vsub.s32 %v257, 128
        %v1065 = vlaneseq
        %v1066 = vshrl.u32 %v1065, 7
        %v1067 = vsub.s32 0, %v1066
        %v1068 = vrot.slane %v1064, %v1067
        %vm1069 = vcmp.eq.s32.totalorder %v260, %v1068
        %vm1070 = vcmp.eq.s32.totalorder %v261, %v1068
        %vm1071 = vcmp.eq.s32.totalorder %v262, %v1068
        %vm1072 = vcmp.eq.s32.totalorder %v263, %v1068
        %vm1073 = vcmp.eq.s32.totalorder %v264, %v1068
        %vm1074 = vcmp.eq.s32.totalorder %v265, %v1068
        %vm1075 = vcmp.eq.s32.totalorder %v266, %v1068
        %vm1076 = vcmp.eq.s32.totalorder %v267, %v1068
        %vm1077 = vcmp.eq.s32.totalorder %v268, %v1068
        %vm1078 = vcmp.eq.s32.totalorder %v269, %v1068
        %vm1079 = vcmp.eq.s32.totalorder %v270, %v1068
        %vm1080 = vcmp.eq.s32.totalorder %v271, %v1068
        %vm1081 = vcmp.eq.s32.totalorder %v272, %v1068
        %vm1082 = vcmp.eq.s32.totalorder %v273, %v1068
        %vm1083 = vcmp.eq.s32.totalorder %v274, %v1068
        %vm1084 = vcmp.eq.s32.totalorder %v275, %v1068
        %v1085 = vsel %vm1069, %v675, 0.0
        %v1086 = vsel %vm1070, %v675, 0.0
        %v1087 = vsel %vm1071, %v675, 0.0
        %v1088 = vsel %vm1072, %v675, 0.0
        %v1089 = vsel %vm1073, %v675, 0.0
        %v1090 = vsel %vm1074, %v675, 0.0
        %v1091 = vsel %vm1075, %v675, 0.0
        %v1092 = vsel %vm1076, %v675, 0.0
        %v1093 = vsel %vm1077, %v675, 0.0
        %v1094 = vsel %vm1078, %v675, 0.0
        %v1095 = vsel %vm1079, %v675, 0.0
        %v1096 = vsel %vm1080, %v675, 0.0
        %v1097 = vsel %vm1081, %v675, 0.0
        %v1098 = vsel %vm1082, %v675, 0.0
        %v1099 = vsel %vm1083, %v675, 0.0
        %v1100 = vsel %vm1084, %v675, 0.0
        %v1101 = vadd.f32 %v1048, %v1085
        %v1102 = vadd.f32 %v1049, %v1086
        %v1103 = vadd.f32 %v1050, %v1087
        %v1104 = vadd.f32 %v1051, %v1088
        %v1105 = vadd.f32 %v1052, %v1089
        %v1106 = vadd.f32 %v1053, %v1090
        %v1107 = vadd.f32 %v1054, %v1091
        %v1108 = vadd.f32 %v1055, %v1092
        %v1109 = vadd.f32 %v1056, %v1093
        %v1110 = vadd.f32 %v1057, %v1094
        %v1111 = vadd.f32 %v1058, %v1095
        %v1112 = vadd.f32 %v1059, %v1096
        %v1113 = vadd.f32 %v1060, %v1097
        %v1114 = vadd.f32 %v1061, %v1098
        %v1115 = vadd.f32 %v1062, %v1099
        %v1116 = vadd.f32 %v1063, %v1100
        %v1117 = vld [vmem:[%s157 + $0x8] sm:$0xff]
        %1118 = vmatprep.subr.mxu0 0.0
        %1119 = vmatpush1.msra.mxu0 %v1101
        %1120 = vmatprep.subr.mxu0 0.0
        %1121 = vmatpush1.msra.mxu0 %v1102
        %1122 = vmatprep.subr.mxu0 0.0
        %1123 = vmatpush1.msra.mxu0 %v1103
        %1124 = vmatprep.subr.mxu0 0.0
        %1125 = vmatpush1.msra.mxu0 %v1104
        %1126 = vmatprep.subr.mxu0 0.0
        %1127 = vmatpush1.msra.mxu0 %v1105
        %1128 = vmatprep.subr.mxu0 0.0
        %1129 = vmatpush1.msra.mxu0 %v1106
        %1130 = vmatprep.subr.mxu0 0.0
        %1131 = vmatpush1.msra.mxu0 %v1107
        %1132 = vmatprep.subr.mxu0 0.0
        %1133 = vmatpush1.msra.mxu0 %v1108
        %1134 = vmatprep.subr.mxu0 0.0
        %1135 = vmatpush1.msra.mxu0 %v1109
        %1136 = vmatprep.subr.mxu0 0.0
        %1137 = vmatpush1.msra.mxu0 %v1110
        %1138 = vmatprep.subr.mxu0 0.0
        %1139 = vmatpush1.msra.mxu0 %v1111
        %1140 = vmatprep.subr.mxu0 0.0
        %1141 = vmatpush1.msra.mxu0 %v1112
        %1142 = vmatprep.subr.mxu0 0.0
        %1143 = vmatpush1.msra.mxu0 %v1113
        %1144 = vmatprep.subr.mxu0 0.0
        %1145 = vmatpush1.msra.mxu0 %v1114
        %1146 = vmatprep.subr.mxu0 0.0
        %1147 = vmatpush1.msra.mxu0 %v1115
        %1148 = vmatprep.subr.mxu0 0.0
        %1149 = vmatpush1.msra.mxu0 %v1116
        %1150 = vmatprep.subr.mxu0 0.0
        %1151 = vmatpush1.msra.mxu0 0.0
        %1152 = vmatprep.subr.mxu0 0.0
        %1153 = vmatpush1.msra.mxu0 0.0
        %1154 = vmatprep.subr.mxu0 0.0
        %1155 = vmatpush1.msra.mxu0 0.0
        %1156 = vmatprep.subr.mxu0 0.0
        %1157 = vmatpush1.msra.mxu0 0.0
        %1158 = vmatprep.subr.mxu0 0.0
        %1159 = vmatpush1.msra.mxu0 0.0
        %1160 = vmatprep.subr.mxu0 0.0
        %1161 = vmatpush1.msra.mxu0 0.0
        %1162 = vmatprep.subr.mxu0 0.0
        %1163 = vmatpush1.msra.mxu0 0.0
        %1164 = vmatprep.subr.mxu0 0.0
        %1165 = vmatpush1.msra.mxu0 0.0
        %1166 = vmatprep.subr.mxu0 0.0
        %1167 = vmatpush1.msra.mxu0 0.0
        %1168 = vmatprep.subr.mxu0 0.0
        %1169 = vmatpush1.msra.mxu0 0.0
        %1170 = vmatprep.subr.mxu0 0.0
        %1171 = vmatpush1.msra.mxu0 0.0
        %1172 = vmatprep.subr.mxu0 0.0
        %1173 = vmatpush1.msra.mxu0 0.0
        %1174 = vmatprep.subr.mxu0 0.0
        %1175 = vmatpush1.msra.mxu0 0.0
        %1176 = vmatprep.subr.mxu0 0.0
        %1177 = vmatpush1.msra.mxu0 0.0
        %1178 = vmatprep.subr.mxu0 0.0
        %1179 = vmatpush1.msra.mxu0 0.0
        %1180 = vmatprep.subr.mxu0 0.0
        %1181 = vmatpush1.msra.mxu0 0.0
        %1182 = vmatprep.mubr.f32.mxu0 0.0
        %1183 = vmatmul.mubr.f32.gmra.mrb[0].mxu0 %v1117
        %v1184 = vpop.f32.mrb[0].mxu0
        %v1185 = vadd.f32 0.0, %v1184
        %v1186 = vpop.f32.mrb[0].mxu0
        %1187 = vdwg.mxu0
        %1188 = vmatprep.subr.mxu0 0.0
        %1189 = vmatpush1.msra.mxu0 %v692
        %1190 = vmatprep.subr.mxu0 0.0
        %1191 = vmatpush1.msra.mxu0 %v693
        %1192 = vmatprep.subr.mxu0 0.0
        %1193 = vmatpush1.msra.mxu0 %v694
        %1194 = vmatprep.subr.mxu0 0.0
        %1195 = vmatpush1.msra.mxu0 %v695
        %1196 = vmatprep.subr.mxu0 0.0
        %1197 = vmatpush1.msra.mxu0 %v696
        %1198 = vmatprep.subr.mxu0 0.0
        %1199 = vmatpush1.msra.mxu0 %v697
        %1200 = vmatprep.subr.mxu0 0.0
        %1201 = vmatpush1.msra.mxu0 %v698
        %1202 = vmatprep.subr.mxu0 0.0
        %1203 = vmatpush1.msra.mxu0 %v699
        %1204 = vmatprep.subr.mxu0 0.0
        %1205 = vmatpush1.msra.mxu0 %v700
        %1206 = vmatprep.subr.mxu0 0.0
        %1207 = vmatpush1.msra.mxu0 %v701
        %1208 = vmatprep.subr.mxu0 0.0
        %1209 = vmatpush1.msra.mxu0 %v702
        %1210 = vmatprep.subr.mxu0 0.0
        %1211 = vmatpush1.msra.mxu0 %v703
        %1212 = vmatprep.subr.mxu0 0.0
        %1213 = vmatpush1.msra.mxu0 %v704
        %1214 = vmatprep.subr.mxu0 0.0
        %1215 = vmatpush1.msra.mxu0 %v705
        %1216 = vmatprep.subr.mxu0 0.0
        %1217 = vmatpush1.msra.mxu0 %v706
        %1218 = vmatprep.subr.mxu0 0.0
        %1219 = vmatpush1.msra.mxu0 %v707
        %1220 = vmatprep.subr.mxu0 0.0
        %1221 = vmatpush1.msra.mxu0 0.0
        %1222 = vmatprep.subr.mxu0 0.0
        %1223 = vmatpush1.msra.mxu0 0.0
        %1224 = vmatprep.subr.mxu0 0.0
        %1225 = vmatpush1.msra.mxu0 0.0
        %1226 = vmatprep.subr.mxu0 0.0
        %1227 = vmatpush1.msra.mxu0 0.0
        %1228 = vmatprep.subr.mxu0 0.0
        %1229 = vmatpush1.msra.mxu0 0.0
        %1230 = vmatprep.subr.mxu0 0.0
        %1231 = vmatpush1.msra.mxu0 0.0
        %1232 = vmatprep.subr.mxu0 0.0
        %1233 = vmatpush1.msra.mxu0 0.0
        %1234 = vmatprep.subr.mxu0 0.0
        %1235 = vmatpush1.msra.mxu0 0.0
        %1236 = vmatprep.subr.mxu0 0.0
        %1237 = vmatpush1.msra.mxu0 0.0
        %1238 = vmatprep.subr.mxu0 0.0
        %1239 = vmatpush1.msra.mxu0 0.0
        %1240 = vmatprep.subr.mxu0 0.0
        %1241 = vmatpush1.msra.mxu0 0.0
        %1242 = vmatprep.subr.mxu0 0.0
        %1243 = vmatpush1.msra.mxu0 0.0
        %1244 = vmatprep.subr.mxu0 0.0
        %1245 = vmatpush1.msra.mxu0 0.0
        %1246 = vmatprep.subr.mxu0 0.0
        %1247 = vmatpush1.msra.mxu0 0.0
        %1248 = vmatprep.subr.mxu0 0.0
        %1249 = vmatpush1.msra.mxu0 0.0
        %1250 = vmatprep.subr.mxu0 0.0
        %1251 = vmatpush1.msra.mxu0 0.0
        %1252 = vmatprep.mubr.f32.mxu0 0.0
        %1253 = vmatmul.mubr.f32.gmra.mrb[0].mxu0 %v708
        %v1254 = vpop.f32.mrb[0].mxu0
        %v1255 = vadd.f32 %v1185, %v1254
        %v1256 = vpop.f32.mrb[0].mxu0
        %1257 = vdwg.mxu0
        %v1258 = vsub.s32 %v223, 256
        %v1259 = vlaneseq
        %v1260 = vshrl.u32 %v1259, 7
        %v1261 = vsub.s32 0, %v1260
        %v1262 = vrot.slane %v1258, %v1261
        %vm1263 = vcmp.eq.s32.totalorder %v260, %v1262
        %vm1264 = vcmp.eq.s32.totalorder %v261, %v1262
        %vm1265 = vcmp.eq.s32.totalorder %v262, %v1262
        %vm1266 = vcmp.eq.s32.totalorder %v263, %v1262
        %vm1267 = vcmp.eq.s32.totalorder %v264, %v1262
        %vm1268 = vcmp.eq.s32.totalorder %v265, %v1262
        %vm1269 = vcmp.eq.s32.totalorder %v266, %v1262
        %vm1270 = vcmp.eq.s32.totalorder %v267, %v1262
        %vm1271 = vcmp.eq.s32.totalorder %v268, %v1262
        %vm1272 = vcmp.eq.s32.totalorder %v269, %v1262
        %vm1273 = vcmp.eq.s32.totalorder %v270, %v1262
        %vm1274 = vcmp.eq.s32.totalorder %v271, %v1262
        %vm1275 = vcmp.eq.s32.totalorder %v272, %v1262
        %vm1276 = vcmp.eq.s32.totalorder %v273, %v1262
        %vm1277 = vcmp.eq.s32.totalorder %v274, %v1262
        %vm1278 = vcmp.eq.s32.totalorder %v275, %v1262
        %v1279 = vsel %vm1263, %v299, 0.0
        %v1280 = vsel %vm1264, %v299, 0.0
        %v1281 = vsel %vm1265, %v299, 0.0
        %v1282 = vsel %vm1266, %v299, 0.0
        %v1283 = vsel %vm1267, %v299, 0.0
        %v1284 = vsel %vm1268, %v299, 0.0
        %v1285 = vsel %vm1269, %v299, 0.0
        %v1286 = vsel %vm1270, %v299, 0.0
        %v1287 = vsel %vm1271, %v299, 0.0
        %v1288 = vsel %vm1272, %v299, 0.0
        %v1289 = vsel %vm1273, %v299, 0.0
        %v1290 = vsel %vm1274, %v299, 0.0
        %v1291 = vsel %vm1275, %v299, 0.0
        %v1292 = vsel %vm1276, %v299, 0.0
        %v1293 = vsel %vm1277, %v299, 0.0
        %v1294 = vsel %vm1278, %v299, 0.0
        %v1295 = vsub.s32 %v229, 256
        %v1296 = vlaneseq
        %v1297 = vshrl.u32 %v1296, 7
        %v1298 = vsub.s32 0, %v1297
        %v1299 = vrot.slane %v1295, %v1298
        %vm1300 = vcmp.eq.s32.totalorder %v260, %v1299
        %vm1301 = vcmp.eq.s32.totalorder %v261, %v1299
        %vm1302 = vcmp.eq.s32.totalorder %v262, %v1299
        %vm1303 = vcmp.eq.s32.totalorder %v263, %v1299
        %vm1304 = vcmp.eq.s32.totalorder %v264, %v1299
        %vm1305 = vcmp.eq.s32.totalorder %v265, %v1299
        %vm1306 = vcmp.eq.s32.totalorder %v266, %v1299
        %vm1307 = vcmp.eq.s32.totalorder %v267, %v1299
        %vm1308 = vcmp.eq.s32.totalorder %v268, %v1299
        %vm1309 = vcmp.eq.s32.totalorder %v269, %v1299
        %vm1310 = vcmp.eq.s32.totalorder %v270, %v1299
        %vm1311 = vcmp.eq.s32.totalorder %v271, %v1299
        %vm1312 = vcmp.eq.s32.totalorder %v272, %v1299
        %vm1313 = vcmp.eq.s32.totalorder %v273, %v1299
        %vm1314 = vcmp.eq.s32.totalorder %v274, %v1299
        %vm1315 = vcmp.eq.s32.totalorder %v275, %v1299
        %v1316 = vsel %vm1300, %v339, 0.0
        %v1317 = vsel %vm1301, %v339, 0.0
        %v1318 = vsel %vm1302, %v339, 0.0
        %v1319 = vsel %vm1303, %v339, 0.0
        %v1320 = vsel %vm1304, %v339, 0.0
        %v1321 = vsel %vm1305, %v339, 0.0
        %v1322 = vsel %vm1306, %v339, 0.0
        %v1323 = vsel %vm1307, %v339, 0.0
        %v1324 = vsel %vm1308, %v339, 0.0
        %v1325 = vsel %vm1309, %v339, 0.0
        %v1326 = vsel %vm1310, %v339, 0.0
        %v1327 = vsel %vm1311, %v339, 0.0
        %v1328 = vsel %vm1312, %v339, 0.0
        %v1329 = vsel %vm1313, %v339, 0.0
        %v1330 = vsel %vm1314, %v339, 0.0
        %v1331 = vsel %vm1315, %v339, 0.0
        %v1332 = vadd.f32 %v1279, %v1316
        %v1333 = vadd.f32 %v1280, %v1317
        %v1334 = vadd.f32 %v1281, %v1318
        %v1335 = vadd.f32 %v1282, %v1319
        %v1336 = vadd.f32 %v1283, %v1320
        %v1337 = vadd.f32 %v1284, %v1321
        %v1338 = vadd.f32 %v1285, %v1322
        %v1339 = vadd.f32 %v1286, %v1323
        %v1340 = vadd.f32 %v1287, %v1324
        %v1341 = vadd.f32 %v1288, %v1325
        %v1342 = vadd.f32 %v1289, %v1326
        %v1343 = vadd.f32 %v1290, %v1327
        %v1344 = vadd.f32 %v1291, %v1328
        %v1345 = vadd.f32 %v1292, %v1329
        %v1346 = vadd.f32 %v1293, %v1330
        %v1347 = vadd.f32 %v1294, %v1331
        %v1348 = vsub.s32 %v235, 256
        %v1349 = vlaneseq
        %v1350 = vshrl.u32 %v1349, 7
        %v1351 = vsub.s32 0, %v1350
        %v1352 = vrot.slane %v1348, %v1351
        %vm1353 = vcmp.eq.s32.totalorder %v260, %v1352
        %vm1354 = vcmp.eq.s32.totalorder %v261, %v1352
        %vm1355 = vcmp.eq.s32.totalorder %v262, %v1352
        %vm1356 = vcmp.eq.s32.totalorder %v263, %v1352
        %vm1357 = vcmp.eq.s32.totalorder %v264, %v1352
        %vm1358 = vcmp.eq.s32.totalorder %v265, %v1352
        %vm1359 = vcmp.eq.s32.totalorder %v266, %v1352
        %vm1360 = vcmp.eq.s32.totalorder %v267, %v1352
        %vm1361 = vcmp.eq.s32.totalorder %v268, %v1352
        %vm1362 = vcmp.eq.s32.totalorder %v269, %v1352
        %vm1363 = vcmp.eq.s32.totalorder %v270, %v1352
        %vm1364 = vcmp.eq.s32.totalorder %v271, %v1352
        %vm1365 = vcmp.eq.s32.totalorder %v272, %v1352
        %vm1366 = vcmp.eq.s32.totalorder %v273, %v1352
        %vm1367 = vcmp.eq.s32.totalorder %v274, %v1352
        %vm1368 = vcmp.eq.s32.totalorder %v275, %v1352
        %v1369 = vsel %vm1353, %v395, 0.0
        %v1370 = vsel %vm1354, %v395, 0.0
        %v1371 = vsel %vm1355, %v395, 0.0
        %v1372 = vsel %vm1356, %v395, 0.0
        %v1373 = vsel %vm1357, %v395, 0.0
        %v1374 = vsel %vm1358, %v395, 0.0
        %v1375 = vsel %vm1359, %v395, 0.0
        %v1376 = vsel %vm1360, %v395, 0.0
        %v1377 = vsel %vm1361, %v395, 0.0
        %v1378 = vsel %vm1362, %v395, 0.0
        %v1379 = vsel %vm1363, %v395, 0.0
        %v1380 = vsel %vm1364, %v395, 0.0
        %v1381 = vsel %vm1365, %v395, 0.0
        %v1382 = vsel %vm1366, %v395, 0.0
        %v1383 = vsel %vm1367, %v395, 0.0
        %v1384 = vsel %vm1368, %v395, 0.0
        %v1385 = vadd.f32 %v1332, %v1369
        %v1386 = vadd.f32 %v1333, %v1370
        %v1387 = vadd.f32 %v1334, %v1371
        %v1388 = vadd.f32 %v1335, %v1372
        %v1389 = vadd.f32 %v1336, %v1373
        %v1390 = vadd.f32 %v1337, %v1374
        %v1391 = vadd.f32 %v1338, %v1375
        %v1392 = vadd.f32 %v1339, %v1376
        %v1393 = vadd.f32 %v1340, %v1377
        %v1394 = vadd.f32 %v1341, %v1378
        %v1395 = vadd.f32 %v1342, %v1379
        %v1396 = vadd.f32 %v1343, %v1380
        %v1397 = vadd.f32 %v1344, %v1381
        %v1398 = vadd.f32 %v1345, %v1382
        %v1399 = vadd.f32 %v1346, %v1383
        %v1400 = vadd.f32 %v1347, %v1384
        %v1401 = vsub.s32 %v239, 256
        %v1402 = vlaneseq
        %v1403 = vshrl.u32 %v1402, 7
        %v1404 = vsub.s32 0, %v1403
        %v1405 = vrot.slane %v1401, %v1404
        %vm1406 = vcmp.eq.s32.totalorder %v260, %v1405
        %vm1407 = vcmp.eq.s32.totalorder %v261, %v1405
        %vm1408 = vcmp.eq.s32.totalorder %v262, %v1405
        %vm1409 = vcmp.eq.s32.totalorder %v263, %v1405
        %vm1410 = vcmp.eq.s32.totalorder %v264, %v1405
        %vm1411 = vcmp.eq.s32.totalorder %v265, %v1405
        %vm1412 = vcmp.eq.s32.totalorder %v266, %v1405
        %vm1413 = vcmp.eq.s32.totalorder %v267, %v1405
        %vm1414 = vcmp.eq.s32.totalorder %v268, %v1405
        %vm1415 = vcmp.eq.s32.totalorder %v269, %v1405
        %vm1416 = vcmp.eq.s32.totalorder %v270, %v1405
        %vm1417 = vcmp.eq.s32.totalorder %v271, %v1405
        %vm1418 = vcmp.eq.s32.totalorder %v272, %v1405
        %vm1419 = vcmp.eq.s32.totalorder %v273, %v1405
        %vm1420 = vcmp.eq.s32.totalorder %v274, %v1405
        %vm1421 = vcmp.eq.s32.totalorder %v275, %v1405
        %v1422 = vsel %vm1406, %v451, 0.0
        %v1423 = vsel %vm1407, %v451, 0.0
        %v1424 = vsel %vm1408, %v451, 0.0
        %v1425 = vsel %vm1409, %v451, 0.0
        %v1426 = vsel %vm1410, %v451, 0.0
        %v1427 = vsel %vm1411, %v451, 0.0
        %v1428 = vsel %vm1412, %v451, 0.0
        %v1429 = vsel %vm1413, %v451, 0.0
        %v1430 = vsel %vm1414, %v451, 0.0
        %v1431 = vsel %vm1415, %v451, 0.0
        %v1432 = vsel %vm1416, %v451, 0.0
        %v1433 = vsel %vm1417, %v451, 0.0
        %v1434 = vsel %vm1418, %v451, 0.0
        %v1435 = vsel %vm1419, %v451, 0.0
        %v1436 = vsel %vm1420, %v451, 0.0
        %v1437 = vsel %vm1421, %v451, 0.0
        %v1438 = vadd.f32 %v1385, %v1422
        %v1439 = vadd.f32 %v1386, %v1423
        %v1440 = vadd.f32 %v1387, %v1424
        %v1441 = vadd.f32 %v1388, %v1425
        %v1442 = vadd.f32 %v1389, %v1426
        %v1443 = vadd.f32 %v1390, %v1427
        %v1444 = vadd.f32 %v1391, %v1428
        %v1445 = vadd.f32 %v1392, %v1429
        %v1446 = vadd.f32 %v1393, %v1430
        %v1447 = vadd.f32 %v1394, %v1431
        %v1448 = vadd.f32 %v1395, %v1432
        %v1449 = vadd.f32 %v1396, %v1433
        %v1450 = vadd.f32 %v1397, %v1434
        %v1451 = vadd.f32 %v1398, %v1435
        %v1452 = vadd.f32 %v1399, %v1436
        %v1453 = vadd.f32 %v1400, %v1437
        %v1454 = vsub.s32 %v245, 256
        %v1455 = vlaneseq
        %v1456 = vshrl.u32 %v1455, 7
        %v1457 = vsub.s32 0, %v1456
        %v1458 = vrot.slane %v1454, %v1457
        %vm1459 = vcmp.eq.s32.totalorder %v260, %v1458
        %vm1460 = vcmp.eq.s32.totalorder %v261, %v1458
        %vm1461 = vcmp.eq.s32.totalorder %v262, %v1458
        %vm1462 = vcmp.eq.s32.totalorder %v263, %v1458
        %vm1463 = vcmp.eq.s32.totalorder %v264, %v1458
        %vm1464 = vcmp.eq.s32.totalorder %v265, %v1458
        %vm1465 = vcmp.eq.s32.totalorder %v266, %v1458
        %vm1466 = vcmp.eq.s32.totalorder %v267, %v1458
        %vm1467 = vcmp.eq.s32.totalorder %v268, %v1458
        %vm1468 = vcmp.eq.s32.totalorder %v269, %v1458
        %vm1469 = vcmp.eq.s32.totalorder %v270, %v1458
        %vm1470 = vcmp.eq.s32.totalorder %v271, %v1458
        %vm1471 = vcmp.eq.s32.totalorder %v272, %v1458
        %vm1472 = vcmp.eq.s32.totalorder %v273, %v1458
        %vm1473 = vcmp.eq.s32.totalorder %v274, %v1458
        %vm1474 = vcmp.eq.s32.totalorder %v275, %v1458
        %v1475 = vsel %vm1459, %v507, 0.0
        %v1476 = vsel %vm1460, %v507, 0.0
        %v1477 = vsel %vm1461, %v507, 0.0
        %v1478 = vsel %vm1462, %v507, 0.0
        %v1479 = vsel %vm1463, %v507, 0.0
        %v1480 = vsel %vm1464, %v507, 0.0
        %v1481 = vsel %vm1465, %v507, 0.0
        %v1482 = vsel %vm1466, %v507, 0.0
        %v1483 = vsel %vm1467, %v507, 0.0
        %v1484 = vsel %vm1468, %v507, 0.0
        %v1485 = vsel %vm1469, %v507, 0.0
        %v1486 = vsel %vm1470, %v507, 0.0
        %v1487 = vsel %vm1471, %v507, 0.0
        %v1488 = vsel %vm1472, %v507, 0.0
        %v1489 = vsel %vm1473, %v507, 0.0
        %v1490 = vsel %vm1474, %v507, 0.0
        %v1491 = vadd.f32 %v1438, %v1475
        %v1492 = vadd.f32 %v1439, %v1476
        %v1493 = vadd.f32 %v1440, %v1477
        %v1494 = vadd.f32 %v1441, %v1478
        %v1495 = vadd.f32 %v1442, %v1479
        %v1496 = vadd.f32 %v1443, %v1480
        %v1497 = vadd.f32 %v1444, %v1481
        %v1498 = vadd.f32 %v1445, %v1482
        %v1499 = vadd.f32 %v1446, %v1483
        %v1500 = vadd.f32 %v1447, %v1484
        %v1501 = vadd.f32 %v1448, %v1485
        %v1502 = vadd.f32 %v1449, %v1486
        %v1503 = vadd.f32 %v1450, %v1487
        %v1504 = vadd.f32 %v1451, %v1488
        %v1505 = vadd.f32 %v1452, %v1489
        %v1506 = vadd.f32 %v1453, %v1490
        %v1507 = vsub.s32 %v249, 256
        %v1508 = vlaneseq
        %v1509 = vshrl.u32 %v1508, 7
        %v1510 = vsub.s32 0, %v1509
        %v1511 = vrot.slane %v1507, %v1510
        %vm1512 = vcmp.eq.s32.totalorder %v260, %v1511
        %vm1513 = vcmp.eq.s32.totalorder %v261, %v1511
        %vm1514 = vcmp.eq.s32.totalorder %v262, %v1511
        %vm1515 = vcmp.eq.s32.totalorder %v263, %v1511
        %vm1516 = vcmp.eq.s32.totalorder %v264, %v1511
        %vm1517 = vcmp.eq.s32.totalorder %v265, %v1511
        %vm1518 = vcmp.eq.s32.totalorder %v266, %v1511
        %vm1519 = vcmp.eq.s32.totalorder %v267, %v1511
        %vm1520 = vcmp.eq.s32.totalorder %v268, %v1511
        %vm1521 = vcmp.eq.s32.totalorder %v269, %v1511
        %vm1522 = vcmp.eq.s32.totalorder %v270, %v1511
        %vm1523 = vcmp.eq.s32.totalorder %v271, %v1511
        %vm1524 = vcmp.eq.s32.totalorder %v272, %v1511
        %vm1525 = vcmp.eq.s32.totalorder %v273, %v1511
        %vm1526 = vcmp.eq.s32.totalorder %v274, %v1511
        %vm1527 = vcmp.eq.s32.totalorder %v275, %v1511
        %v1528 = vsel %vm1512, %v563, 0.0
        %v1529 = vsel %vm1513, %v563, 0.0
        %v1530 = vsel %vm1514, %v563, 0.0
        %v1531 = vsel %vm1515, %v563, 0.0
        %v1532 = vsel %vm1516, %v563, 0.0
        %v1533 = vsel %vm1517, %v563, 0.0
        %v1534 = vsel %vm1518, %v563, 0.0
        %v1535 = vsel %vm1519, %v563, 0.0
        %v1536 = vsel %vm1520, %v563, 0.0
        %v1537 = vsel %vm1521, %v563, 0.0
        %v1538 = vsel %vm1522, %v563, 0.0
        %v1539 = vsel %vm1523, %v563, 0.0
        %v1540 = vsel %vm1524, %v563, 0.0
        %v1541 = vsel %vm1525, %v563, 0.0
        %v1542 = vsel %vm1526, %v563, 0.0
        %v1543 = vsel %vm1527, %v563, 0.0
        %v1544 = vadd.f32 %v1491, %v1528
        %v1545 = vadd.f32 %v1492, %v1529
        %v1546 = vadd.f32 %v1493, %v1530
        %v1547 = vadd.f32 %v1494, %v1531
        %v1548 = vadd.f32 %v1495, %v1532
        %v1549 = vadd.f32 %v1496, %v1533
        %v1550 = vadd.f32 %v1497, %v1534
        %v1551 = vadd.f32 %v1498, %v1535
        %v1552 = vadd.f32 %v1499, %v1536
        %v1553 = vadd.f32 %v1500, %v1537
        %v1554 = vadd.f32 %v1501, %v1538
        %v1555 = vadd.f32 %v1502, %v1539
        %v1556 = vadd.f32 %v1503, %v1540
        %v1557 = vadd.f32 %v1504, %v1541
        %v1558 = vadd.f32 %v1505, %v1542
        %v1559 = vadd.f32 %v1506, %v1543
        %v1560 = vsub.s32 %v253, 256
        %v1561 = vlaneseq
        %v1562 = vshrl.u32 %v1561, 7
        %v1563 = vsub.s32 0, %v1562
        %v1564 = vrot.slane %v1560, %v1563
        %vm1565 = vcmp.eq.s32.totalorder %v260, %v1564
        %vm1566 = vcmp.eq.s32.totalorder %v261, %v1564
        %vm1567 = vcmp.eq.s32.totalorder %v262, %v1564
        %vm1568 = vcmp.eq.s32.totalorder %v263, %v1564
        %vm1569 = vcmp.eq.s32.totalorder %v264, %v1564
        %vm1570 = vcmp.eq.s32.totalorder %v265, %v1564
        %vm1571 = vcmp.eq.s32.totalorder %v266, %v1564
        %vm1572 = vcmp.eq.s32.totalorder %v267, %v1564
        %vm1573 = vcmp.eq.s32.totalorder %v268, %v1564
        %vm1574 = vcmp.eq.s32.totalorder %v269, %v1564
        %vm1575 = vcmp.eq.s32.totalorder %v270, %v1564
        %vm1576 = vcmp.eq.s32.totalorder %v271, %v1564
        %vm1577 = vcmp.eq.s32.totalorder %v272, %v1564
        %vm1578 = vcmp.eq.s32.totalorder %v273, %v1564
        %vm1579 = vcmp.eq.s32.totalorder %v274, %v1564
        %vm1580 = vcmp.eq.s32.totalorder %v275, %v1564
        %v1581 = vsel %vm1565, %v619, 0.0
        %v1582 = vsel %vm1566, %v619, 0.0
        %v1583 = vsel %vm1567, %v619, 0.0
        %v1584 = vsel %vm1568, %v619, 0.0
        %v1585 = vsel %vm1569, %v619, 0.0
        %v1586 = vsel %vm1570, %v619, 0.0
        %v1587 = vsel %vm1571, %v619, 0.0
        %v1588 = vsel %vm1572, %v619, 0.0
        %v1589 = vsel %vm1573, %v619, 0.0
        %v1590 = vsel %vm1574, %v619, 0.0
        %v1591 = vsel %vm1575, %v619, 0.0
        %v1592 = vsel %vm1576, %v619, 0.0
        %v1593 = vsel %vm1577, %v619, 0.0
        %v1594 = vsel %vm1578, %v619, 0.0
        %v1595 = vsel %vm1579, %v619, 0.0
        %v1596 = vsel %vm1580, %v619, 0.0
        %v1597 = vadd.f32 %v1544, %v1581
        %v1598 = vadd.f32 %v1545, %v1582
        %v1599 = vadd.f32 %v1546, %v1583
        %v1600 = vadd.f32 %v1547, %v1584
        %v1601 = vadd.f32 %v1548, %v1585
        %v1602 = vadd.f32 %v1549, %v1586
        %v1603 = vadd.f32 %v1550, %v1587
        %v1604 = vadd.f32 %v1551, %v1588
        %v1605 = vadd.f32 %v1552, %v1589
        %v1606 = vadd.f32 %v1553, %v1590
        %v1607 = vadd.f32 %v1554, %v1591
        %v1608 = vadd.f32 %v1555, %v1592
        %v1609 = vadd.f32 %v1556, %v1593
        %v1610 = vadd.f32 %v1557, %v1594
        %v1611 = vadd.f32 %v1558, %v1595
        %v1612 = vadd.f32 %v1559, %v1596
        %v1613 = vsub.s32 %v257, 256
        %v1614 = vlaneseq
        %v1615 = vshrl.u32 %v1614, 7
        %v1616 = vsub.s32 0, %v1615
        %v1617 = vrot.slane %v1613, %v1616
        %vm1618 = vcmp.eq.s32.totalorder %v260, %v1617
        %vm1619 = vcmp.eq.s32.totalorder %v261, %v1617
        %vm1620 = vcmp.eq.s32.totalorder %v262, %v1617
        %vm1621 = vcmp.eq.s32.totalorder %v263, %v1617
        %vm1622 = vcmp.eq.s32.totalorder %v264, %v1617
        %vm1623 = vcmp.eq.s32.totalorder %v265, %v1617
        %vm1624 = vcmp.eq.s32.totalorder %v266, %v1617
        %vm1625 = vcmp.eq.s32.totalorder %v267, %v1617
        %vm1626 = vcmp.eq.s32.totalorder %v268, %v1617
        %vm1627 = vcmp.eq.s32.totalorder %v269, %v1617
        %vm1628 = vcmp.eq.s32.totalorder %v270, %v1617
        %vm1629 = vcmp.eq.s32.totalorder %v271, %v1617
        %vm1630 = vcmp.eq.s32.totalorder %v272, %v1617
        %vm1631 = vcmp.eq.s32.totalorder %v273, %v1617
        %vm1632 = vcmp.eq.s32.totalorder %v274, %v1617
        %vm1633 = vcmp.eq.s32.totalorder %v275, %v1617
        %v1634 = vsel %vm1618, %v675, 0.0
        %v1635 = vsel %vm1619, %v675, 0.0
        %v1636 = vsel %vm1620, %v675, 0.0
        %v1637 = vsel %vm1621, %v675, 0.0
        %v1638 = vsel %vm1622, %v675, 0.0
        %v1639 = vsel %vm1623, %v675, 0.0
        %v1640 = vsel %vm1624, %v675, 0.0
        %v1641 = vsel %vm1625, %v675, 0.0
        %v1642 = vsel %vm1626, %v675, 0.0
        %v1643 = vsel %vm1627, %v675, 0.0
        %v1644 = vsel %vm1628, %v675, 0.0
        %v1645 = vsel %vm1629, %v675, 0.0
        %v1646 = vsel %vm1630, %v675, 0.0
        %v1647 = vsel %vm1631, %v675, 0.0
        %v1648 = vsel %vm1632, %v675, 0.0
        %v1649 = vsel %vm1633, %v675, 0.0
        %v1650 = vadd.f32 %v1597, %v1634
        %v1651 = vadd.f32 %v1598, %v1635
        %v1652 = vadd.f32 %v1599, %v1636
        %v1653 = vadd.f32 %v1600, %v1637
        %v1654 = vadd.f32 %v1601, %v1638
        %v1655 = vadd.f32 %v1602, %v1639
        %v1656 = vadd.f32 %v1603, %v1640
        %v1657 = vadd.f32 %v1604, %v1641
        %v1658 = vadd.f32 %v1605, %v1642
        %v1659 = vadd.f32 %v1606, %v1643
        %v1660 = vadd.f32 %v1607, %v1644
        %v1661 = vadd.f32 %v1608, %v1645
        %v1662 = vadd.f32 %v1609, %v1646
        %v1663 = vadd.f32 %v1610, %v1647
        %v1664 = vadd.f32 %v1611, %v1648
        %v1665 = vadd.f32 %v1612, %v1649
        %v1666 = vld [vmem:[%s157 + $0x10] sm:$0xff]
        %1667 = vmatprep.subr.mxu0 0.0
        %1668 = vmatpush1.msra.mxu0 %v1650
        %1669 = vmatprep.subr.mxu0 0.0
        %1670 = vmatpush1.msra.mxu0 %v1651
        %1671 = vmatprep.subr.mxu0 0.0
        %1672 = vmatpush1.msra.mxu0 %v1652
        %1673 = vmatprep.subr.mxu0 0.0
        %1674 = vmatpush1.msra.mxu0 %v1653
        %1675 = vmatprep.subr.mxu0 0.0
        %1676 = vmatpush1.msra.mxu0 %v1654
        %1677 = vmatprep.subr.mxu0 0.0
        %1678 = vmatpush1.msra.mxu0 %v1655
        %1679 = vmatprep.subr.mxu0 0.0
        %1680 = vmatpush1.msra.mxu0 %v1656
        %1681 = vmatprep.subr.mxu0 0.0
        %1682 = vmatpush1.msra.mxu0 %v1657
        %1683 = vmatprep.subr.mxu0 0.0
        %1684 = vmatpush1.msra.mxu0 %v1658
        %1685 = vmatprep.subr.mxu0 0.0
        %1686 = vmatpush1.msra.mxu0 %v1659
        %1687 = vmatprep.subr.mxu0 0.0
        %1688 = vmatpush1.msra.mxu0 %v1660
        %1689 = vmatprep.subr.mxu0 0.0
        %1690 = vmatpush1.msra.mxu0 %v1661
        %1691 = vmatprep.subr.mxu0 0.0
        %1692 = vmatpush1.msra.mxu0 %v1662
        %1693 = vmatprep.subr.mxu0 0.0
        %1694 = vmatpush1.msra.mxu0 %v1663
        %1695 = vmatprep.subr.mxu0 0.0
        %1696 = vmatpush1.msra.mxu0 %v1664
        %1697 = vmatprep.subr.mxu0 0.0
        %1698 = vmatpush1.msra.mxu0 %v1665
        %1699 = vmatprep.subr.mxu0 0.0
        %1700 = vmatpush1.msra.mxu0 0.0
        %1701 = vmatprep.subr.mxu0 0.0
        %1702 = vmatpush1.msra.mxu0 0.0
        %1703 = vmatprep.subr.mxu0 0.0
        %1704 = vmatpush1.msra.mxu0 0.0
        %1705 = vmatprep.subr.mxu0 0.0
        %1706 = vmatpush1.msra.mxu0 0.0
        %1707 = vmatprep.subr.mxu0 0.0
        %1708 = vmatpush1.msra.mxu0 0.0
        %1709 = vmatprep.subr.mxu0 0.0
        %1710 = vmatpush1.msra.mxu0 0.0
        %1711 = vmatprep.subr.mxu0 0.0
        %1712 = vmatpush1.msra.mxu0 0.0
        %1713 = vmatprep.subr.mxu0 0.0
        %1714 = vmatpush1.msra.mxu0 0.0
        %1715 = vmatprep.subr.mxu0 0.0
        %1716 = vmatpush1.msra.mxu0 0.0
        %1717 = vmatprep.subr.mxu0 0.0
        %1718 = vmatpush1.msra.mxu0 0.0
        %1719 = vmatprep.subr.mxu0 0.0
        %1720 = vmatpush1.msra.mxu0 0.0
        %1721 = vmatprep.subr.mxu0 0.0
        %1722 = vmatpush1.msra.mxu0 0.0
        %1723 = vmatprep.subr.mxu0 0.0
        %1724 = vmatpush1.msra.mxu0 0.0
        %1725 = vmatprep.subr.mxu0 0.0
        %1726 = vmatpush1.msra.mxu0 0.0
        %1727 = vmatprep.subr.mxu0 0.0
        %1728 = vmatpush1.msra.mxu0 0.0
        %1729 = vmatprep.subr.mxu0 0.0
        %1730 = vmatpush1.msra.mxu0 0.0
        %1731 = vmatprep.mubr.f32.mxu0 0.0
        %1732 = vmatmul.mubr.f32.gmra.mrb[0].mxu0 %v1666
        %v1733 = vpop.f32.mrb[0].mxu0
        %v1734 = vadd.f32 0.0, %v1733
        %v1735 = vpop.f32.mrb[0].mxu0
        %1736 = vdwg.mxu0
        %v1737 = vadd.f32 %v1255, %v1734
        %v1738 = vsub.s32 %v223, 384
        %v1739 = vlaneseq
        %v1740 = vshrl.u32 %v1739, 7
        %v1741 = vsub.s32 0, %v1740
        %v1742 = vrot.slane %v1738, %v1741
        %vm1743 = vcmp.eq.s32.totalorder %v260, %v1742
        %vm1744 = vcmp.eq.s32.totalorder %v261, %v1742
        %vm1745 = vcmp.eq.s32.totalorder %v262, %v1742
        %vm1746 = vcmp.eq.s32.totalorder %v263, %v1742
        %vm1747 = vcmp.eq.s32.totalorder %v264, %v1742
        %vm1748 = vcmp.eq.s32.totalorder %v265, %v1742
        %vm1749 = vcmp.eq.s32.totalorder %v266, %v1742
        %vm1750 = vcmp.eq.s32.totalorder %v267, %v1742
        %vm1751 = vcmp.eq.s32.totalorder %v268, %v1742
        %vm1752 = vcmp.eq.s32.totalorder %v269, %v1742
        %vm1753 = vcmp.eq.s32.totalorder %v270, %v1742
        %vm1754 = vcmp.eq.s32.totalorder %v271, %v1742
        %vm1755 = vcmp.eq.s32.totalorder %v272, %v1742
        %vm1756 = vcmp.eq.s32.totalorder %v273, %v1742
        %vm1757 = vcmp.eq.s32.totalorder %v274, %v1742
        %vm1758 = vcmp.eq.s32.totalorder %v275, %v1742
        %v1759 = vsel %vm1743, %v299, 0.0
        %v1760 = vsel %vm1744, %v299, 0.0
        %v1761 = vsel %vm1745, %v299, 0.0
        %v1762 = vsel %vm1746, %v299, 0.0
        %v1763 = vsel %vm1747, %v299, 0.0
        %v1764 = vsel %vm1748, %v299, 0.0
        %v1765 = vsel %vm1749, %v299, 0.0
        %v1766 = vsel %vm1750, %v299, 0.0
        %v1767 = vsel %vm1751, %v299, 0.0
        %v1768 = vsel %vm1752, %v299, 0.0
        %v1769 = vsel %vm1753, %v299, 0.0
        %v1770 = vsel %vm1754, %v299, 0.0
        %v1771 = vsel %vm1755, %v299, 0.0
        %v1772 = vsel %vm1756, %v299, 0.0
        %v1773 = vsel %vm1757, %v299, 0.0
        %v1774 = vsel %vm1758, %v299, 0.0
        %v1775 = vsub.s32 %v229, 384
        %v1776 = vlaneseq
        %v1777 = vshrl.u32 %v1776, 7
        %v1778 = vsub.s32 0, %v1777
        %v1779 = vrot.slane %v1775, %v1778
        %vm1780 = vcmp.eq.s32.totalorder %v260, %v1779
        %vm1781 = vcmp.eq.s32.totalorder %v261, %v1779
        %vm1782 = vcmp.eq.s32.totalorder %v262, %v1779
        %vm1783 = vcmp.eq.s32.totalorder %v263, %v1779
        %vm1784 = vcmp.eq.s32.totalorder %v264, %v1779
        %vm1785 = vcmp.eq.s32.totalorder %v265, %v1779
        %vm1786 = vcmp.eq.s32.totalorder %v266, %v1779
        %vm1787 = vcmp.eq.s32.totalorder %v267, %v1779
        %vm1788 = vcmp.eq.s32.totalorder %v268, %v1779
        %vm1789 = vcmp.eq.s32.totalorder %v269, %v1779
        %vm1790 = vcmp.eq.s32.totalorder %v270, %v1779
        %vm1791 = vcmp.eq.s32.totalorder %v271, %v1779
        %vm1792 = vcmp.eq.s32.totalorder %v272, %v1779
        %vm1793 = vcmp.eq.s32.totalorder %v273, %v1779
        %vm1794 = vcmp.eq.s32.totalorder %v274, %v1779
        %vm1795 = vcmp.eq.s32.totalorder %v275, %v1779
        %v1796 = vsel %vm1780, %v339, 0.0
        %v1797 = vsel %vm1781, %v339, 0.0
        %v1798 = vsel %vm1782, %v339, 0.0
        %v1799 = vsel %vm1783, %v339, 0.0
        %v1800 = vsel %vm1784, %v339, 0.0
        %v1801 = vsel %vm1785, %v339, 0.0
        %v1802 = vsel %vm1786, %v339, 0.0
        %v1803 = vsel %vm1787, %v339, 0.0
        %v1804 = vsel %vm1788, %v339, 0.0
        %v1805 = vsel %vm1789, %v339, 0.0
        %v1806 = vsel %vm1790, %v339, 0.0
        %v1807 = vsel %vm1791, %v339, 0.0
        %v1808 = vsel %vm1792, %v339, 0.0
        %v1809 = vsel %vm1793, %v339, 0.0
        %v1810 = vsel %vm1794, %v339, 0.0
        %v1811 = vsel %vm1795, %v339, 0.0
        %v1812 = vadd.f32 %v1759, %v1796
        %v1813 = vadd.f32 %v1760, %v1797
        %v1814 = vadd.f32 %v1761, %v1798
        %v1815 = vadd.f32 %v1762, %v1799
        %v1816 = vadd.f32 %v1763, %v1800
        %v1817 = vadd.f32 %v1764, %v1801
        %v1818 = vadd.f32 %v1765, %v1802
        %v1819 = vadd.f32 %v1766, %v1803
        %v1820 = vadd.f32 %v1767, %v1804
        %v1821 = vadd.f32 %v1768, %v1805
        %v1822 = vadd.f32 %v1769, %v1806
        %v1823 = vadd.f32 %v1770, %v1807
        %v1824 = vadd.f32 %v1771, %v1808
        %v1825 = vadd.f32 %v1772, %v1809
        %v1826 = vadd.f32 %v1773, %v1810
        %v1827 = vadd.f32 %v1774, %v1811
        %v1828 = vsub.s32 %v235, 384
        %v1829 = vlaneseq
        %v1830 = vshrl.u32 %v1829, 7
        %v1831 = vsub.s32 0, %v1830
        %v1832 = vrot.slane %v1828, %v1831
        %vm1833 = vcmp.eq.s32.totalorder %v260, %v1832
        %vm1834 = vcmp.eq.s32.totalorder %v261, %v1832
        %vm1835 = vcmp.eq.s32.totalorder %v262, %v1832
        %vm1836 = vcmp.eq.s32.totalorder %v263, %v1832
        %vm1837 = vcmp.eq.s32.totalorder %v264, %v1832
        %vm1838 = vcmp.eq.s32.totalorder %v265, %v1832
        %vm1839 = vcmp.eq.s32.totalorder %v266, %v1832
        %vm1840 = vcmp.eq.s32.totalorder %v267, %v1832
        %vm1841 = vcmp.eq.s32.totalorder %v268, %v1832
        %vm1842 = vcmp.eq.s32.totalorder %v269, %v1832
        %vm1843 = vcmp.eq.s32.totalorder %v270, %v1832
        %vm1844 = vcmp.eq.s32.totalorder %v271, %v1832
        %vm1845 = vcmp.eq.s32.totalorder %v272, %v1832
        %vm1846 = vcmp.eq.s32.totalorder %v273, %v1832
        %vm1847 = vcmp.eq.s32.totalorder %v274, %v1832
        %vm1848 = vcmp.eq.s32.totalorder %v275, %v1832
        %v1849 = vsel %vm1833, %v395, 0.0
        %v1850 = vsel %vm1834, %v395, 0.0
        %v1851 = vsel %vm1835, %v395, 0.0
        %v1852 = vsel %vm1836, %v395, 0.0
        %v1853 = vsel %vm1837, %v395, 0.0
        %v1854 = vsel %vm1838, %v395, 0.0
        %v1855 = vsel %vm1839, %v395, 0.0
        %v1856 = vsel %vm1840, %v395, 0.0
        %v1857 = vsel %vm1841, %v395, 0.0
        %v1858 = vsel %vm1842, %v395, 0.0
        %v1859 = vsel %vm1843, %v395, 0.0
        %v1860 = vsel %vm1844, %v395, 0.0
        %v1861 = vsel %vm1845, %v395, 0.0
        %v1862 = vsel %vm1846, %v395, 0.0
        %v1863 = vsel %vm1847, %v395, 0.0
        %v1864 = vsel %vm1848, %v395, 0.0
        %v1865 = vadd.f32 %v1812, %v1849
        %v1866 = vadd.f32 %v1813, %v1850
        %v1867 = vadd.f32 %v1814, %v1851
        %v1868 = vadd.f32 %v1815, %v1852
        %v1869 = vadd.f32 %v1816, %v1853
        %v1870 = vadd.f32 %v1817, %v1854
        %v1871 = vadd.f32 %v1818, %v1855
        %v1872 = vadd.f32 %v1819, %v1856
        %v1873 = vadd.f32 %v1820, %v1857
        %v1874 = vadd.f32 %v1821, %v1858
        %v1875 = vadd.f32 %v1822, %v1859
        %v1876 = vadd.f32 %v1823, %v1860
        %v1877 = vadd.f32 %v1824, %v1861
        %v1878 = vadd.f32 %v1825, %v1862
        %v1879 = vadd.f32 %v1826, %v1863
        %v1880 = vadd.f32 %v1827, %v1864
        %v1881 = vsub.s32 %v239, 384
        %v1882 = vlaneseq
        %v1883 = vshrl.u32 %v1882, 7
        %v1884 = vsub.s32 0, %v1883
        %v1885 = vrot.slane %v1881, %v1884
        %vm1886 = vcmp.eq.s32.totalorder %v260, %v1885
        %vm1887 = vcmp.eq.s32.totalorder %v261, %v1885
        %vm1888 = vcmp.eq.s32.totalorder %v262, %v1885
        %vm1889 = vcmp.eq.s32.totalorder %v263, %v1885
        %vm1890 = vcmp.eq.s32.totalorder %v264, %v1885
        %vm1891 = vcmp.eq.s32.totalorder %v265, %v1885
        %vm1892 = vcmp.eq.s32.totalorder %v266, %v1885
        %vm1893 = vcmp.eq.s32.totalorder %v267, %v1885
        %vm1894 = vcmp.eq.s32.totalorder %v268, %v1885
        %vm1895 = vcmp.eq.s32.totalorder %v269, %v1885
        %vm1896 = vcmp.eq.s32.totalorder %v270, %v1885
        %vm1897 = vcmp.eq.s32.totalorder %v271, %v1885
        %vm1898 = vcmp.eq.s32.totalorder %v272, %v1885
        %vm1899 = vcmp.eq.s32.totalorder %v273, %v1885
        %vm1900 = vcmp.eq.s32.totalorder %v274, %v1885
        %vm1901 = vcmp.eq.s32.totalorder %v275, %v1885
        %v1902 = vsel %vm1886, %v451, 0.0
        %v1903 = vsel %vm1887, %v451, 0.0
        %v1904 = vsel %vm1888, %v451, 0.0
        %v1905 = vsel %vm1889, %v451, 0.0
        %v1906 = vsel %vm1890, %v451, 0.0
        %v1907 = vsel %vm1891, %v451, 0.0
        %v1908 = vsel %vm1892, %v451, 0.0
        %v1909 = vsel %vm1893, %v451, 0.0
        %v1910 = vsel %vm1894, %v451, 0.0
        %v1911 = vsel %vm1895, %v451, 0.0
        %v1912 = vsel %vm1896, %v451, 0.0
        %v1913 = vsel %vm1897, %v451, 0.0
        %v1914 = vsel %vm1898, %v451, 0.0
        %v1915 = vsel %vm1899, %v451, 0.0
        %v1916 = vsel %vm1900, %v451, 0.0
        %v1917 = vsel %vm1901, %v451, 0.0
        %v1918 = vadd.f32 %v1865, %v1902
        %v1919 = vadd.f32 %v1866, %v1903
        %v1920 = vadd.f32 %v1867, %v1904
        %v1921 = vadd.f32 %v1868, %v1905
        %v1922 = vadd.f32 %v1869, %v1906
        %v1923 = vadd.f32 %v1870, %v1907
        %v1924 = vadd.f32 %v1871, %v1908
        %v1925 = vadd.f32 %v1872, %v1909
        %v1926 = vadd.f32 %v1873, %v1910
        %v1927 = vadd.f32 %v1874, %v1911
        %v1928 = vadd.f32 %v1875, %v1912
        %v1929 = vadd.f32 %v1876, %v1913
        %v1930 = vadd.f32 %v1877, %v1914
        %v1931 = vadd.f32 %v1878, %v1915
        %v1932 = vadd.f32 %v1879, %v1916
        %v1933 = vadd.f32 %v1880, %v1917
        %v1934 = vsub.s32 %v245, 384
        %v1935 = vlaneseq
        %v1936 = vshrl.u32 %v1935, 7
        %v1937 = vsub.s32 0, %v1936
        %v1938 = vrot.slane %v1934, %v1937
        %vm1939 = vcmp.eq.s32.totalorder %v260, %v1938
        %vm1940 = vcmp.eq.s32.totalorder %v261, %v1938
        %vm1941 = vcmp.eq.s32.totalorder %v262, %v1938
        %vm1942 = vcmp.eq.s32.totalorder %v263, %v1938
        %vm1943 = vcmp.eq.s32.totalorder %v264, %v1938
        %vm1944 = vcmp.eq.s32.totalorder %v265, %v1938
        %vm1945 = vcmp.eq.s32.totalorder %v266, %v1938
        %vm1946 = vcmp.eq.s32.totalorder %v267, %v1938
        %vm1947 = vcmp.eq.s32.totalorder %v268, %v1938
        %vm1948 = vcmp.eq.s32.totalorder %v269, %v1938
        %vm1949 = vcmp.eq.s32.totalorder %v270, %v1938
        %vm1950 = vcmp.eq.s32.totalorder %v271, %v1938
        %vm1951 = vcmp.eq.s32.totalorder %v272, %v1938
        %vm1952 = vcmp.eq.s32.totalorder %v273, %v1938
        %vm1953 = vcmp.eq.s32.totalorder %v274, %v1938
        %vm1954 = vcmp.eq.s32.totalorder %v275, %v1938
        %v1955 = vsel %vm1939, %v507, 0.0
        %v1956 = vsel %vm1940, %v507, 0.0
        %v1957 = vsel %vm1941, %v507, 0.0
        %v1958 = vsel %vm1942, %v507, 0.0
        %v1959 = vsel %vm1943, %v507, 0.0
        %v1960 = vsel %vm1944, %v507, 0.0
        %v1961 = vsel %vm1945, %v507, 0.0
        %v1962 = vsel %vm1946, %v507, 0.0
        %v1963 = vsel %vm1947, %v507, 0.0
        %v1964 = vsel %vm1948, %v507, 0.0
        %v1965 = vsel %vm1949, %v507, 0.0
        %v1966 = vsel %vm1950, %v507, 0.0
        %v1967 = vsel %vm1951, %v507, 0.0
        %v1968 = vsel %vm1952, %v507, 0.0
        %v1969 = vsel %vm1953, %v507, 0.0
        %v1970 = vsel %vm1954, %v507, 0.0
        %v1971 = vadd.f32 %v1918, %v1955
        %v1972 = vadd.f32 %v1919, %v1956
        %v1973 = vadd.f32 %v1920, %v1957
        %v1974 = vadd.f32 %v1921, %v1958
        %v1975 = vadd.f32 %v1922, %v1959
        %v1976 = vadd.f32 %v1923, %v1960
        %v1977 = vadd.f32 %v1924, %v1961
        %v1978 = vadd.f32 %v1925, %v1962
        %v1979 = vadd.f32 %v1926, %v1963
        %v1980 = vadd.f32 %v1927, %v1964
        %v1981 = vadd.f32 %v1928, %v1965
        %v1982 = vadd.f32 %v1929, %v1966
        %v1983 = vadd.f32 %v1930, %v1967
        %v1984 = vadd.f32 %v1931, %v1968
        %v1985 = vadd.f32 %v1932, %v1969
        %v1986 = vadd.f32 %v1933, %v1970
        %v1987 = vsub.s32 %v249, 384
        %v1988 = vlaneseq
        %v1989 = vshrl.u32 %v1988, 7
        %v1990 = vsub.s32 0, %v1989
        %v1991 = vrot.slane %v1987, %v1990
        %vm1992 = vcmp.eq.s32.totalorder %v260, %v1991
        %vm1993 = vcmp.eq.s32.totalorder %v261, %v1991
        %vm1994 = vcmp.eq.s32.totalorder %v262, %v1991
        %vm1995 = vcmp.eq.s32.totalorder %v263, %v1991
        %vm1996 = vcmp.eq.s32.totalorder %v264, %v1991
        %vm1997 = vcmp.eq.s32.totalorder %v265, %v1991
        %vm1998 = vcmp.eq.s32.totalorder %v266, %v1991
        %vm1999 = vcmp.eq.s32.totalorder %v267, %v1991
        %vm2000 = vcmp.eq.s32.totalorder %v268, %v1991
        %vm2001 = vcmp.eq.s32.totalorder %v269, %v1991
        %vm2002 = vcmp.eq.s32.totalorder %v270, %v1991
        %vm2003 = vcmp.eq.s32.totalorder %v271, %v1991
        %vm2004 = vcmp.eq.s32.totalorder %v272, %v1991
        %vm2005 = vcmp.eq.s32.totalorder %v273, %v1991
        %vm2006 = vcmp.eq.s32.totalorder %v274, %v1991
        %vm2007 = vcmp.eq.s32.totalorder %v275, %v1991
        %v2008 = vsel %vm1992, %v563, 0.0
        %v2009 = vsel %vm1993, %v563, 0.0
        %v2010 = vsel %vm1994, %v563, 0.0
        %v2011 = vsel %vm1995, %v563, 0.0
        %v2012 = vsel %vm1996, %v563, 0.0
        %v2013 = vsel %vm1997, %v563, 0.0
        %v2014 = vsel %vm1998, %v563, 0.0
        %v2015 = vsel %vm1999, %v563, 0.0
        %v2016 = vsel %vm2000, %v563, 0.0
        %v2017 = vsel %vm2001, %v563, 0.0
        %v2018 = vsel %vm2002, %v563, 0.0
        %v2019 = vsel %vm2003, %v563, 0.0
        %v2020 = vsel %vm2004, %v563, 0.0
        %v2021 = vsel %vm2005, %v563, 0.0
        %v2022 = vsel %vm2006, %v563, 0.0
        %v2023 = vsel %vm2007, %v563, 0.0
        %v2024 = vadd.f32 %v1971, %v2008
        %v2025 = vadd.f32 %v1972, %v2009
        %v2026 = vadd.f32 %v1973, %v2010
        %v2027 = vadd.f32 %v1974, %v2011
        %v2028 = vadd.f32 %v1975, %v2012
        %v2029 = vadd.f32 %v1976, %v2013
        %v2030 = vadd.f32 %v1977, %v2014
        %v2031 = vadd.f32 %v1978, %v2015
        %v2032 = vadd.f32 %v1979, %v2016
        %v2033 = vadd.f32 %v1980, %v2017
        %v2034 = vadd.f32 %v1981, %v2018
        %v2035 = vadd.f32 %v1982, %v2019
        %v2036 = vadd.f32 %v1983, %v2020
        %v2037 = vadd.f32 %v1984, %v2021
        %v2038 = vadd.f32 %v1985, %v2022
        %v2039 = vadd.f32 %v1986, %v2023
        %v2040 = vsub.s32 %v253, 384
        %v2041 = vlaneseq
        %v2042 = vshrl.u32 %v2041, 7
        %v2043 = vsub.s32 0, %v2042
        %v2044 = vrot.slane %v2040, %v2043
        %vm2045 = vcmp.eq.s32.totalorder %v260, %v2044
        %vm2046 = vcmp.eq.s32.totalorder %v261, %v2044
        %vm2047 = vcmp.eq.s32.totalorder %v262, %v2044
        %vm2048 = vcmp.eq.s32.totalorder %v263, %v2044
        %vm2049 = vcmp.eq.s32.totalorder %v264, %v2044
        %vm2050 = vcmp.eq.s32.totalorder %v265, %v2044
        %vm2051 = vcmp.eq.s32.totalorder %v266, %v2044
        %vm2052 = vcmp.eq.s32.totalorder %v267, %v2044
        %vm2053 = vcmp.eq.s32.totalorder %v268, %v2044
        %vm2054 = vcmp.eq.s32.totalorder %v269, %v2044
        %vm2055 = vcmp.eq.s32.totalorder %v270, %v2044
        %vm2056 = vcmp.eq.s32.totalorder %v271, %v2044
        %vm2057 = vcmp.eq.s32.totalorder %v272, %v2044
        %vm2058 = vcmp.eq.s32.totalorder %v273, %v2044
        %vm2059 = vcmp.eq.s32.totalorder %v274, %v2044
        %vm2060 = vcmp.eq.s32.totalorder %v275, %v2044
        %v2061 = vsel %vm2045, %v619, 0.0
        %v2062 = vsel %vm2046, %v619, 0.0
        %v2063 = vsel %vm2047, %v619, 0.0
        %v2064 = vsel %vm2048, %v619, 0.0
        %v2065 = vsel %vm2049, %v619, 0.0
        %v2066 = vsel %vm2050, %v619, 0.0
        %v2067 = vsel %vm2051, %v619, 0.0
        %v2068 = vsel %vm2052, %v619, 0.0
        %v2069 = vsel %vm2053, %v619, 0.0
        %v2070 = vsel %vm2054, %v619, 0.0
        %v2071 = vsel %vm2055, %v619, 0.0
        %v2072 = vsel %vm2056, %v619, 0.0
        %v2073 = vsel %vm2057, %v619, 0.0
        %v2074 = vsel %vm2058, %v619, 0.0
        %v2075 = vsel %vm2059, %v619, 0.0
        %v2076 = vsel %vm2060, %v619, 0.0
        %v2077 = vadd.f32 %v2024, %v2061
        %v2078 = vadd.f32 %v2025, %v2062
        %v2079 = vadd.f32 %v2026, %v2063
        %v2080 = vadd.f32 %v2027, %v2064
        %v2081 = vadd.f32 %v2028, %v2065
        %v2082 = vadd.f32 %v2029, %v2066
        %v2083 = vadd.f32 %v2030, %v2067
        %v2084 = vadd.f32 %v2031, %v2068
        %v2085 = vadd.f32 %v2032, %v2069
        %v2086 = vadd.f32 %v2033, %v2070
        %v2087 = vadd.f32 %v2034, %v2071
        %v2088 = vadd.f32 %v2035, %v2072
        %v2089 = vadd.f32 %v2036, %v2073
        %v2090 = vadd.f32 %v2037, %v2074
        %v2091 = vadd.f32 %v2038, %v2075
        %v2092 = vadd.f32 %v2039, %v2076
        %v2093 = vsub.s32 %v257, 384
        %v2094 = vlaneseq
        %v2095 = vshrl.u32 %v2094, 7
        %v2096 = vsub.s32 0, %v2095
        %v2097 = vrot.slane %v2093, %v2096
        %vm2098 = vcmp.eq.s32.totalorder %v260, %v2097
        %vm2099 = vcmp.eq.s32.totalorder %v261, %v2097
        %vm2100 = vcmp.eq.s32.totalorder %v262, %v2097
        %vm2101 = vcmp.eq.s32.totalorder %v263, %v2097
        %vm2102 = vcmp.eq.s32.totalorder %v264, %v2097
        %vm2103 = vcmp.eq.s32.totalorder %v265, %v2097
        %vm2104 = vcmp.eq.s32.totalorder %v266, %v2097
        %vm2105 = vcmp.eq.s32.totalorder %v267, %v2097
        %vm2106 = vcmp.eq.s32.totalorder %v268, %v2097
        %vm2107 = vcmp.eq.s32.totalorder %v269, %v2097
        %vm2108 = vcmp.eq.s32.totalorder %v270, %v2097
        %vm2109 = vcmp.eq.s32.totalorder %v271, %v2097
        %vm2110 = vcmp.eq.s32.totalorder %v272, %v2097
        %vm2111 = vcmp.eq.s32.totalorder %v273, %v2097
        %vm2112 = vcmp.eq.s32.totalorder %v274, %v2097
        %vm2113 = vcmp.eq.s32.totalorder %v275, %v2097
        %v2114 = vsel %vm2098, %v675, 0.0
        %v2115 = vsel %vm2099, %v675, 0.0
        %v2116 = vsel %vm2100, %v675, 0.0
        %v2117 = vsel %vm2101, %v675, 0.0
        %v2118 = vsel %vm2102, %v675, 0.0
        %v2119 = vsel %vm2103, %v675, 0.0
        %v2120 = vsel %vm2104, %v675, 0.0
        %v2121 = vsel %vm2105, %v675, 0.0
        %v2122 = vsel %vm2106, %v675, 0.0
        %v2123 = vsel %vm2107, %v675, 0.0
        %v2124 = vsel %vm2108, %v675, 0.0
        %v2125 = vsel %vm2109, %v675, 0.0
        %v2126 = vsel %vm2110, %v675, 0.0
        %v2127 = vsel %vm2111, %v675, 0.0
        %v2128 = vsel %vm2112, %v675, 0.0
        %v2129 = vsel %vm2113, %v675, 0.0
        %v2130 = vadd.f32 %v2077, %v2114
        %v2131 = vadd.f32 %v2078, %v2115
        %v2132 = vadd.f32 %v2079, %v2116
        %v2133 = vadd.f32 %v2080, %v2117
        %v2134 = vadd.f32 %v2081, %v2118
        %v2135 = vadd.f32 %v2082, %v2119
        %v2136 = vadd.f32 %v2083, %v2120
        %v2137 = vadd.f32 %v2084, %v2121
        %v2138 = vadd.f32 %v2085, %v2122
        %v2139 = vadd.f32 %v2086, %v2123
        %v2140 = vadd.f32 %v2087, %v2124
        %v2141 = vadd.f32 %v2088, %v2125
        %v2142 = vadd.f32 %v2089, %v2126
        %v2143 = vadd.f32 %v2090, %v2127
        %v2144 = vadd.f32 %v2091, %v2128
        %v2145 = vadd.f32 %v2092, %v2129
        %v2146 = vld [vmem:[%s157 + $0x18] sm:$0xff]
        %2147 = vmatprep.subr.mxu0 0.0
        %2148 = vmatpush1.msra.mxu0 %v2130
        %2149 = vmatprep.subr.mxu0 0.0
        %2150 = vmatpush1.msra.mxu0 %v2131
        %2151 = vmatprep.subr.mxu0 0.0
        %2152 = vmatpush1.msra.mxu0 %v2132
        %2153 = vmatprep.subr.mxu0 0.0
        %2154 = vmatpush1.msra.mxu0 %v2133
        %2155 = vmatprep.subr.mxu0 0.0
        %2156 = vmatpush1.msra.mxu0 %v2134
        %2157 = vmatprep.subr.mxu0 0.0
        %2158 = vmatpush1.msra.mxu0 %v2135
        %2159 = vmatprep.subr.mxu0 0.0
        %2160 = vmatpush1.msra.mxu0 %v2136
        %2161 = vmatprep.subr.mxu0 0.0
        %2162 = vmatpush1.msra.mxu0 %v2137
        %2163 = vmatprep.subr.mxu0 0.0
        %2164 = vmatpush1.msra.mxu0 %v2138
        %2165 = vmatprep.subr.mxu0 0.0
        %2166 = vmatpush1.msra.mxu0 %v2139
        %2167 = vmatprep.subr.mxu0 0.0
        %2168 = vmatpush1.msra.mxu0 %v2140
        %2169 = vmatprep.subr.mxu0 0.0
        %2170 = vmatpush1.msra.mxu0 %v2141
        %2171 = vmatprep.subr.mxu0 0.0
        %2172 = vmatpush1.msra.mxu0 %v2142
        %2173 = vmatprep.subr.mxu0 0.0
        %2174 = vmatpush1.msra.mxu0 %v2143
        %2175 = vmatprep.subr.mxu0 0.0
        %2176 = vmatpush1.msra.mxu0 %v2144
        %2177 = vmatprep.subr.mxu0 0.0
        %2178 = vmatpush1.msra.mxu0 %v2145
        %2179 = vmatprep.subr.mxu0 0.0
        %2180 = vmatpush1.msra.mxu0 0.0
        %2181 = vmatprep.subr.mxu0 0.0
        %2182 = vmatpush1.msra.mxu0 0.0
        %2183 = vmatprep.subr.mxu0 0.0
        %2184 = vmatpush1.msra.mxu0 0.0
        %2185 = vmatprep.subr.mxu0 0.0
        %2186 = vmatpush1.msra.mxu0 0.0
        %2187 = vmatprep.subr.mxu0 0.0
        %2188 = vmatpush1.msra.mxu0 0.0
        %2189 = vmatprep.subr.mxu0 0.0
        %2190 = vmatpush1.msra.mxu0 0.0
        %2191 = vmatprep.subr.mxu0 0.0
        %2192 = vmatpush1.msra.mxu0 0.0
        %2193 = vmatprep.subr.mxu0 0.0
        %2194 = vmatpush1.msra.mxu0 0.0
        %2195 = vmatprep.subr.mxu0 0.0
        %2196 = vmatpush1.msra.mxu0 0.0
        %2197 = vmatprep.subr.mxu0 0.0
        %2198 = vmatpush1.msra.mxu0 0.0
        %2199 = vmatprep.subr.mxu0 0.0
        %2200 = vmatpush1.msra.mxu0 0.0
        %2201 = vmatprep.subr.mxu0 0.0
        %2202 = vmatpush1.msra.mxu0 0.0
        %2203 = vmatprep.subr.mxu0 0.0
        %2204 = vmatpush1.msra.mxu0 0.0
        %2205 = vmatprep.subr.mxu0 0.0
        %2206 = vmatpush1.msra.mxu0 0.0
        %2207 = vmatprep.subr.mxu0 0.0
        %2208 = vmatpush1.msra.mxu0 0.0
        %2209 = vmatprep.subr.mxu0 0.0
        %2210 = vmatpush1.msra.mxu0 0.0
        %2211 = vmatprep.mubr.f32.mxu0 0.0
        %2212 = vmatmul.mubr.f32.gmra.mrb[0].mxu0 %v2146
        %v2213 = vpop.f32.mrb[0].mxu0
        %v2214 = vadd.f32 0.0, %v2213
        %v2215 = vpop.f32.mrb[0].mxu0
        %2216 = vdwg.mxu0
        %v2217 = vadd.f32 %v1737, %v2214
        %v2218 = vsub.s32 %v223, 512
        %v2219 = vlaneseq
        %v2220 = vshrl.u32 %v2219, 7
        %v2221 = vsub.s32 0, %v2220
        %v2222 = vrot.slane %v2218, %v2221
        %vm2223 = vcmp.eq.s32.totalorder %v260, %v2222
        %vm2224 = vcmp.eq.s32.totalorder %v261, %v2222
        %vm2225 = vcmp.eq.s32.totalorder %v262, %v2222
        %vm2226 = vcmp.eq.s32.totalorder %v263, %v2222
        %vm2227 = vcmp.eq.s32.totalorder %v264, %v2222
        %vm2228 = vcmp.eq.s32.totalorder %v265, %v2222
        %vm2229 = vcmp.eq.s32.totalorder %v266, %v2222
        %vm2230 = vcmp.eq.s32.totalorder %v267, %v2222
        %vm2231 = vcmp.eq.s32.totalorder %v268, %v2222
        %vm2232 = vcmp.eq.s32.totalorder %v269, %v2222
        %vm2233 = vcmp.eq.s32.totalorder %v270, %v2222
        %vm2234 = vcmp.eq.s32.totalorder %v271, %v2222
        %vm2235 = vcmp.eq.s32.totalorder %v272, %v2222
        %vm2236 = vcmp.eq.s32.totalorder %v273, %v2222
        %vm2237 = vcmp.eq.s32.totalorder %v274, %v2222
        %vm2238 = vcmp.eq.s32.totalorder %v275, %v2222
        %v2239 = vsel %vm2223, %v299, 0.0
        %v2240 = vsel %vm2224, %v299, 0.0
        %v2241 = vsel %vm2225, %v299, 0.0
        %v2242 = vsel %vm2226, %v299, 0.0
        %v2243 = vsel %vm2227, %v299, 0.0
        %v2244 = vsel %vm2228, %v299, 0.0
        %v2245 = vsel %vm2229, %v299, 0.0
        %v2246 = vsel %vm2230, %v299, 0.0
        %v2247 = vsel %vm2231, %v299, 0.0
        %v2248 = vsel %vm2232, %v299, 0.0
        %v2249 = vsel %vm2233, %v299, 0.0
        %v2250 = vsel %vm2234, %v299, 0.0
        %v2251 = vsel %vm2235, %v299, 0.0
        %v2252 = vsel %vm2236, %v299, 0.0
        %v2253 = vsel %vm2237, %v299, 0.0
        %v2254 = vsel %vm2238, %v299, 0.0
        %v2255 = vsub.s32 %v229, 512
        %v2256 = vlaneseq
        %v2257 = vshrl.u32 %v2256, 7
        %v2258 = vsub.s32 0, %v2257
        %v2259 = vrot.slane %v2255, %v2258
        %vm2260 = vcmp.eq.s32.totalorder %v260, %v2259
        %vm2261 = vcmp.eq.s32.totalorder %v261, %v2259
        %vm2262 = vcmp.eq.s32.totalorder %v262, %v2259
        %vm2263 = vcmp.eq.s32.totalorder %v263, %v2259
        %vm2264 = vcmp.eq.s32.totalorder %v264, %v2259
        %vm2265 = vcmp.eq.s32.totalorder %v265, %v2259
        %vm2266 = vcmp.eq.s32.totalorder %v266, %v2259
        %vm2267 = vcmp.eq.s32.totalorder %v267, %v2259
        %vm2268 = vcmp.eq.s32.totalorder %v268, %v2259
        %vm2269 = vcmp.eq.s32.totalorder %v269, %v2259
        %vm2270 = vcmp.eq.s32.totalorder %v270, %v2259
        %vm2271 = vcmp.eq.s32.totalorder %v271, %v2259
        %vm2272 = vcmp.eq.s32.totalorder %v272, %v2259
        %vm2273 = vcmp.eq.s32.totalorder %v273, %v2259
        %vm2274 = vcmp.eq.s32.totalorder %v274, %v2259
        %vm2275 = vcmp.eq.s32.totalorder %v275, %v2259
        %v2276 = vsel %vm2260, %v339, 0.0
        %v2277 = vsel %vm2261, %v339, 0.0
        %v2278 = vsel %vm2262, %v339, 0.0
        %v2279 = vsel %vm2263, %v339, 0.0
        %v2280 = vsel %vm2264, %v339, 0.0
        %v2281 = vsel %vm2265, %v339, 0.0
        %v2282 = vsel %vm2266, %v339, 0.0
        %v2283 = vsel %vm2267, %v339, 0.0
        %v2284 = vsel %vm2268, %v339, 0.0
        %v2285 = vsel %vm2269, %v339, 0.0
        %v2286 = vsel %vm2270, %v339, 0.0
        %v2287 = vsel %vm2271, %v339, 0.0
        %v2288 = vsel %vm2272, %v339, 0.0
        %v2289 = vsel %vm2273, %v339, 0.0
        %v2290 = vsel %vm2274, %v339, 0.0
        %v2291 = vsel %vm2275, %v339, 0.0
        %v2292 = vadd.f32 %v2239, %v2276
        %v2293 = vadd.f32 %v2240, %v2277
        %v2294 = vadd.f32 %v2241, %v2278
        %v2295 = vadd.f32 %v2242, %v2279
        %v2296 = vadd.f32 %v2243, %v2280
        %v2297 = vadd.f32 %v2244, %v2281
        %v2298 = vadd.f32 %v2245, %v2282
        %v2299 = vadd.f32 %v2246, %v2283
        %v2300 = vadd.f32 %v2247, %v2284
        %v2301 = vadd.f32 %v2248, %v2285
        %v2302 = vadd.f32 %v2249, %v2286
        %v2303 = vadd.f32 %v2250, %v2287
        %v2304 = vadd.f32 %v2251, %v2288
        %v2305 = vadd.f32 %v2252, %v2289
        %v2306 = vadd.f32 %v2253, %v2290
        %v2307 = vadd.f32 %v2254, %v2291
        %v2308 = vsub.s32 %v235, 512
        %v2309 = vlaneseq
        %v2310 = vshrl.u32 %v2309, 7
        %v2311 = vsub.s32 0, %v2310
        %v2312 = vrot.slane %v2308, %v2311
        %vm2313 = vcmp.eq.s32.totalorder %v260, %v2312
        %vm2314 = vcmp.eq.s32.totalorder %v261, %v2312
        %vm2315 = vcmp.eq.s32.totalorder %v262, %v2312
        %vm2316 = vcmp.eq.s32.totalorder %v263, %v2312
        %vm2317 = vcmp.eq.s32.totalorder %v264, %v2312
        %vm2318 = vcmp.eq.s32.totalorder %v265, %v2312
        %vm2319 = vcmp.eq.s32.totalorder %v266, %v2312
        %vm2320 = vcmp.eq.s32.totalorder %v267, %v2312
        %vm2321 = vcmp.eq.s32.totalorder %v268, %v2312
        %vm2322 = vcmp.eq.s32.totalorder %v269, %v2312
        %vm2323 = vcmp.eq.s32.totalorder %v270, %v2312
        %vm2324 = vcmp.eq.s32.totalorder %v271, %v2312
        %vm2325 = vcmp.eq.s32.totalorder %v272, %v2312
        %vm2326 = vcmp.eq.s32.totalorder %v273, %v2312
        %vm2327 = vcmp.eq.s32.totalorder %v274, %v2312
        %vm2328 = vcmp.eq.s32.totalorder %v275, %v2312
        %v2329 = vsel %vm2313, %v395, 0.0
        %v2330 = vsel %vm2314, %v395, 0.0
        %v2331 = vsel %vm2315, %v395, 0.0
        %v2332 = vsel %vm2316, %v395, 0.0
        %v2333 = vsel %vm2317, %v395, 0.0
        %v2334 = vsel %vm2318, %v395, 0.0
        %v2335 = vsel %vm2319, %v395, 0.0
        %v2336 = vsel %vm2320, %v395, 0.0
        %v2337 = vsel %vm2321, %v395, 0.0
        %v2338 = vsel %vm2322, %v395, 0.0
        %v2339 = vsel %vm2323, %v395, 0.0
        %v2340 = vsel %vm2324, %v395, 0.0
        %v2341 = vsel %vm2325, %v395, 0.0
        %v2342 = vsel %vm2326, %v395, 0.0
        %v2343 = vsel %vm2327, %v395, 0.0
        %v2344 = vsel %vm2328, %v395, 0.0
        %v2345 = vadd.f32 %v2292, %v2329
        %v2346 = vadd.f32 %v2293, %v2330
        %v2347 = vadd.f32 %v2294, %v2331
        %v2348 = vadd.f32 %v2295, %v2332
        %v2349 = vadd.f32 %v2296, %v2333
        %v2350 = vadd.f32 %v2297, %v2334
        %v2351 = vadd.f32 %v2298, %v2335
        %v2352 = vadd.f32 %v2299, %v2336
        %v2353 = vadd.f32 %v2300, %v2337
        %v2354 = vadd.f32 %v2301, %v2338
        %v2355 = vadd.f32 %v2302, %v2339
        %v2356 = vadd.f32 %v2303, %v2340
        %v2357 = vadd.f32 %v2304, %v2341
        %v2358 = vadd.f32 %v2305, %v2342
        %v2359 = vadd.f32 %v2306, %v2343
        %v2360 = vadd.f32 %v2307, %v2344
        %v2361 = vsub.s32 %v239, 512
        %v2362 = vlaneseq
        %v2363 = vshrl.u32 %v2362, 7
        %v2364 = vsub.s32 0, %v2363
        %v2365 = vrot.slane %v2361, %v2364
        %vm2366 = vcmp.eq.s32.totalorder %v260, %v2365
        %vm2367 = vcmp.eq.s32.totalorder %v261, %v2365
        %vm2368 = vcmp.eq.s32.totalorder %v262, %v2365
        %vm2369 = vcmp.eq.s32.totalorder %v263, %v2365
        %vm2370 = vcmp.eq.s32.totalorder %v264, %v2365
        %vm2371 = vcmp.eq.s32.totalorder %v265, %v2365
        %vm2372 = vcmp.eq.s32.totalorder %v266, %v2365
        %vm2373 = vcmp.eq.s32.totalorder %v267, %v2365
        %vm2374 = vcmp.eq.s32.totalorder %v268, %v2365
        %vm2375 = vcmp.eq.s32.totalorder %v269, %v2365
        %vm2376 = vcmp.eq.s32.totalorder %v270, %v2365
        %vm2377 = vcmp.eq.s32.totalorder %v271, %v2365
        %vm2378 = vcmp.eq.s32.totalorder %v272, %v2365
        %vm2379 = vcmp.eq.s32.totalorder %v273, %v2365
        %vm2380 = vcmp.eq.s32.totalorder %v274, %v2365
        %vm2381 = vcmp.eq.s32.totalorder %v275, %v2365
        %v2382 = vsel %vm2366, %v451, 0.0
        %v2383 = vsel %vm2367, %v451, 0.0
        %v2384 = vsel %vm2368, %v451, 0.0
        %v2385 = vsel %vm2369, %v451, 0.0
        %v2386 = vsel %vm2370, %v451, 0.0
        %v2387 = vsel %vm2371, %v451, 0.0
        %v2388 = vsel %vm2372, %v451, 0.0
        %v2389 = vsel %vm2373, %v451, 0.0
        %v2390 = vsel %vm2374, %v451, 0.0
        %v2391 = vsel %vm2375, %v451, 0.0
        %v2392 = vsel %vm2376, %v451, 0.0
        %v2393 = vsel %vm2377, %v451, 0.0
        %v2394 = vsel %vm2378, %v451, 0.0
        %v2395 = vsel %vm2379, %v451, 0.0
        %v2396 = vsel %vm2380, %v451, 0.0
        %v2397 = vsel %vm2381, %v451, 0.0
        %v2398 = vadd.f32 %v2345, %v2382
        %v2399 = vadd.f32 %v2346, %v2383
        %v2400 = vadd.f32 %v2347, %v2384
        %v2401 = vadd.f32 %v2348, %v2385
        %v2402 = vadd.f32 %v2349, %v2386
        %v2403 = vadd.f32 %v2350, %v2387
        %v2404 = vadd.f32 %v2351, %v2388
        %v2405 = vadd.f32 %v2352, %v2389
        %v2406 = vadd.f32 %v2353, %v2390
        %v2407 = vadd.f32 %v2354, %v2391
        %v2408 = vadd.f32 %v2355, %v2392
        %v2409 = vadd.f32 %v2356, %v2393
        %v2410 = vadd.f32 %v2357, %v2394
        %v2411 = vadd.f32 %v2358, %v2395
        %v2412 = vadd.f32 %v2359, %v2396
        %v2413 = vadd.f32 %v2360, %v2397
        %v2414 = vsub.s32 %v245, 512
        %v2415 = vlaneseq
        %v2416 = vshrl.u32 %v2415, 7
        %v2417 = vsub.s32 0, %v2416
        %v2418 = vrot.slane %v2414, %v2417
        %vm2419 = vcmp.eq.s32.totalorder %v260, %v2418
        %vm2420 = vcmp.eq.s32.totalorder %v261, %v2418
        %vm2421 = vcmp.eq.s32.totalorder %v262, %v2418
        %vm2422 = vcmp.eq.s32.totalorder %v263, %v2418
        %vm2423 = vcmp.eq.s32.totalorder %v264, %v2418
        %vm2424 = vcmp.eq.s32.totalorder %v265, %v2418
        %vm2425 = vcmp.eq.s32.totalorder %v266, %v2418
        %vm2426 = vcmp.eq.s32.totalorder %v267, %v2418
        %vm2427 = vcmp.eq.s32.totalorder %v268, %v2418
        %vm2428 = vcmp.eq.s32.totalorder %v269, %v2418
        %vm2429 = vcmp.eq.s32.totalorder %v270, %v2418
        %vm2430 = vcmp.eq.s32.totalorder %v271, %v2418
        %vm2431 = vcmp.eq.s32.totalorder %v272, %v2418
        %vm2432 = vcmp.eq.s32.totalorder %v273, %v2418
        %vm2433 = vcmp.eq.s32.totalorder %v274, %v2418
        %vm2434 = vcmp.eq.s32.totalorder %v275, %v2418
        %v2435 = vsel %vm2419, %v507, 0.0
        %v2436 = vsel %vm2420, %v507, 0.0
        %v2437 = vsel %vm2421, %v507, 0.0
        %v2438 = vsel %vm2422, %v507, 0.0
        %v2439 = vsel %vm2423, %v507, 0.0
        %v2440 = vsel %vm2424, %v507, 0.0
        %v2441 = vsel %vm2425, %v507, 0.0
        %v2442 = vsel %vm2426, %v507, 0.0
        %v2443 = vsel %vm2427, %v507, 0.0
        %v2444 = vsel %vm2428, %v507, 0.0
        %v2445 = vsel %vm2429, %v507, 0.0
        %v2446 = vsel %vm2430, %v507, 0.0
        %v2447 = vsel %vm2431, %v507, 0.0
        %v2448 = vsel %vm2432, %v507, 0.0
        %v2449 = vsel %vm2433, %v507, 0.0
        %v2450 = vsel %vm2434, %v507, 0.0
        %v2451 = vadd.f32 %v2398, %v2435
        %v2452 = vadd.f32 %v2399, %v2436
        %v2453 = vadd.f32 %v2400, %v2437
        %v2454 = vadd.f32 %v2401, %v2438
        %v2455 = vadd.f32 %v2402, %v2439
        %v2456 = vadd.f32 %v2403, %v2440
        %v2457 = vadd.f32 %v2404, %v2441
        %v2458 = vadd.f32 %v2405, %v2442
        %v2459 = vadd.f32 %v2406, %v2443
        %v2460 = vadd.f32 %v2407, %v2444
        %v2461 = vadd.f32 %v2408, %v2445
        %v2462 = vadd.f32 %v2409, %v2446
        %v2463 = vadd.f32 %v2410, %v2447
        %v2464 = vadd.f32 %v2411, %v2448
        %v2465 = vadd.f32 %v2412, %v2449
        %v2466 = vadd.f32 %v2413, %v2450
        %v2467 = vsub.s32 %v249, 512
        %v2468 = vlaneseq
        %v2469 = vshrl.u32 %v2468, 7
        %v2470 = vsub.s32 0, %v2469
        %v2471 = vrot.slane %v2467, %v2470
        %vm2472 = vcmp.eq.s32.totalorder %v260, %v2471
        %vm2473 = vcmp.eq.s32.totalorder %v261, %v2471
        %vm2474 = vcmp.eq.s32.totalorder %v262, %v2471
        %vm2475 = vcmp.eq.s32.totalorder %v263, %v2471
        %vm2476 = vcmp.eq.s32.totalorder %v264, %v2471
        %vm2477 = vcmp.eq.s32.totalorder %v265, %v2471
        %vm2478 = vcmp.eq.s32.totalorder %v266, %v2471
        %vm2479 = vcmp.eq.s32.totalorder %v267, %v2471
        %vm2480 = vcmp.eq.s32.totalorder %v268, %v2471
        %vm2481 = vcmp.eq.s32.totalorder %v269, %v2471
        %vm2482 = vcmp.eq.s32.totalorder %v270, %v2471
        %vm2483 = vcmp.eq.s32.totalorder %v271, %v2471
        %vm2484 = vcmp.eq.s32.totalorder %v272, %v2471
        %vm2485 = vcmp.eq.s32.totalorder %v273, %v2471
        %vm2486 = vcmp.eq.s32.totalorder %v274, %v2471
        %vm2487 = vcmp.eq.s32.totalorder %v275, %v2471
        %v2488 = vsel %vm2472, %v563, 0.0
        %v2489 = vsel %vm2473, %v563, 0.0
        %v2490 = vsel %vm2474, %v563, 0.0
        %v2491 = vsel %vm2475, %v563, 0.0
        %v2492 = vsel %vm2476, %v563, 0.0
        %v2493 = vsel %vm2477, %v563, 0.0
        %v2494 = vsel %vm2478, %v563, 0.0
        %v2495 = vsel %vm2479, %v563, 0.0
        %v2496 = vsel %vm2480, %v563, 0.0
        %v2497 = vsel %vm2481, %v563, 0.0
        %v2498 = vsel %vm2482, %v563, 0.0
        %v2499 = vsel %vm2483, %v563, 0.0
        %v2500 = vsel %vm2484, %v563, 0.0
        %v2501 = vsel %vm2485, %v563, 0.0
        %v2502 = vsel %vm2486, %v563, 0.0
        %v2503 = vsel %vm2487, %v563, 0.0
        %v2504 = vadd.f32 %v2451, %v2488
        %v2505 = vadd.f32 %v2452, %v2489
        %v2506 = vadd.f32 %v2453, %v2490
        %v2507 = vadd.f32 %v2454, %v2491
        %v2508 = vadd.f32 %v2455, %v2492
        %v2509 = vadd.f32 %v2456, %v2493
        %v2510 = vadd.f32 %v2457, %v2494
        %v2511 = vadd.f32 %v2458, %v2495
        %v2512 = vadd.f32 %v2459, %v2496
        %v2513 = vadd.f32 %v2460, %v2497
        %v2514 = vadd.f32 %v2461, %v2498
        %v2515 = vadd.f32 %v2462, %v2499
        %v2516 = vadd.f32 %v2463, %v2500
        %v2517 = vadd.f32 %v2464, %v2501
        %v2518 = vadd.f32 %v2465, %v2502
        %v2519 = vadd.f32 %v2466, %v2503
        %v2520 = vsub.s32 %v253, 512
        %v2521 = vlaneseq
        %v2522 = vshrl.u32 %v2521, 7
        %v2523 = vsub.s32 0, %v2522
        %v2524 = vrot.slane %v2520, %v2523
        %vm2525 = vcmp.eq.s32.totalorder %v260, %v2524
        %vm2526 = vcmp.eq.s32.totalorder %v261, %v2524
        %vm2527 = vcmp.eq.s32.totalorder %v262, %v2524
        %vm2528 = vcmp.eq.s32.totalorder %v263, %v2524
        %vm2529 = vcmp.eq.s32.totalorder %v264, %v2524
        %vm2530 = vcmp.eq.s32.totalorder %v265, %v2524
        %vm2531 = vcmp.eq.s32.totalorder %v266, %v2524
        %vm2532 = vcmp.eq.s32.totalorder %v267, %v2524
        %vm2533 = vcmp.eq.s32.totalorder %v268, %v2524
        %vm2534 = vcmp.eq.s32.totalorder %v269, %v2524
        %vm2535 = vcmp.eq.s32.totalorder %v270, %v2524
        %vm2536 = vcmp.eq.s32.totalorder %v271, %v2524
        %vm2537 = vcmp.eq.s32.totalorder %v272, %v2524
        %vm2538 = vcmp.eq.s32.totalorder %v273, %v2524
        %vm2539 = vcmp.eq.s32.totalorder %v274, %v2524
        %vm2540 = vcmp.eq.s32.totalorder %v275, %v2524
        %v2541 = vsel %vm2525, %v619, 0.0
        %v2542 = vsel %vm2526, %v619, 0.0
        %v2543 = vsel %vm2527, %v619, 0.0
        %v2544 = vsel %vm2528, %v619, 0.0
        %v2545 = vsel %vm2529, %v619, 0.0
        %v2546 = vsel %vm2530, %v619, 0.0
        %v2547 = vsel %vm2531, %v619, 0.0
        %v2548 = vsel %vm2532, %v619, 0.0
        %v2549 = vsel %vm2533, %v619, 0.0
        %v2550 = vsel %vm2534, %v619, 0.0
        %v2551 = vsel %vm2535, %v619, 0.0
        %v2552 = vsel %vm2536, %v619, 0.0
        %v2553 = vsel %vm2537, %v619, 0.0
        %v2554 = vsel %vm2538, %v619, 0.0
        %v2555 = vsel %vm2539, %v619, 0.0
        %v2556 = vsel %vm2540, %v619, 0.0
        %v2557 = vadd.f32 %v2504, %v2541
        %v2558 = vadd.f32 %v2505, %v2542
        %v2559 = vadd.f32 %v2506, %v2543
        %v2560 = vadd.f32 %v2507, %v2544
        %v2561 = vadd.f32 %v2508, %v2545
        %v2562 = vadd.f32 %v2509, %v2546
        %v2563 = vadd.f32 %v2510, %v2547
        %v2564 = vadd.f32 %v2511, %v2548
        %v2565 = vadd.f32 %v2512, %v2549
        %v2566 = vadd.f32 %v2513, %v2550
        %v2567 = vadd.f32 %v2514, %v2551
        %v2568 = vadd.f32 %v2515, %v2552
        %v2569 = vadd.f32 %v2516, %v2553
        %v2570 = vadd.f32 %v2517, %v2554
        %v2571 = vadd.f32 %v2518, %v2555
        %v2572 = vadd.f32 %v2519, %v2556
        %v2573 = vsub.s32 %v257, 512
        %v2574 = vlaneseq
        %v2575 = vshrl.u32 %v2574, 7
        %v2576 = vsub.s32 0, %v2575
        %v2577 = vrot.slane %v2573, %v2576
        %vm2578 = vcmp.eq.s32.totalorder %v260, %v2577
        %vm2579 = vcmp.eq.s32.totalorder %v261, %v2577
        %vm2580 = vcmp.eq.s32.totalorder %v262, %v2577
        %vm2581 = vcmp.eq.s32.totalorder %v263, %v2577
        %vm2582 = vcmp.eq.s32.totalorder %v264, %v2577
        %vm2583 = vcmp.eq.s32.totalorder %v265, %v2577
        %vm2584 = vcmp.eq.s32.totalorder %v266, %v2577
        %vm2585 = vcmp.eq.s32.totalorder %v267, %v2577
        %vm2586 = vcmp.eq.s32.totalorder %v268, %v2577
        %vm2587 = vcmp.eq.s32.totalorder %v269, %v2577
        %vm2588 = vcmp.eq.s32.totalorder %v270, %v2577
        %vm2589 = vcmp.eq.s32.totalorder %v271, %v2577
        %vm2590 = vcmp.eq.s32.totalorder %v272, %v2577
        %vm2591 = vcmp.eq.s32.totalorder %v273, %v2577
        %vm2592 = vcmp.eq.s32.totalorder %v274, %v2577
        %vm2593 = vcmp.eq.s32.totalorder %v275, %v2577
        %v2594 = vsel %vm2578, %v675, 0.0
        %v2595 = vsel %vm2579, %v675, 0.0
        %v2596 = vsel %vm2580, %v675, 0.0
        %v2597 = vsel %vm2581, %v675, 0.0
        %v2598 = vsel %vm2582, %v675, 0.0
        %v2599 = vsel %vm2583, %v675, 0.0
        %v2600 = vsel %vm2584, %v675, 0.0
        %v2601 = vsel %vm2585, %v675, 0.0
        %v2602 = vsel %vm2586, %v675, 0.0
        %v2603 = vsel %vm2587, %v675, 0.0
        %v2604 = vsel %vm2588, %v675, 0.0
        %v2605 = vsel %vm2589, %v675, 0.0
        %v2606 = vsel %vm2590, %v675, 0.0
        %v2607 = vsel %vm2591, %v675, 0.0
        %v2608 = vsel %vm2592, %v675, 0.0
        %v2609 = vsel %vm2593, %v675, 0.0
        %v2610 = vadd.f32 %v2557, %v2594
        %v2611 = vadd.f32 %v2558, %v2595
        %v2612 = vadd.f32 %v2559, %v2596
        %v2613 = vadd.f32 %v2560, %v2597
        %v2614 = vadd.f32 %v2561, %v2598
        %v2615 = vadd.f32 %v2562, %v2599
        %v2616 = vadd.f32 %v2563, %v2600
        %v2617 = vadd.f32 %v2564, %v2601
        %v2618 = vadd.f32 %v2565, %v2602
        %v2619 = vadd.f32 %v2566, %v2603
        %v2620 = vadd.f32 %v2567, %v2604
        %v2621 = vadd.f32 %v2568, %v2605
        %v2622 = vadd.f32 %v2569, %v2606
        %v2623 = vadd.f32 %v2570, %v2607
        %v2624 = vadd.f32 %v2571, %v2608
        %v2625 = vadd.f32 %v2572, %v2609
        %v2626 = vld [vmem:[%s157 + $0x20] sm:$0xff]
        %2627 = vmatprep.subr.mxu0 0.0
        %2628 = vmatpush1.msra.mxu0 %v2610
        %2629 = vmatprep.subr.mxu0 0.0
        %2630 = vmatpush1.msra.mxu0 %v2611
        %2631 = vmatprep.subr.mxu0 0.0
        %2632 = vmatpush1.msra.mxu0 %v2612
        %2633 = vmatprep.subr.mxu0 0.0
        %2634 = vmatpush1.msra.mxu0 %v2613
        %2635 = vmatprep.subr.mxu0 0.0
        %2636 = vmatpush1.msra.mxu0 %v2614
        %2637 = vmatprep.subr.mxu0 0.0
        %2638 = vmatpush1.msra.mxu0 %v2615
        %2639 = vmatprep.subr.mxu0 0.0
        %2640 = vmatpush1.msra.mxu0 %v2616
        %2641 = vmatprep.subr.mxu0 0.0
        %2642 = vmatpush1.msra.mxu0 %v2617
        %2643 = vmatprep.subr.mxu0 0.0
        %2644 = vmatpush1.msra.mxu0 %v2618
        %2645 = vmatprep.subr.mxu0 0.0
        %2646 = vmatpush1.msra.mxu0 %v2619
        %2647 = vmatprep.subr.mxu0 0.0
        %2648 = vmatpush1.msra.mxu0 %v2620
        %2649 = vmatprep.subr.mxu0 0.0
        %2650 = vmatpush1.msra.mxu0 %v2621
        %2651 = vmatprep.subr.mxu0 0.0
        %2652 = vmatpush1.msra.mxu0 %v2622
        %2653 = vmatprep.subr.mxu0 0.0
        %2654 = vmatpush1.msra.mxu0 %v2623
        %2655 = vmatprep.subr.mxu0 0.0
        %2656 = vmatpush1.msra.mxu0 %v2624
        %2657 = vmatprep.subr.mxu0 0.0
        %2658 = vmatpush1.msra.mxu0 %v2625
        %2659 = vmatprep.subr.mxu0 0.0
        %2660 = vmatpush1.msra.mxu0 0.0
        %2661 = vmatprep.subr.mxu0 0.0
        %2662 = vmatpush1.msra.mxu0 0.0
        %2663 = vmatprep.subr.mxu0 0.0
        %2664 = vmatpush1.msra.mxu0 0.0
        %2665 = vmatprep.subr.mxu0 0.0
        %2666 = vmatpush1.msra.mxu0 0.0
        %2667 = vmatprep.subr.mxu0 0.0
        %2668 = vmatpush1.msra.mxu0 0.0
        %2669 = vmatprep.subr.mxu0 0.0
        %2670 = vmatpush1.msra.mxu0 0.0
        %2671 = vmatprep.subr.mxu0 0.0
        %2672 = vmatpush1.msra.mxu0 0.0
        %2673 = vmatprep.subr.mxu0 0.0
        %2674 = vmatpush1.msra.mxu0 0.0
        %2675 = vmatprep.subr.mxu0 0.0
        %2676 = vmatpush1.msra.mxu0 0.0
        %2677 = vmatprep.subr.mxu0 0.0
        %2678 = vmatpush1.msra.mxu0 0.0
        %2679 = vmatprep.subr.mxu0 0.0
        %2680 = vmatpush1.msra.mxu0 0.0
        %2681 = vmatprep.subr.mxu0 0.0
        %2682 = vmatpush1.msra.mxu0 0.0
        %2683 = vmatprep.subr.mxu0 0.0
        %2684 = vmatpush1.msra.mxu0 0.0
        %2685 = vmatprep.subr.mxu0 0.0
        %2686 = vmatpush1.msra.mxu0 0.0
        %2687 = vmatprep.subr.mxu0 0.0
        %2688 = vmatpush1.msra.mxu0 0.0
        %2689 = vmatprep.subr.mxu0 0.0
        %2690 = vmatpush1.msra.mxu0 0.0
        %2691 = vmatprep.mubr.f32.mxu0 0.0
        %2692 = vmatmul.mubr.f32.gmra.mrb[0].mxu0 %v2626
        %v2693 = vpop.f32.mrb[0].mxu0
        %v2694 = vadd.f32 0.0, %v2693
        %v2695 = vpop.f32.mrb[0].mxu0
        %2696 = vdwg.mxu0
        %v2697 = vadd.f32 %v2217, %v2694
        %v2698 = vsub.s32 %v223, 640
        %v2699 = vlaneseq
        %v2700 = vshrl.u32 %v2699, 7
        %v2701 = vsub.s32 0, %v2700
        %v2702 = vrot.slane %v2698, %v2701
        %vm2703 = vcmp.eq.s32.totalorder %v260, %v2702
        %vm2704 = vcmp.eq.s32.totalorder %v261, %v2702
        %vm2705 = vcmp.eq.s32.totalorder %v262, %v2702
        %vm2706 = vcmp.eq.s32.totalorder %v263, %v2702
        %vm2707 = vcmp.eq.s32.totalorder %v264, %v2702
        %vm2708 = vcmp.eq.s32.totalorder %v265, %v2702
        %vm2709 = vcmp.eq.s32.totalorder %v266, %v2702
        %vm2710 = vcmp.eq.s32.totalorder %v267, %v2702
        %vm2711 = vcmp.eq.s32.totalorder %v268, %v2702
        %vm2712 = vcmp.eq.s32.totalorder %v269, %v2702
        %vm2713 = vcmp.eq.s32.totalorder %v270, %v2702
        %vm2714 = vcmp.eq.s32.totalorder %v271, %v2702
        %vm2715 = vcmp.eq.s32.totalorder %v272, %v2702
        %vm2716 = vcmp.eq.s32.totalorder %v273, %v2702
        %vm2717 = vcmp.eq.s32.totalorder %v274, %v2702
        %vm2718 = vcmp.eq.s32.totalorder %v275, %v2702
        %v2719 = vsel %vm2703, %v299, 0.0
        %v2720 = vsel %vm2704, %v299, 0.0
        %v2721 = vsel %vm2705, %v299, 0.0
        %v2722 = vsel %vm2706, %v299, 0.0
        %v2723 = vsel %vm2707, %v299, 0.0
        %v2724 = vsel %vm2708, %v299, 0.0
        %v2725 = vsel %vm2709, %v299, 0.0
        %v2726 = vsel %vm2710, %v299, 0.0
        %v2727 = vsel %vm2711, %v299, 0.0
        %v2728 = vsel %vm2712, %v299, 0.0
        %v2729 = vsel %vm2713, %v299, 0.0
        %v2730 = vsel %vm2714, %v299, 0.0
        %v2731 = vsel %vm2715, %v299, 0.0
        %v2732 = vsel %vm2716, %v299, 0.0
        %v2733 = vsel %vm2717, %v299, 0.0
        %v2734 = vsel %vm2718, %v299, 0.0
        %v2735 = vsub.s32 %v229, 640
        %v2736 = vlaneseq
        %v2737 = vshrl.u32 %v2736, 7
        %v2738 = vsub.s32 0, %v2737
        %v2739 = vrot.slane %v2735, %v2738
        %vm2740 = vcmp.eq.s32.totalorder %v260, %v2739
        %vm2741 = vcmp.eq.s32.totalorder %v261, %v2739
        %vm2742 = vcmp.eq.s32.totalorder %v262, %v2739
        %vm2743 = vcmp.eq.s32.totalorder %v263, %v2739
        %vm2744 = vcmp.eq.s32.totalorder %v264, %v2739
        %vm2745 = vcmp.eq.s32.totalorder %v265, %v2739
        %vm2746 = vcmp.eq.s32.totalorder %v266, %v2739
        %vm2747 = vcmp.eq.s32.totalorder %v267, %v2739
        %vm2748 = vcmp.eq.s32.totalorder %v268, %v2739
        %vm2749 = vcmp.eq.s32.totalorder %v269, %v2739
        %vm2750 = vcmp.eq.s32.totalorder %v270, %v2739
        %vm2751 = vcmp.eq.s32.totalorder %v271, %v2739
        %vm2752 = vcmp.eq.s32.totalorder %v272, %v2739
        %vm2753 = vcmp.eq.s32.totalorder %v273, %v2739
        %vm2754 = vcmp.eq.s32.totalorder %v274, %v2739
        %vm2755 = vcmp.eq.s32.totalorder %v275, %v2739
        %v2756 = vsel %vm2740, %v339, 0.0
        %v2757 = vsel %vm2741, %v339, 0.0
        %v2758 = vsel %vm2742, %v339, 0.0
        %v2759 = vsel %vm2743, %v339, 0.0
        %v2760 = vsel %vm2744, %v339, 0.0
        %v2761 = vsel %vm2745, %v339, 0.0
        %v2762 = vsel %vm2746, %v339, 0.0
        %v2763 = vsel %vm2747, %v339, 0.0
        %v2764 = vsel %vm2748, %v339, 0.0
        %v2765 = vsel %vm2749, %v339, 0.0
        %v2766 = vsel %vm2750, %v339, 0.0
        %v2767 = vsel %vm2751, %v339, 0.0
        %v2768 = vsel %vm2752, %v339, 0.0
        %v2769 = vsel %vm2753, %v339, 0.0
        %v2770 = vsel %vm2754, %v339, 0.0
        %v2771 = vsel %vm2755, %v339, 0.0
        %v2772 = vadd.f32 %v2719, %v2756
        %v2773 = vadd.f32 %v2720, %v2757
        %v2774 = vadd.f32 %v2721, %v2758
        %v2775 = vadd.f32 %v2722, %v2759
        %v2776 = vadd.f32 %v2723, %v2760
        %v2777 = vadd.f32 %v2724, %v2761
        %v2778 = vadd.f32 %v2725, %v2762
        %v2779 = vadd.f32 %v2726, %v2763
        %v2780 = vadd.f32 %v2727, %v2764
        %v2781 = vadd.f32 %v2728, %v2765
        %v2782 = vadd.f32 %v2729, %v2766
        %v2783 = vadd.f32 %v2730, %v2767
        %v2784 = vadd.f32 %v2731, %v2768
        %v2785 = vadd.f32 %v2732, %v2769
        %v2786 = vadd.f32 %v2733, %v2770
        %v2787 = vadd.f32 %v2734, %v2771
        %v2788 = vsub.s32 %v235, 640
        %v2789 = vlaneseq
        %v2790 = vshrl.u32 %v2789, 7
        %v2791 = vsub.s32 0, %v2790
        %v2792 = vrot.slane %v2788, %v2791
        %vm2793 = vcmp.eq.s32.totalorder %v260, %v2792
        %vm2794 = vcmp.eq.s32.totalorder %v261, %v2792
        %vm2795 = vcmp.eq.s32.totalorder %v262, %v2792
        %vm2796 = vcmp.eq.s32.totalorder %v263, %v2792
        %vm2797 = vcmp.eq.s32.totalorder %v264, %v2792
        %vm2798 = vcmp.eq.s32.totalorder %v265, %v2792
        %vm2799 = vcmp.eq.s32.totalorder %v266, %v2792
        %vm2800 = vcmp.eq.s32.totalorder %v267, %v2792
        %vm2801 = vcmp.eq.s32.totalorder %v268, %v2792
        %vm2802 = vcmp.eq.s32.totalorder %v269, %v2792
        %vm2803 = vcmp.eq.s32.totalorder %v270, %v2792
        %vm2804 = vcmp.eq.s32.totalorder %v271, %v2792
        %vm2805 = vcmp.eq.s32.totalorder %v272, %v2792
        %vm2806 = vcmp.eq.s32.totalorder %v273, %v2792
        %vm2807 = vcmp.eq.s32.totalorder %v274, %v2792
        %vm2808 = vcmp.eq.s32.totalorder %v275, %v2792
        %v2809 = vsel %vm2793, %v395, 0.0
        %v2810 = vsel %vm2794, %v395, 0.0
        %v2811 = vsel %vm2795, %v395, 0.0
        %v2812 = vsel %vm2796, %v395, 0.0
        %v2813 = vsel %vm2797, %v395, 0.0
        %v2814 = vsel %vm2798, %v395, 0.0
        %v2815 = vsel %vm2799, %v395, 0.0
        %v2816 = vsel %vm2800, %v395, 0.0
        %v2817 = vsel %vm2801, %v395, 0.0
        %v2818 = vsel %vm2802, %v395, 0.0
        %v2819 = vsel %vm2803, %v395, 0.0
        %v2820 = vsel %vm2804, %v395, 0.0
        %v2821 = vsel %vm2805, %v395, 0.0
        %v2822 = vsel %vm2806, %v395, 0.0
        %v2823 = vsel %vm2807, %v395, 0.0
        %v2824 = vsel %vm2808, %v395, 0.0
        %v2825 = vadd.f32 %v2772, %v2809
        %v2826 = vadd.f32 %v2773, %v2810
        %v2827 = vadd.f32 %v2774, %v2811
        %v2828 = vadd.f32 %v2775, %v2812
        %v2829 = vadd.f32 %v2776, %v2813
        %v2830 = vadd.f32 %v2777, %v2814
        %v2831 = vadd.f32 %v2778, %v2815
        %v2832 = vadd.f32 %v2779, %v2816
        %v2833 = vadd.f32 %v2780, %v2817
        %v2834 = vadd.f32 %v2781, %v2818
        %v2835 = vadd.f32 %v2782, %v2819
        %v2836 = vadd.f32 %v2783, %v2820
        %v2837 = vadd.f32 %v2784, %v2821
        %v2838 = vadd.f32 %v2785, %v2822
        %v2839 = vadd.f32 %v2786, %v2823
        %v2840 = vadd.f32 %v2787, %v2824
        %v2841 = vsub.s32 %v239, 640
        %v2842 = vlaneseq
        %v2843 = vshrl.u32 %v2842, 7
        %v2844 = vsub.s32 0, %v2843
        %v2845 = vrot.slane %v2841, %v2844
        %vm2846 = vcmp.eq.s32.totalorder %v260, %v2845
        %vm2847 = vcmp.eq.s32.totalorder %v261, %v2845
        %vm2848 = vcmp.eq.s32.totalorder %v262, %v2845
        %vm2849 = vcmp.eq.s32.totalorder %v263, %v2845
        %vm2850 = vcmp.eq.s32.totalorder %v264, %v2845
        %vm2851 = vcmp.eq.s32.totalorder %v265, %v2845
        %vm2852 = vcmp.eq.s32.totalorder %v266, %v2845
        %vm2853 = vcmp.eq.s32.totalorder %v267, %v2845
        %vm2854 = vcmp.eq.s32.totalorder %v268, %v2845
        %vm2855 = vcmp.eq.s32.totalorder %v269, %v2845
        %vm2856 = vcmp.eq.s32.totalorder %v270, %v2845
        %vm2857 = vcmp.eq.s32.totalorder %v271, %v2845
        %vm2858 = vcmp.eq.s32.totalorder %v272, %v2845
        %vm2859 = vcmp.eq.s32.totalorder %v273, %v2845
        %vm2860 = vcmp.eq.s32.totalorder %v274, %v2845
        %vm2861 = vcmp.eq.s32.totalorder %v275, %v2845
        %v2862 = vsel %vm2846, %v451, 0.0
        %v2863 = vsel %vm2847, %v451, 0.0
        %v2864 = vsel %vm2848, %v451, 0.0
        %v2865 = vsel %vm2849, %v451, 0.0
        %v2866 = vsel %vm2850, %v451, 0.0
        %v2867 = vsel %vm2851, %v451, 0.0
        %v2868 = vsel %vm2852, %v451, 0.0
        %v2869 = vsel %vm2853, %v451, 0.0
        %v2870 = vsel %vm2854, %v451, 0.0
        %v2871 = vsel %vm2855, %v451, 0.0
        %v2872 = vsel %vm2856, %v451, 0.0
        %v2873 = vsel %vm2857, %v451, 0.0
        %v2874 = vsel %vm2858, %v451, 0.0
        %v2875 = vsel %vm2859, %v451, 0.0
        %v2876 = vsel %vm2860, %v451, 0.0
        %v2877 = vsel %vm2861, %v451, 0.0
        %v2878 = vadd.f32 %v2825, %v2862
        %v2879 = vadd.f32 %v2826, %v2863
        %v2880 = vadd.f32 %v2827, %v2864
        %v2881 = vadd.f32 %v2828, %v2865
        %v2882 = vadd.f32 %v2829, %v2866
        %v2883 = vadd.f32 %v2830, %v2867
        %v2884 = vadd.f32 %v2831, %v2868
        %v2885 = vadd.f32 %v2832, %v2869
        %v2886 = vadd.f32 %v2833, %v2870
        %v2887 = vadd.f32 %v2834, %v2871
        %v2888 = vadd.f32 %v2835, %v2872
        %v2889 = vadd.f32 %v2836, %v2873
        %v2890 = vadd.f32 %v2837, %v2874
        %v2891 = vadd.f32 %v2838, %v2875
        %v2892 = vadd.f32 %v2839, %v2876
        %v2893 = vadd.f32 %v2840, %v2877
        %v2894 = vsub.s32 %v245, 640
        %v2895 = vlaneseq
        %v2896 = vshrl.u32 %v2895, 7
        %v2897 = vsub.s32 0, %v2896
        %v2898 = vrot.slane %v2894, %v2897
        %vm2899 = vcmp.eq.s32.totalorder %v260, %v2898
        %vm2900 = vcmp.eq.s32.totalorder %v261, %v2898
        %vm2901 = vcmp.eq.s32.totalorder %v262, %v2898
        %vm2902 = vcmp.eq.s32.totalorder %v263, %v2898
        %vm2903 = vcmp.eq.s32.totalorder %v264, %v2898
        %vm2904 = vcmp.eq.s32.totalorder %v265, %v2898
        %vm2905 = vcmp.eq.s32.totalorder %v266, %v2898
        %vm2906 = vcmp.eq.s32.totalorder %v267, %v2898
        %vm2907 = vcmp.eq.s32.totalorder %v268, %v2898
        %vm2908 = vcmp.eq.s32.totalorder %v269, %v2898
        %vm2909 = vcmp.eq.s32.totalorder %v270, %v2898
        %vm2910 = vcmp.eq.s32.totalorder %v271, %v2898
        %vm2911 = vcmp.eq.s32.totalorder %v272, %v2898
        %vm2912 = vcmp.eq.s32.totalorder %v273, %v2898
        %vm2913 = vcmp.eq.s32.totalorder %v274, %v2898
        %vm2914 = vcmp.eq.s32.totalorder %v275, %v2898
        %v2915 = vsel %vm2899, %v507, 0.0
        %v2916 = vsel %vm2900, %v507, 0.0
        %v2917 = vsel %vm2901, %v507, 0.0
        %v2918 = vsel %vm2902, %v507, 0.0
        %v2919 = vsel %vm2903, %v507, 0.0
        %v2920 = vsel %vm2904, %v507, 0.0
        %v2921 = vsel %vm2905, %v507, 0.0
        %v2922 = vsel %vm2906, %v507, 0.0
        %v2923 = vsel %vm2907, %v507, 0.0
        %v2924 = vsel %vm2908, %v507, 0.0
        %v2925 = vsel %vm2909, %v507, 0.0
        %v2926 = vsel %vm2910, %v507, 0.0
        %v2927 = vsel %vm2911, %v507, 0.0
        %v2928 = vsel %vm2912, %v507, 0.0
        %v2929 = vsel %vm2913, %v507, 0.0
        %v2930 = vsel %vm2914, %v507, 0.0
        %v2931 = vadd.f32 %v2878, %v2915
        %v2932 = vadd.f32 %v2879, %v2916
        %v2933 = vadd.f32 %v2880, %v2917
        %v2934 = vadd.f32 %v2881, %v2918
        %v2935 = vadd.f32 %v2882, %v2919
        %v2936 = vadd.f32 %v2883, %v2920
        %v2937 = vadd.f32 %v2884, %v2921
        %v2938 = vadd.f32 %v2885, %v2922
        %v2939 = vadd.f32 %v2886, %v2923
        %v2940 = vadd.f32 %v2887, %v2924
        %v2941 = vadd.f32 %v2888, %v2925
        %v2942 = vadd.f32 %v2889, %v2926
        %v2943 = vadd.f32 %v2890, %v2927
        %v2944 = vadd.f32 %v2891, %v2928
        %v2945 = vadd.f32 %v2892, %v2929
        %v2946 = vadd.f32 %v2893, %v2930
        %v2947 = vsub.s32 %v249, 640
        %v2948 = vlaneseq
        %v2949 = vshrl.u32 %v2948, 7
        %v2950 = vsub.s32 0, %v2949
        %v2951 = vrot.slane %v2947, %v2950
        %vm2952 = vcmp.eq.s32.totalorder %v260, %v2951
        %vm2953 = vcmp.eq.s32.totalorder %v261, %v2951
        %vm2954 = vcmp.eq.s32.totalorder %v262, %v2951
        %vm2955 = vcmp.eq.s32.totalorder %v263, %v2951
        %vm2956 = vcmp.eq.s32.totalorder %v264, %v2951
        %vm2957 = vcmp.eq.s32.totalorder %v265, %v2951
        %vm2958 = vcmp.eq.s32.totalorder %v266, %v2951
        %vm2959 = vcmp.eq.s32.totalorder %v267, %v2951
        %vm2960 = vcmp.eq.s32.totalorder %v268, %v2951
        %vm2961 = vcmp.eq.s32.totalorder %v269, %v2951
        %vm2962 = vcmp.eq.s32.totalorder %v270, %v2951
        %vm2963 = vcmp.eq.s32.totalorder %v271, %v2951
        %vm2964 = vcmp.eq.s32.totalorder %v272, %v2951
        %vm2965 = vcmp.eq.s32.totalorder %v273, %v2951
        %vm2966 = vcmp.eq.s32.totalorder %v274, %v2951
        %vm2967 = vcmp.eq.s32.totalorder %v275, %v2951
        %v2968 = vsel %vm2952, %v563, 0.0
        %v2969 = vsel %vm2953, %v563, 0.0
        %v2970 = vsel %vm2954, %v563, 0.0
        %v2971 = vsel %vm2955, %v563, 0.0
        %v2972 = vsel %vm2956, %v563, 0.0
        %v2973 = vsel %vm2957, %v563, 0.0
        %v2974 = vsel %vm2958, %v563, 0.0
        %v2975 = vsel %vm2959, %v563, 0.0
        %v2976 = vsel %vm2960, %v563, 0.0
        %v2977 = vsel %vm2961, %v563, 0.0
        %v2978 = vsel %vm2962, %v563, 0.0
        %v2979 = vsel %vm2963, %v563, 0.0
        %v2980 = vsel %vm2964, %v563, 0.0
        %v2981 = vsel %vm2965, %v563, 0.0
        %v2982 = vsel %vm2966, %v563, 0.0
        %v2983 = vsel %vm2967, %v563, 0.0
        %v2984 = vadd.f32 %v2931, %v2968
        %v2985 = vadd.f32 %v2932, %v2969
        %v2986 = vadd.f32 %v2933, %v2970
        %v2987 = vadd.f32 %v2934, %v2971
        %v2988 = vadd.f32 %v2935, %v2972
        %v2989 = vadd.f32 %v2936, %v2973
        %v2990 = vadd.f32 %v2937, %v2974
        %v2991 = vadd.f32 %v2938, %v2975
        %v2992 = vadd.f32 %v2939, %v2976
        %v2993 = vadd.f32 %v2940, %v2977
        %v2994 = vadd.f32 %v2941, %v2978
        %v2995 = vadd.f32 %v2942, %v2979
        %v2996 = vadd.f32 %v2943, %v2980
        %v2997 = vadd.f32 %v2944, %v2981
        %v2998 = vadd.f32 %v2945, %v2982
        %v2999 = vadd.f32 %v2946, %v2983
        %v3000 = vsub.s32 %v253, 640
        %v3001 = vlaneseq
        %v3002 = vshrl.u32 %v3001, 7
        %v3003 = vsub.s32 0, %v3002
        %v3004 = vrot.slane %v3000, %v3003
        %vm3005 = vcmp.eq.s32.totalorder %v260, %v3004
        %vm3006 = vcmp.eq.s32.totalorder %v261, %v3004
        %vm3007 = vcmp.eq.s32.totalorder %v262, %v3004
        %vm3008 = vcmp.eq.s32.totalorder %v263, %v3004
        %vm3009 = vcmp.eq.s32.totalorder %v264, %v3004
        %vm3010 = vcmp.eq.s32.totalorder %v265, %v3004
        %vm3011 = vcmp.eq.s32.totalorder %v266, %v3004
        %vm3012 = vcmp.eq.s32.totalorder %v267, %v3004
        %vm3013 = vcmp.eq.s32.totalorder %v268, %v3004
        %vm3014 = vcmp.eq.s32.totalorder %v269, %v3004
        %vm3015 = vcmp.eq.s32.totalorder %v270, %v3004
        %vm3016 = vcmp.eq.s32.totalorder %v271, %v3004
        %vm3017 = vcmp.eq.s32.totalorder %v272, %v3004
        %vm3018 = vcmp.eq.s32.totalorder %v273, %v3004
        %vm3019 = vcmp.eq.s32.totalorder %v274, %v3004
        %vm3020 = vcmp.eq.s32.totalorder %v275, %v3004
        %v3021 = vsel %vm3005, %v619, 0.0
        %v3022 = vsel %vm3006, %v619, 0.0
        %v3023 = vsel %vm3007, %v619, 0.0
        %v3024 = vsel %vm3008, %v619, 0.0
        %v3025 = vsel %vm3009, %v619, 0.0
        %v3026 = vsel %vm3010, %v619, 0.0
        %v3027 = vsel %vm3011, %v619, 0.0
        %v3028 = vsel %vm3012, %v619, 0.0
        %v3029 = vsel %vm3013, %v619, 0.0
        %v3030 = vsel %vm3014, %v619, 0.0
        %v3031 = vsel %vm3015, %v619, 0.0
        %v3032 = vsel %vm3016, %v619, 0.0
        %v3033 = vsel %vm3017, %v619, 0.0
        %v3034 = vsel %vm3018, %v619, 0.0
        %v3035 = vsel %vm3019, %v619, 0.0
        %v3036 = vsel %vm3020, %v619, 0.0
        %v3037 = vadd.f32 %v2984, %v3021
        %v3038 = vadd.f32 %v2985, %v3022
        %v3039 = vadd.f32 %v2986, %v3023
        %v3040 = vadd.f32 %v2987, %v3024
        %v3041 = vadd.f32 %v2988, %v3025
        %v3042 = vadd.f32 %v2989, %v3026
        %v3043 = vadd.f32 %v2990, %v3027
        %v3044 = vadd.f32 %v2991, %v3028
        %v3045 = vadd.f32 %v2992, %v3029
        %v3046 = vadd.f32 %v2993, %v3030
        %v3047 = vadd.f32 %v2994, %v3031
        %v3048 = vadd.f32 %v2995, %v3032
        %v3049 = vadd.f32 %v2996, %v3033
        %v3050 = vadd.f32 %v2997, %v3034
        %v3051 = vadd.f32 %v2998, %v3035
        %v3052 = vadd.f32 %v2999, %v3036
        %v3053 = vsub.s32 %v257, 640
        %v3054 = vlaneseq
        %v3055 = vshrl.u32 %v3054, 7
        %v3056 = vsub.s32 0, %v3055
        %v3057 = vrot.slane %v3053, %v3056
        %vm3058 = vcmp.eq.s32.totalorder %v260, %v3057
        %vm3059 = vcmp.eq.s32.totalorder %v261, %v3057
        %vm3060 = vcmp.eq.s32.totalorder %v262, %v3057
        %vm3061 = vcmp.eq.s32.totalorder %v263, %v3057
        %vm3062 = vcmp.eq.s32.totalorder %v264, %v3057
        %vm3063 = vcmp.eq.s32.totalorder %v265, %v3057
        %vm3064 = vcmp.eq.s32.totalorder %v266, %v3057
        %vm3065 = vcmp.eq.s32.totalorder %v267, %v3057
        %vm3066 = vcmp.eq.s32.totalorder %v268, %v3057
        %vm3067 = vcmp.eq.s32.totalorder %v269, %v3057
        %vm3068 = vcmp.eq.s32.totalorder %v270, %v3057
        %vm3069 = vcmp.eq.s32.totalorder %v271, %v3057
        %vm3070 = vcmp.eq.s32.totalorder %v272, %v3057
        %vm3071 = vcmp.eq.s32.totalorder %v273, %v3057
        %vm3072 = vcmp.eq.s32.totalorder %v274, %v3057
        %vm3073 = vcmp.eq.s32.totalorder %v275, %v3057
        %v3074 = vsel %vm3058, %v675, 0.0
        %v3075 = vsel %vm3059, %v675, 0.0
        %v3076 = vsel %vm3060, %v675, 0.0
        %v3077 = vsel %vm3061, %v675, 0.0
        %v3078 = vsel %vm3062, %v675, 0.0
        %v3079 = vsel %vm3063, %v675, 0.0
        %v3080 = vsel %vm3064, %v675, 0.0
        %v3081 = vsel %vm3065, %v675, 0.0
        %v3082 = vsel %vm3066, %v675, 0.0
        %v3083 = vsel %vm3067, %v675, 0.0
        %v3084 = vsel %vm3068, %v675, 0.0
        %v3085 = vsel %vm3069, %v675, 0.0
        %v3086 = vsel %vm3070, %v675, 0.0
        %v3087 = vsel %vm3071, %v675, 0.0
        %v3088 = vsel %vm3072, %v675, 0.0
        %v3089 = vsel %vm3073, %v675, 0.0
        %v3090 = vadd.f32 %v3037, %v3074
        %v3091 = vadd.f32 %v3038, %v3075
        %v3092 = vadd.f32 %v3039, %v3076
        %v3093 = vadd.f32 %v3040, %v3077
        %v3094 = vadd.f32 %v3041, %v3078
        %v3095 = vadd.f32 %v3042, %v3079
        %v3096 = vadd.f32 %v3043, %v3080
        %v3097 = vadd.f32 %v3044, %v3081
        %v3098 = vadd.f32 %v3045, %v3082
        %v3099 = vadd.f32 %v3046, %v3083
        %v3100 = vadd.f32 %v3047, %v3084
        %v3101 = vadd.f32 %v3048, %v3085
        %v3102 = vadd.f32 %v3049, %v3086
        %v3103 = vadd.f32 %v3050, %v3087
        %v3104 = vadd.f32 %v3051, %v3088
        %v3105 = vadd.f32 %v3052, %v3089
        %v3106 = vld [vmem:[%s157 + $0x28] sm:$0xff]
        %3107 = vmatprep.subr.mxu0 0.0
        %3108 = vmatpush1.msra.mxu0 %v3090
        %3109 = vmatprep.subr.mxu0 0.0
        %3110 = vmatpush1.msra.mxu0 %v3091
        %3111 = vmatprep.subr.mxu0 0.0
        %3112 = vmatpush1.msra.mxu0 %v3092
        %3113 = vmatprep.subr.mxu0 0.0
        %3114 = vmatpush1.msra.mxu0 %v3093
        %3115 = vmatprep.subr.mxu0 0.0
        %3116 = vmatpush1.msra.mxu0 %v3094
        %3117 = vmatprep.subr.mxu0 0.0
        %3118 = vmatpush1.msra.mxu0 %v3095
        %3119 = vmatprep.subr.mxu0 0.0
        %3120 = vmatpush1.msra.mxu0 %v3096
        %3121 = vmatprep.subr.mxu0 0.0
        %3122 = vmatpush1.msra.mxu0 %v3097
        %3123 = vmatprep.subr.mxu0 0.0
        %3124 = vmatpush1.msra.mxu0 %v3098
        %3125 = vmatprep.subr.mxu0 0.0
        %3126 = vmatpush1.msra.mxu0 %v3099
        %3127 = vmatprep.subr.mxu0 0.0
        %3128 = vmatpush1.msra.mxu0 %v3100
        %3129 = vmatprep.subr.mxu0 0.0
        %3130 = vmatpush1.msra.mxu0 %v3101
        %3131 = vmatprep.subr.mxu0 0.0
        %3132 = vmatpush1.msra.mxu0 %v3102
        %3133 = vmatprep.subr.mxu0 0.0
        %3134 = vmatpush1.msra.mxu0 %v3103
        %3135 = vmatprep.subr.mxu0 0.0
        %3136 = vmatpush1.msra.mxu0 %v3104
        %3137 = vmatprep.subr.mxu0 0.0
        %3138 = vmatpush1.msra.mxu0 %v3105
        %3139 = vmatprep.subr.mxu0 0.0
        %3140 = vmatpush1.msra.mxu0 0.0
        %3141 = vmatprep.subr.mxu0 0.0
        %3142 = vmatpush1.msra.mxu0 0.0
        %3143 = vmatprep.subr.mxu0 0.0
        %3144 = vmatpush1.msra.mxu0 0.0
        %3145 = vmatprep.subr.mxu0 0.0
        %3146 = vmatpush1.msra.mxu0 0.0
        %3147 = vmatprep.subr.mxu0 0.0
        %3148 = vmatpush1.msra.mxu0 0.0
        %3149 = vmatprep.subr.mxu0 0.0
        %3150 = vmatpush1.msra.mxu0 0.0
        %3151 = vmatprep.subr.mxu0 0.0
        %3152 = vmatpush1.msra.mxu0 0.0
        %3153 = vmatprep.subr.mxu0 0.0
        %3154 = vmatpush1.msra.mxu0 0.0
        %3155 = vmatprep.subr.mxu0 0.0
        %3156 = vmatpush1.msra.mxu0 0.0
        %3157 = vmatprep.subr.mxu0 0.0
        %3158 = vmatpush1.msra.mxu0 0.0
        %3159 = vmatprep.subr.mxu0 0.0
        %3160 = vmatpush1.msra.mxu0 0.0
        %3161 = vmatprep.subr.mxu0 0.0
        %3162 = vmatpush1.msra.mxu0 0.0
        %3163 = vmatprep.subr.mxu0 0.0
        %3164 = vmatpush1.msra.mxu0 0.0
        %3165 = vmatprep.subr.mxu0 0.0
        %3166 = vmatpush1.msra.mxu0 0.0
        %3167 = vmatprep.subr.mxu0 0.0
        %3168 = vmatpush1.msra.mxu0 0.0
        %3169 = vmatprep.subr.mxu0 0.0
        %3170 = vmatpush1.msra.mxu0 0.0
        %3171 = vmatprep.mubr.f32.mxu0 0.0
        %3172 = vmatmul.mubr.f32.gmra.mrb[0].mxu0 %v3106
        %v3173 = vpop.f32.mrb[0].mxu0
        %v3174 = vadd.f32 0.0, %v3173
        %v3175 = vpop.f32.mrb[0].mxu0
        %3176 = vdwg.mxu0
        %v3177 = vadd.f32 %v2697, %v3174
        %v3178 = vsub.s32 %v223, 768
        %v3179 = vlaneseq
        %v3180 = vshrl.u32 %v3179, 7
        %v3181 = vsub.s32 0, %v3180
        %v3182 = vrot.slane %v3178, %v3181
        %vm3183 = vcmp.eq.s32.totalorder %v260, %v3182
        %vm3184 = vcmp.eq.s32.totalorder %v261, %v3182
        %vm3185 = vcmp.eq.s32.totalorder %v262, %v3182
        %vm3186 = vcmp.eq.s32.totalorder %v263, %v3182
        %vm3187 = vcmp.eq.s32.totalorder %v264, %v3182
        %vm3188 = vcmp.eq.s32.totalorder %v265, %v3182
        %vm3189 = vcmp.eq.s32.totalorder %v266, %v3182
        %vm3190 = vcmp.eq.s32.totalorder %v267, %v3182
        %vm3191 = vcmp.eq.s32.totalorder %v268, %v3182
        %vm3192 = vcmp.eq.s32.totalorder %v269, %v3182
        %vm3193 = vcmp.eq.s32.totalorder %v270, %v3182
        %vm3194 = vcmp.eq.s32.totalorder %v271, %v3182
        %vm3195 = vcmp.eq.s32.totalorder %v272, %v3182
        %vm3196 = vcmp.eq.s32.totalorder %v273, %v3182
        %vm3197 = vcmp.eq.s32.totalorder %v274, %v3182
        %vm3198 = vcmp.eq.s32.totalorder %v275, %v3182
        %v3199 = vsel %vm3183, %v299, 0.0
        %v3200 = vsel %vm3184, %v299, 0.0
        %v3201 = vsel %vm3185, %v299, 0.0
        %v3202 = vsel %vm3186, %v299, 0.0
        %v3203 = vsel %vm3187, %v299, 0.0
        %v3204 = vsel %vm3188, %v299, 0.0
        %v3205 = vsel %vm3189, %v299, 0.0
        %v3206 = vsel %vm3190, %v299, 0.0
        %v3207 = vsel %vm3191, %v299, 0.0
        %v3208 = vsel %vm3192, %v299, 0.0
        %v3209 = vsel %vm3193, %v299, 0.0
        %v3210 = vsel %vm3194, %v299, 0.0
        %v3211 = vsel %vm3195, %v299, 0.0
        %v3212 = vsel %vm3196, %v299, 0.0
        %v3213 = vsel %vm3197, %v299, 0.0
        %v3214 = vsel %vm3198, %v299, 0.0
        %v3215 = vsub.s32 %v229, 768
        %v3216 = vlaneseq
        %v3217 = vshrl.u32 %v3216, 7
        %v3218 = vsub.s32 0, %v3217
        %v3219 = vrot.slane %v3215, %v3218
        %vm3220 = vcmp.eq.s32.totalorder %v260, %v3219
        %vm3221 = vcmp.eq.s32.totalorder %v261, %v3219
        %vm3222 = vcmp.eq.s32.totalorder %v262, %v3219
        %vm3223 = vcmp.eq.s32.totalorder %v263, %v3219
        %vm3224 = vcmp.eq.s32.totalorder %v264, %v3219
        %vm3225 = vcmp.eq.s32.totalorder %v265, %v3219
        %vm3226 = vcmp.eq.s32.totalorder %v266, %v3219
        %vm3227 = vcmp.eq.s32.totalorder %v267, %v3219
        %vm3228 = vcmp.eq.s32.totalorder %v268, %v3219
        %vm3229 = vcmp.eq.s32.totalorder %v269, %v3219
        %vm3230 = vcmp.eq.s32.totalorder %v270, %v3219
        %vm3231 = vcmp.eq.s32.totalorder %v271, %v3219
        %vm3232 = vcmp.eq.s32.totalorder %v272, %v3219
        %vm3233 = vcmp.eq.s32.totalorder %v273, %v3219
        %vm3234 = vcmp.eq.s32.totalorder %v274, %v3219
        %vm3235 = vcmp.eq.s32.totalorder %v275, %v3219
        %v3236 = vsel %vm3220, %v339, 0.0
        %v3237 = vsel %vm3221, %v339, 0.0
        %v3238 = vsel %vm3222, %v339, 0.0
        %v3239 = vsel %vm3223, %v339, 0.0
        %v3240 = vsel %vm3224, %v339, 0.0
        %v3241 = vsel %vm3225, %v339, 0.0
        %v3242 = vsel %vm3226, %v339, 0.0
        %v3243 = vsel %vm3227, %v339, 0.0
        %v3244 = vsel %vm3228, %v339, 0.0
        %v3245 = vsel %vm3229, %v339, 0.0
        %v3246 = vsel %vm3230, %v339, 0.0
        %v3247 = vsel %vm3231, %v339, 0.0
        %v3248 = vsel %vm3232, %v339, 0.0
        %v3249 = vsel %vm3233, %v339, 0.0
        %v3250 = vsel %vm3234, %v339, 0.0
        %v3251 = vsel %vm3235, %v339, 0.0
        %v3252 = vadd.f32 %v3199, %v3236
        %v3253 = vadd.f32 %v3200, %v3237
        %v3254 = vadd.f32 %v3201, %v3238
        %v3255 = vadd.f32 %v3202, %v3239
        %v3256 = vadd.f32 %v3203, %v3240
        %v3257 = vadd.f32 %v3204, %v3241
        %v3258 = vadd.f32 %v3205, %v3242
        %v3259 = vadd.f32 %v3206, %v3243
        %v3260 = vadd.f32 %v3207, %v3244
        %v3261 = vadd.f32 %v3208, %v3245
        %v3262 = vadd.f32 %v3209, %v3246
        %v3263 = vadd.f32 %v3210, %v3247
        %v3264 = vadd.f32 %v3211, %v3248
        %v3265 = vadd.f32 %v3212, %v3249
        %v3266 = vadd.f32 %v3213, %v3250
        %v3267 = vadd.f32 %v3214, %v3251
        %v3268 = vsub.s32 %v235, 768
        %v3269 = vlaneseq
        %v3270 = vshrl.u32 %v3269, 7
        %v3271 = vsub.s32 0, %v3270
        %v3272 = vrot.slane %v3268, %v3271
        %vm3273 = vcmp.eq.s32.totalorder %v260, %v3272
        %vm3274 = vcmp.eq.s32.totalorder %v261, %v3272
        %vm3275 = vcmp.eq.s32.totalorder %v262, %v3272
        %vm3276 = vcmp.eq.s32.totalorder %v263, %v3272
        %vm3277 = vcmp.eq.s32.totalorder %v264, %v3272
        %vm3278 = vcmp.eq.s32.totalorder %v265, %v3272
        %vm3279 = vcmp.eq.s32.totalorder %v266, %v3272
        %vm3280 = vcmp.eq.s32.totalorder %v267, %v3272
        %vm3281 = vcmp.eq.s32.totalorder %v268, %v3272
        %vm3282 = vcmp.eq.s32.totalorder %v269, %v3272
        %vm3283 = vcmp.eq.s32.totalorder %v270, %v3272
        %vm3284 = vcmp.eq.s32.totalorder %v271, %v3272
        %vm3285 = vcmp.eq.s32.totalorder %v272, %v3272
        %vm3286 = vcmp.eq.s32.totalorder %v273, %v3272
        %vm3287 = vcmp.eq.s32.totalorder %v274, %v3272
        %vm3288 = vcmp.eq.s32.totalorder %v275, %v3272
        %v3289 = vsel %vm3273, %v395, 0.0
        %v3290 = vsel %vm3274, %v395, 0.0
        %v3291 = vsel %vm3275, %v395, 0.0
        %v3292 = vsel %vm3276, %v395, 0.0
        %v3293 = vsel %vm3277, %v395, 0.0
        %v3294 = vsel %vm3278, %v395, 0.0
        %v3295 = vsel %vm3279, %v395, 0.0
        %v3296 = vsel %vm3280, %v395, 0.0
        %v3297 = vsel %vm3281, %v395, 0.0
        %v3298 = vsel %vm3282, %v395, 0.0
        %v3299 = vsel %vm3283, %v395, 0.0
        %v3300 = vsel %vm3284, %v395, 0.0
        %v3301 = vsel %vm3285, %v395, 0.0
        %v3302 = vsel %vm3286, %v395, 0.0
        %v3303 = vsel %vm3287, %v395, 0.0
        %v3304 = vsel %vm3288, %v395, 0.0
        %v3305 = vadd.f32 %v3252, %v3289
        %v3306 = vadd.f32 %v3253, %v3290
        %v3307 = vadd.f32 %v3254, %v3291
        %v3308 = vadd.f32 %v3255, %v3292
        %v3309 = vadd.f32 %v3256, %v3293
        %v3310 = vadd.f32 %v3257, %v3294
        %v3311 = vadd.f32 %v3258, %v3295
        %v3312 = vadd.f32 %v3259, %v3296
        %v3313 = vadd.f32 %v3260, %v3297
        %v3314 = vadd.f32 %v3261, %v3298
        %v3315 = vadd.f32 %v3262, %v3299
        %v3316 = vadd.f32 %v3263, %v3300
        %v3317 = vadd.f32 %v3264, %v3301
        %v3318 = vadd.f32 %v3265, %v3302
        %v3319 = vadd.f32 %v3266, %v3303
        %v3320 = vadd.f32 %v3267, %v3304
        %v3321 = vsub.s32 %v239, 768
        %v3322 = vlaneseq
        %v3323 = vshrl.u32 %v3322, 7
        %v3324 = vsub.s32 0, %v3323
        %v3325 = vrot.slane %v3321, %v3324
        %vm3326 = vcmp.eq.s32.totalorder %v260, %v3325
        %vm3327 = vcmp.eq.s32.totalorder %v261, %v3325
        %vm3328 = vcmp.eq.s32.totalorder %v262, %v3325
        %vm3329 = vcmp.eq.s32.totalorder %v263, %v3325
        %vm3330 = vcmp.eq.s32.totalorder %v264, %v3325
        %vm3331 = vcmp.eq.s32.totalorder %v265, %v3325
        %vm3332 = vcmp.eq.s32.totalorder %v266, %v3325
        %vm3333 = vcmp.eq.s32.totalorder %v267, %v3325
        %vm3334 = vcmp.eq.s32.totalorder %v268, %v3325
        %vm3335 = vcmp.eq.s32.totalorder %v269, %v3325
        %vm3336 = vcmp.eq.s32.totalorder %v270, %v3325
        %vm3337 = vcmp.eq.s32.totalorder %v271, %v3325
        %vm3338 = vcmp.eq.s32.totalorder %v272, %v3325
        %vm3339 = vcmp.eq.s32.totalorder %v273, %v3325
        %vm3340 = vcmp.eq.s32.totalorder %v274, %v3325
        %vm3341 = vcmp.eq.s32.totalorder %v275, %v3325
        %v3342 = vsel %vm3326, %v451, 0.0
        %v3343 = vsel %vm3327, %v451, 0.0
        %v3344 = vsel %vm3328, %v451, 0.0
        %v3345 = vsel %vm3329, %v451, 0.0
        %v3346 = vsel %vm3330, %v451, 0.0
        %v3347 = vsel %vm3331, %v451, 0.0
        %v3348 = vsel %vm3332, %v451, 0.0
        %v3349 = vsel %vm3333, %v451, 0.0
        %v3350 = vsel %vm3334, %v451, 0.0
        %v3351 = vsel %vm3335, %v451, 0.0
        %v3352 = vsel %vm3336, %v451, 0.0
        %v3353 = vsel %vm3337, %v451, 0.0
        %v3354 = vsel %vm3338, %v451, 0.0
        %v3355 = vsel %vm3339, %v451, 0.0
        %v3356 = vsel %vm3340, %v451, 0.0
        %v3357 = vsel %vm3341, %v451, 0.0
        %v3358 = vadd.f32 %v3305, %v3342
        %v3359 = vadd.f32 %v3306, %v3343
        %v3360 = vadd.f32 %v3307, %v3344
        %v3361 = vadd.f32 %v3308, %v3345
        %v3362 = vadd.f32 %v3309, %v3346
        %v3363 = vadd.f32 %v3310, %v3347
        %v3364 = vadd.f32 %v3311, %v3348
        %v3365 = vadd.f32 %v3312, %v3349
        %v3366 = vadd.f32 %v3313, %v3350
        %v3367 = vadd.f32 %v3314, %v3351
        %v3368 = vadd.f32 %v3315, %v3352
        %v3369 = vadd.f32 %v3316, %v3353
        %v3370 = vadd.f32 %v3317, %v3354
        %v3371 = vadd.f32 %v3318, %v3355
        %v3372 = vadd.f32 %v3319, %v3356
        %v3373 = vadd.f32 %v3320, %v3357
        %v3374 = vsub.s32 %v245, 768
        %v3375 = vlaneseq
        %v3376 = vshrl.u32 %v3375, 7
        %v3377 = vsub.s32 0, %v3376
        %v3378 = vrot.slane %v3374, %v3377
        %vm3379 = vcmp.eq.s32.totalorder %v260, %v3378
        %vm3380 = vcmp.eq.s32.totalorder %v261, %v3378
        %vm3381 = vcmp.eq.s32.totalorder %v262, %v3378
        %vm3382 = vcmp.eq.s32.totalorder %v263, %v3378
        %vm3383 = vcmp.eq.s32.totalorder %v264, %v3378
        %vm3384 = vcmp.eq.s32.totalorder %v265, %v3378
        %vm3385 = vcmp.eq.s32.totalorder %v266, %v3378
        %vm3386 = vcmp.eq.s32.totalorder %v267, %v3378
        %vm3387 = vcmp.eq.s32.totalorder %v268, %v3378
        %vm3388 = vcmp.eq.s32.totalorder %v269, %v3378
        %vm3389 = vcmp.eq.s32.totalorder %v270, %v3378
        %vm3390 = vcmp.eq.s32.totalorder %v271, %v3378
        %vm3391 = vcmp.eq.s32.totalorder %v272, %v3378
        %vm3392 = vcmp.eq.s32.totalorder %v273, %v3378
        %vm3393 = vcmp.eq.s32.totalorder %v274, %v3378
        %vm3394 = vcmp.eq.s32.totalorder %v275, %v3378
        %v3395 = vsel %vm3379, %v507, 0.0
        %v3396 = vsel %vm3380, %v507, 0.0
        %v3397 = vsel %vm3381, %v507, 0.0
        %v3398 = vsel %vm3382, %v507, 0.0
        %v3399 = vsel %vm3383, %v507, 0.0
        %v3400 = vsel %vm3384, %v507, 0.0
        %v3401 = vsel %vm3385, %v507, 0.0
        %v3402 = vsel %vm3386, %v507, 0.0
        %v3403 = vsel %vm3387, %v507, 0.0
        %v3404 = vsel %vm3388, %v507, 0.0
        %v3405 = vsel %vm3389, %v507, 0.0
        %v3406 = vsel %vm3390, %v507, 0.0
        %v3407 = vsel %vm3391, %v507, 0.0
        %v3408 = vsel %vm3392, %v507, 0.0
        %v3409 = vsel %vm3393, %v507, 0.0
        %v3410 = vsel %vm3394, %v507, 0.0
        %v3411 = vadd.f32 %v3358, %v3395
        %v3412 = vadd.f32 %v3359, %v3396
        %v3413 = vadd.f32 %v3360, %v3397
        %v3414 = vadd.f32 %v3361, %v3398
        %v3415 = vadd.f32 %v3362, %v3399
        %v3416 = vadd.f32 %v3363, %v3400
        %v3417 = vadd.f32 %v3364, %v3401
        %v3418 = vadd.f32 %v3365, %v3402
        %v3419 = vadd.f32 %v3366, %v3403
        %v3420 = vadd.f32 %v3367, %v3404
        %v3421 = vadd.f32 %v3368, %v3405
        %v3422 = vadd.f32 %v3369, %v3406
        %v3423 = vadd.f32 %v3370, %v3407
        %v3424 = vadd.f32 %v3371, %v3408
        %v3425 = vadd.f32 %v3372, %v3409
        %v3426 = vadd.f32 %v3373, %v3410
        %v3427 = vsub.s32 %v249, 768
        %v3428 = vlaneseq
        %v3429 = vshrl.u32 %v3428, 7
        %v3430 = vsub.s32 0, %v3429
        %v3431 = vrot.slane %v3427, %v3430
        %vm3432 = vcmp.eq.s32.totalorder %v260, %v3431
        %vm3433 = vcmp.eq.s32.totalorder %v261, %v3431
        %vm3434 = vcmp.eq.s32.totalorder %v262, %v3431
        %vm3435 = vcmp.eq.s32.totalorder %v263, %v3431
        %vm3436 = vcmp.eq.s32.totalorder %v264, %v3431
        %vm3437 = vcmp.eq.s32.totalorder %v265, %v3431
        %vm3438 = vcmp.eq.s32.totalorder %v266, %v3431
        %vm3439 = vcmp.eq.s32.totalorder %v267, %v3431
        %vm3440 = vcmp.eq.s32.totalorder %v268, %v3431
        %vm3441 = vcmp.eq.s32.totalorder %v269, %v3431
        %vm3442 = vcmp.eq.s32.totalorder %v270, %v3431
        %vm3443 = vcmp.eq.s32.totalorder %v271, %v3431
        %vm3444 = vcmp.eq.s32.totalorder %v272, %v3431
        %vm3445 = vcmp.eq.s32.totalorder %v273, %v3431
        %vm3446 = vcmp.eq.s32.totalorder %v274, %v3431
        %vm3447 = vcmp.eq.s32.totalorder %v275, %v3431
        %v3448 = vsel %vm3432, %v563, 0.0
        %v3449 = vsel %vm3433, %v563, 0.0
        %v3450 = vsel %vm3434, %v563, 0.0
        %v3451 = vsel %vm3435, %v563, 0.0
        %v3452 = vsel %vm3436, %v563, 0.0
        %v3453 = vsel %vm3437, %v563, 0.0
        %v3454 = vsel %vm3438, %v563, 0.0
        %v3455 = vsel %vm3439, %v563, 0.0
        %v3456 = vsel %vm3440, %v563, 0.0
        %v3457 = vsel %vm3441, %v563, 0.0
        %v3458 = vsel %vm3442, %v563, 0.0
        %v3459 = vsel %vm3443, %v563, 0.0
        %v3460 = vsel %vm3444, %v563, 0.0
        %v3461 = vsel %vm3445, %v563, 0.0
        %v3462 = vsel %vm3446, %v563, 0.0
        %v3463 = vsel %vm3447, %v563, 0.0
        %v3464 = vadd.f32 %v3411, %v3448
        %v3465 = vadd.f32 %v3412, %v3449
        %v3466 = vadd.f32 %v3413, %v3450
        %v3467 = vadd.f32 %v3414, %v3451
        %v3468 = vadd.f32 %v3415, %v3452
        %v3469 = vadd.f32 %v3416, %v3453
        %v3470 = vadd.f32 %v3417, %v3454
        %v3471 = vadd.f32 %v3418, %v3455
        %v3472 = vadd.f32 %v3419, %v3456
        %v3473 = vadd.f32 %v3420, %v3457
        %v3474 = vadd.f32 %v3421, %v3458
        %v3475 = vadd.f32 %v3422, %v3459
        %v3476 = vadd.f32 %v3423, %v3460
        %v3477 = vadd.f32 %v3424, %v3461
        %v3478 = vadd.f32 %v3425, %v3462
        %v3479 = vadd.f32 %v3426, %v3463
        %v3480 = vsub.s32 %v253, 768
        %v3481 = vlaneseq
        %v3482 = vshrl.u32 %v3481, 7
        %v3483 = vsub.s32 0, %v3482
        %v3484 = vrot.slane %v3480, %v3483
        %vm3485 = vcmp.eq.s32.totalorder %v260, %v3484
        %vm3486 = vcmp.eq.s32.totalorder %v261, %v3484
        %vm3487 = vcmp.eq.s32.totalorder %v262, %v3484
        %vm3488 = vcmp.eq.s32.totalorder %v263, %v3484
        %vm3489 = vcmp.eq.s32.totalorder %v264, %v3484
        %vm3490 = vcmp.eq.s32.totalorder %v265, %v3484
        %vm3491 = vcmp.eq.s32.totalorder %v266, %v3484
        %vm3492 = vcmp.eq.s32.totalorder %v267, %v3484
        %vm3493 = vcmp.eq.s32.totalorder %v268, %v3484
        %vm3494 = vcmp.eq.s32.totalorder %v269, %v3484
        %vm3495 = vcmp.eq.s32.totalorder %v270, %v3484
        %vm3496 = vcmp.eq.s32.totalorder %v271, %v3484
        %vm3497 = vcmp.eq.s32.totalorder %v272, %v3484
        %vm3498 = vcmp.eq.s32.totalorder %v273, %v3484
        %vm3499 = vcmp.eq.s32.totalorder %v274, %v3484
        %vm3500 = vcmp.eq.s32.totalorder %v275, %v3484
        %v3501 = vsel %vm3485, %v619, 0.0
        %v3502 = vsel %vm3486, %v619, 0.0
        %v3503 = vsel %vm3487, %v619, 0.0
        %v3504 = vsel %vm3488, %v619, 0.0
        %v3505 = vsel %vm3489, %v619, 0.0
        %v3506 = vsel %vm3490, %v619, 0.0
        %v3507 = vsel %vm3491, %v619, 0.0
        %v3508 = vsel %vm3492, %v619, 0.0
        %v3509 = vsel %vm3493, %v619, 0.0
        %v3510 = vsel %vm3494, %v619, 0.0
        %v3511 = vsel %vm3495, %v619, 0.0
        %v3512 = vsel %vm3496, %v619, 0.0
        %v3513 = vsel %vm3497, %v619, 0.0
        %v3514 = vsel %vm3498, %v619, 0.0
        %v3515 = vsel %vm3499, %v619, 0.0
        %v3516 = vsel %vm3500, %v619, 0.0
        %v3517 = vadd.f32 %v3464, %v3501
        %v3518 = vadd.f32 %v3465, %v3502
        %v3519 = vadd.f32 %v3466, %v3503
        %v3520 = vadd.f32 %v3467, %v3504
        %v3521 = vadd.f32 %v3468, %v3505
        %v3522 = vadd.f32 %v3469, %v3506
        %v3523 = vadd.f32 %v3470, %v3507
        %v3524 = vadd.f32 %v3471, %v3508
        %v3525 = vadd.f32 %v3472, %v3509
        %v3526 = vadd.f32 %v3473, %v3510
        %v3527 = vadd.f32 %v3474, %v3511
        %v3528 = vadd.f32 %v3475, %v3512
        %v3529 = vadd.f32 %v3476, %v3513
        %v3530 = vadd.f32 %v3477, %v3514
        %v3531 = vadd.f32 %v3478, %v3515
        %v3532 = vadd.f32 %v3479, %v3516
        %v3533 = vsub.s32 %v257, 768
        %v3534 = vlaneseq
        %v3535 = vshrl.u32 %v3534, 7
        %v3536 = vsub.s32 0, %v3535
        %v3537 = vrot.slane %v3533, %v3536
        %vm3538 = vcmp.eq.s32.totalorder %v260, %v3537
        %vm3539 = vcmp.eq.s32.totalorder %v261, %v3537
        %vm3540 = vcmp.eq.s32.totalorder %v262, %v3537
        %vm3541 = vcmp.eq.s32.totalorder %v263, %v3537
        %vm3542 = vcmp.eq.s32.totalorder %v264, %v3537
        %vm3543 = vcmp.eq.s32.totalorder %v265, %v3537
        %vm3544 = vcmp.eq.s32.totalorder %v266, %v3537
        %vm3545 = vcmp.eq.s32.totalorder %v267, %v3537
        %vm3546 = vcmp.eq.s32.totalorder %v268, %v3537
        %vm3547 = vcmp.eq.s32.totalorder %v269, %v3537
        %vm3548 = vcmp.eq.s32.totalorder %v270, %v3537
        %vm3549 = vcmp.eq.s32.totalorder %v271, %v3537
        %vm3550 = vcmp.eq.s32.totalorder %v272, %v3537
        %vm3551 = vcmp.eq.s32.totalorder %v273, %v3537
        %vm3552 = vcmp.eq.s32.totalorder %v274, %v3537
        %vm3553 = vcmp.eq.s32.totalorder %v275, %v3537
        %v3554 = vsel %vm3538, %v675, 0.0
        %v3555 = vsel %vm3539, %v675, 0.0
        %v3556 = vsel %vm3540, %v675, 0.0
        %v3557 = vsel %vm3541, %v675, 0.0
        %v3558 = vsel %vm3542, %v675, 0.0
        %v3559 = vsel %vm3543, %v675, 0.0
        %v3560 = vsel %vm3544, %v675, 0.0
        %v3561 = vsel %vm3545, %v675, 0.0
        %v3562 = vsel %vm3546, %v675, 0.0
        %v3563 = vsel %vm3547, %v675, 0.0
        %v3564 = vsel %vm3548, %v675, 0.0
        %v3565 = vsel %vm3549, %v675, 0.0
        %v3566 = vsel %vm3550, %v675, 0.0
        %v3567 = vsel %vm3551, %v675, 0.0
        %v3568 = vsel %vm3552, %v675, 0.0
        %v3569 = vsel %vm3553, %v675, 0.0
        %v3570 = vadd.f32 %v3517, %v3554
        %v3571 = vadd.f32 %v3518, %v3555
        %v3572 = vadd.f32 %v3519, %v3556
        %v3573 = vadd.f32 %v3520, %v3557
        %v3574 = vadd.f32 %v3521, %v3558
        %v3575 = vadd.f32 %v3522, %v3559
        %v3576 = vadd.f32 %v3523, %v3560
        %v3577 = vadd.f32 %v3524, %v3561
        %v3578 = vadd.f32 %v3525, %v3562
        %v3579 = vadd.f32 %v3526, %v3563
        %v3580 = vadd.f32 %v3527, %v3564
        %v3581 = vadd.f32 %v3528, %v3565
        %v3582 = vadd.f32 %v3529, %v3566
        %v3583 = vadd.f32 %v3530, %v3567
        %v3584 = vadd.f32 %v3531, %v3568
        %v3585 = vadd.f32 %v3532, %v3569
        %v3586 = vld [vmem:[%s157 + $0x30] sm:$0xff]
        %3587 = vmatprep.subr.mxu0 0.0
        %3588 = vmatpush1.msra.mxu0 %v3570
        %3589 = vmatprep.subr.mxu0 0.0
        %3590 = vmatpush1.msra.mxu0 %v3571
        %3591 = vmatprep.subr.mxu0 0.0
        %3592 = vmatpush1.msra.mxu0 %v3572
        %3593 = vmatprep.subr.mxu0 0.0
        %3594 = vmatpush1.msra.mxu0 %v3573
        %3595 = vmatprep.subr.mxu0 0.0
        %3596 = vmatpush1.msra.mxu0 %v3574
        %3597 = vmatprep.subr.mxu0 0.0
        %3598 = vmatpush1.msra.mxu0 %v3575
        %3599 = vmatprep.subr.mxu0 0.0
        %3600 = vmatpush1.msra.mxu0 %v3576
        %3601 = vmatprep.subr.mxu0 0.0
        %3602 = vmatpush1.msra.mxu0 %v3577
        %3603 = vmatprep.subr.mxu0 0.0
        %3604 = vmatpush1.msra.mxu0 %v3578
        %3605 = vmatprep.subr.mxu0 0.0
        %3606 = vmatpush1.msra.mxu0 %v3579
        %3607 = vmatprep.subr.mxu0 0.0
        %3608 = vmatpush1.msra.mxu0 %v3580
        %3609 = vmatprep.subr.mxu0 0.0
        %3610 = vmatpush1.msra.mxu0 %v3581
        %3611 = vmatprep.subr.mxu0 0.0
        %3612 = vmatpush1.msra.mxu0 %v3582
        %3613 = vmatprep.subr.mxu0 0.0
        %3614 = vmatpush1.msra.mxu0 %v3583
        %3615 = vmatprep.subr.mxu0 0.0
        %3616 = vmatpush1.msra.mxu0 %v3584
        %3617 = vmatprep.subr.mxu0 0.0
        %3618 = vmatpush1.msra.mxu0 %v3585
        %3619 = vmatprep.subr.mxu0 0.0
        %3620 = vmatpush1.msra.mxu0 0.0
        %3621 = vmatprep.subr.mxu0 0.0
        %3622 = vmatpush1.msra.mxu0 0.0
        %3623 = vmatprep.subr.mxu0 0.0
        %3624 = vmatpush1.msra.mxu0 0.0
        %3625 = vmatprep.subr.mxu0 0.0
        %3626 = vmatpush1.msra.mxu0 0.0
        %3627 = vmatprep.subr.mxu0 0.0
        %3628 = vmatpush1.msra.mxu0 0.0
        %3629 = vmatprep.subr.mxu0 0.0
        %3630 = vmatpush1.msra.mxu0 0.0
        %3631 = vmatprep.subr.mxu0 0.0
        %3632 = vmatpush1.msra.mxu0 0.0
        %3633 = vmatprep.subr.mxu0 0.0
        %3634 = vmatpush1.msra.mxu0 0.0
        %3635 = vmatprep.subr.mxu0 0.0
        %3636 = vmatpush1.msra.mxu0 0.0
        %3637 = vmatprep.subr.mxu0 0.0
        %3638 = vmatpush1.msra.mxu0 0.0
        %3639 = vmatprep.subr.mxu0 0.0
        %3640 = vmatpush1.msra.mxu0 0.0
        %3641 = vmatprep.subr.mxu0 0.0
        %3642 = vmatpush1.msra.mxu0 0.0
        %3643 = vmatprep.subr.mxu0 0.0
        %3644 = vmatpush1.msra.mxu0 0.0
        %3645 = vmatprep.subr.mxu0 0.0
        %3646 = vmatpush1.msra.mxu0 0.0
        %3647 = vmatprep.subr.mxu0 0.0
        %3648 = vmatpush1.msra.mxu0 0.0
        %3649 = vmatprep.subr.mxu0 0.0
        %3650 = vmatpush1.msra.mxu0 0.0
        %3651 = vmatprep.mubr.f32.mxu0 0.0
        %3652 = vmatmul.mubr.f32.gmra.mrb[0].mxu0 %v3586
        %v3653 = vpop.f32.mrb[0].mxu0
        %v3654 = vadd.f32 0.0, %v3653
        %v3655 = vpop.f32.mrb[0].mxu0
        %3656 = vdwg.mxu0
        %v3657 = vadd.f32 %v3177, %v3654
        %v3658 = vsub.s32 %v223, 896
        %v3659 = vlaneseq
        %v3660 = vshrl.u32 %v3659, 7
        %v3661 = vsub.s32 0, %v3660
        %v3662 = vrot.slane %v3658, %v3661
        %vm3663 = vcmp.eq.s32.totalorder %v260, %v3662
        %vm3664 = vcmp.eq.s32.totalorder %v261, %v3662
        %vm3665 = vcmp.eq.s32.totalorder %v262, %v3662
        %vm3666 = vcmp.eq.s32.totalorder %v263, %v3662
        %vm3667 = vcmp.eq.s32.totalorder %v264, %v3662
        %vm3668 = vcmp.eq.s32.totalorder %v265, %v3662
        %vm3669 = vcmp.eq.s32.totalorder %v266, %v3662
        %vm3670 = vcmp.eq.s32.totalorder %v267, %v3662
        %vm3671 = vcmp.eq.s32.totalorder %v268, %v3662
        %vm3672 = vcmp.eq.s32.totalorder %v269, %v3662
        %vm3673 = vcmp.eq.s32.totalorder %v270, %v3662
        %vm3674 = vcmp.eq.s32.totalorder %v271, %v3662
        %vm3675 = vcmp.eq.s32.totalorder %v272, %v3662
        %vm3676 = vcmp.eq.s32.totalorder %v273, %v3662
        %vm3677 = vcmp.eq.s32.totalorder %v274, %v3662
        %vm3678 = vcmp.eq.s32.totalorder %v275, %v3662
        %v3679 = vsel %vm3663, %v299, 0.0
        %v3680 = vsel %vm3664, %v299, 0.0
        %v3681 = vsel %vm3665, %v299, 0.0
        %v3682 = vsel %vm3666, %v299, 0.0
        %v3683 = vsel %vm3667, %v299, 0.0
        %v3684 = vsel %vm3668, %v299, 0.0
        %v3685 = vsel %vm3669, %v299, 0.0
        %v3686 = vsel %vm3670, %v299, 0.0
        %v3687 = vsel %vm3671, %v299, 0.0
        %v3688 = vsel %vm3672, %v299, 0.0
        %v3689 = vsel %vm3673, %v299, 0.0
        %v3690 = vsel %vm3674, %v299, 0.0
        %v3691 = vsel %vm3675, %v299, 0.0
        %v3692 = vsel %vm3676, %v299, 0.0
        %v3693 = vsel %vm3677, %v299, 0.0
        %v3694 = vsel %vm3678, %v299, 0.0
        %v3695 = vsub.s32 %v229, 896
        %v3696 = vlaneseq
        %v3697 = vshrl.u32 %v3696, 7
        %v3698 = vsub.s32 0, %v3697
        %v3699 = vrot.slane %v3695, %v3698
        %vm3700 = vcmp.eq.s32.totalorder %v260, %v3699
        %vm3701 = vcmp.eq.s32.totalorder %v261, %v3699
        %vm3702 = vcmp.eq.s32.totalorder %v262, %v3699
        %vm3703 = vcmp.eq.s32.totalorder %v263, %v3699
        %vm3704 = vcmp.eq.s32.totalorder %v264, %v3699
        %vm3705 = vcmp.eq.s32.totalorder %v265, %v3699
        %vm3706 = vcmp.eq.s32.totalorder %v266, %v3699
        %vm3707 = vcmp.eq.s32.totalorder %v267, %v3699
        %vm3708 = vcmp.eq.s32.totalorder %v268, %v3699
        %vm3709 = vcmp.eq.s32.totalorder %v269, %v3699
        %vm3710 = vcmp.eq.s32.totalorder %v270, %v3699
        %vm3711 = vcmp.eq.s32.totalorder %v271, %v3699
        %vm3712 = vcmp.eq.s32.totalorder %v272, %v3699
        %vm3713 = vcmp.eq.s32.totalorder %v273, %v3699
        %vm3714 = vcmp.eq.s32.totalorder %v274, %v3699
        %vm3715 = vcmp.eq.s32.totalorder %v275, %v3699
        %v3716 = vsel %vm3700, %v339, 0.0
        %v3717 = vsel %vm3701, %v339, 0.0
        %v3718 = vsel %vm3702, %v339, 0.0
        %v3719 = vsel %vm3703, %v339, 0.0
        %v3720 = vsel %vm3704, %v339, 0.0
        %v3721 = vsel %vm3705, %v339, 0.0
        %v3722 = vsel %vm3706, %v339, 0.0
        %v3723 = vsel %vm3707, %v339, 0.0
        %v3724 = vsel %vm3708, %v339, 0.0
        %v3725 = vsel %vm3709, %v339, 0.0
        %v3726 = vsel %vm3710, %v339, 0.0
        %v3727 = vsel %vm3711, %v339, 0.0
        %v3728 = vsel %vm3712, %v339, 0.0
        %v3729 = vsel %vm3713, %v339, 0.0
        %v3730 = vsel %vm3714, %v339, 0.0
        %v3731 = vsel %vm3715, %v339, 0.0
        %v3732 = vadd.f32 %v3679, %v3716
        %v3733 = vadd.f32 %v3680, %v3717
        %v3734 = vadd.f32 %v3681, %v3718
        %v3735 = vadd.f32 %v3682, %v3719
        %v3736 = vadd.f32 %v3683, %v3720
        %v3737 = vadd.f32 %v3684, %v3721
        %v3738 = vadd.f32 %v3685, %v3722
        %v3739 = vadd.f32 %v3686, %v3723
        %v3740 = vadd.f32 %v3687, %v3724
        %v3741 = vadd.f32 %v3688, %v3725
        %v3742 = vadd.f32 %v3689, %v3726
        %v3743 = vadd.f32 %v3690, %v3727
        %v3744 = vadd.f32 %v3691, %v3728
        %v3745 = vadd.f32 %v3692, %v3729
        %v3746 = vadd.f32 %v3693, %v3730
        %v3747 = vadd.f32 %v3694, %v3731
        %v3748 = vsub.s32 %v235, 896
        %v3749 = vlaneseq
        %v3750 = vshrl.u32 %v3749, 7
        %v3751 = vsub.s32 0, %v3750
        %v3752 = vrot.slane %v3748, %v3751
        %vm3753 = vcmp.eq.s32.totalorder %v260, %v3752
        %vm3754 = vcmp.eq.s32.totalorder %v261, %v3752
        %vm3755 = vcmp.eq.s32.totalorder %v262, %v3752
        %vm3756 = vcmp.eq.s32.totalorder %v263, %v3752
        %vm3757 = vcmp.eq.s32.totalorder %v264, %v3752
        %vm3758 = vcmp.eq.s32.totalorder %v265, %v3752
        %vm3759 = vcmp.eq.s32.totalorder %v266, %v3752
        %vm3760 = vcmp.eq.s32.totalorder %v267, %v3752
        %vm3761 = vcmp.eq.s32.totalorder %v268, %v3752
        %vm3762 = vcmp.eq.s32.totalorder %v269, %v3752
        %vm3763 = vcmp.eq.s32.totalorder %v270, %v3752
        %vm3764 = vcmp.eq.s32.totalorder %v271, %v3752
        %vm3765 = vcmp.eq.s32.totalorder %v272, %v3752
        %vm3766 = vcmp.eq.s32.totalorder %v273, %v3752
        %vm3767 = vcmp.eq.s32.totalorder %v274, %v3752
        %vm3768 = vcmp.eq.s32.totalorder %v275, %v3752
        %v3769 = vsel %vm3753, %v395, 0.0
        %v3770 = vsel %vm3754, %v395, 0.0
        %v3771 = vsel %vm3755, %v395, 0.0
        %v3772 = vsel %vm3756, %v395, 0.0
        %v3773 = vsel %vm3757, %v395, 0.0
        %v3774 = vsel %vm3758, %v395, 0.0
        %v3775 = vsel %vm3759, %v395, 0.0
        %v3776 = vsel %vm3760, %v395, 0.0
        %v3777 = vsel %vm3761, %v395, 0.0
        %v3778 = vsel %vm3762, %v395, 0.0
        %v3779 = vsel %vm3763, %v395, 0.0
        %v3780 = vsel %vm3764, %v395, 0.0
        %v3781 = vsel %vm3765, %v395, 0.0
        %v3782 = vsel %vm3766, %v395, 0.0
        %v3783 = vsel %vm3767, %v395, 0.0
        %v3784 = vsel %vm3768, %v395, 0.0
        %v3785 = vadd.f32 %v3732, %v3769
        %v3786 = vadd.f32 %v3733, %v3770
        %v3787 = vadd.f32 %v3734, %v3771
        %v3788 = vadd.f32 %v3735, %v3772
        %v3789 = vadd.f32 %v3736, %v3773
        %v3790 = vadd.f32 %v3737, %v3774
        %v3791 = vadd.f32 %v3738, %v3775
        %v3792 = vadd.f32 %v3739, %v3776
        %v3793 = vadd.f32 %v3740, %v3777
        %v3794 = vadd.f32 %v3741, %v3778
        %v3795 = vadd.f32 %v3742, %v3779
        %v3796 = vadd.f32 %v3743, %v3780
        %v3797 = vadd.f32 %v3744, %v3781
        %v3798 = vadd.f32 %v3745, %v3782
        %v3799 = vadd.f32 %v3746, %v3783
        %v3800 = vadd.f32 %v3747, %v3784
        %v3801 = vsub.s32 %v239, 896
        %v3802 = vlaneseq
        %v3803 = vshrl.u32 %v3802, 7
        %v3804 = vsub.s32 0, %v3803
        %v3805 = vrot.slane %v3801, %v3804
        %vm3806 = vcmp.eq.s32.totalorder %v260, %v3805
        %vm3807 = vcmp.eq.s32.totalorder %v261, %v3805
        %vm3808 = vcmp.eq.s32.totalorder %v262, %v3805
        %vm3809 = vcmp.eq.s32.totalorder %v263, %v3805
        %vm3810 = vcmp.eq.s32.totalorder %v264, %v3805
        %vm3811 = vcmp.eq.s32.totalorder %v265, %v3805
        %vm3812 = vcmp.eq.s32.totalorder %v266, %v3805
        %vm3813 = vcmp.eq.s32.totalorder %v267, %v3805
        %vm3814 = vcmp.eq.s32.totalorder %v268, %v3805
        %vm3815 = vcmp.eq.s32.totalorder %v269, %v3805
        %vm3816 = vcmp.eq.s32.totalorder %v270, %v3805
        %vm3817 = vcmp.eq.s32.totalorder %v271, %v3805
        %vm3818 = vcmp.eq.s32.totalorder %v272, %v3805
        %vm3819 = vcmp.eq.s32.totalorder %v273, %v3805
        %vm3820 = vcmp.eq.s32.totalorder %v274, %v3805
        %vm3821 = vcmp.eq.s32.totalorder %v275, %v3805
        %v3822 = vsel %vm3806, %v451, 0.0
        %v3823 = vsel %vm3807, %v451, 0.0
        %v3824 = vsel %vm3808, %v451, 0.0
        %v3825 = vsel %vm3809, %v451, 0.0
        %v3826 = vsel %vm3810, %v451, 0.0
        %v3827 = vsel %vm3811, %v451, 0.0
        %v3828 = vsel %vm3812, %v451, 0.0
        %v3829 = vsel %vm3813, %v451, 0.0
        %v3830 = vsel %vm3814, %v451, 0.0
        %v3831 = vsel %vm3815, %v451, 0.0
        %v3832 = vsel %vm3816, %v451, 0.0
        %v3833 = vsel %vm3817, %v451, 0.0
        %v3834 = vsel %vm3818, %v451, 0.0
        %v3835 = vsel %vm3819, %v451, 0.0
        %v3836 = vsel %vm3820, %v451, 0.0
        %v3837 = vsel %vm3821, %v451, 0.0
        %v3838 = vadd.f32 %v3785, %v3822
        %v3839 = vadd.f32 %v3786, %v3823
        %v3840 = vadd.f32 %v3787, %v3824
        %v3841 = vadd.f32 %v3788, %v3825
        %v3842 = vadd.f32 %v3789, %v3826
        %v3843 = vadd.f32 %v3790, %v3827
        %v3844 = vadd.f32 %v3791, %v3828
        %v3845 = vadd.f32 %v3792, %v3829
        %v3846 = vadd.f32 %v3793, %v3830
        %v3847 = vadd.f32 %v3794, %v3831
        %v3848 = vadd.f32 %v3795, %v3832
        %v3849 = vadd.f32 %v3796, %v3833
        %v3850 = vadd.f32 %v3797, %v3834
        %v3851 = vadd.f32 %v3798, %v3835
        %v3852 = vadd.f32 %v3799, %v3836
        %v3853 = vadd.f32 %v3800, %v3837
        %v3854 = vsub.s32 %v245, 896
        %v3855 = vlaneseq
        %v3856 = vshrl.u32 %v3855, 7
        %v3857 = vsub.s32 0, %v3856
        %v3858 = vrot.slane %v3854, %v3857
        %vm3859 = vcmp.eq.s32.totalorder %v260, %v3858
        %vm3860 = vcmp.eq.s32.totalorder %v261, %v3858
        %vm3861 = vcmp.eq.s32.totalorder %v262, %v3858
        %vm3862 = vcmp.eq.s32.totalorder %v263, %v3858
        %vm3863 = vcmp.eq.s32.totalorder %v264, %v3858
        %vm3864 = vcmp.eq.s32.totalorder %v265, %v3858
        %vm3865 = vcmp.eq.s32.totalorder %v266, %v3858
        %vm3866 = vcmp.eq.s32.totalorder %v267, %v3858
        %vm3867 = vcmp.eq.s32.totalorder %v268, %v3858
        %vm3868 = vcmp.eq.s32.totalorder %v269, %v3858
        %vm3869 = vcmp.eq.s32.totalorder %v270, %v3858
        %vm3870 = vcmp.eq.s32.totalorder %v271, %v3858
        %vm3871 = vcmp.eq.s32.totalorder %v272, %v3858
        %vm3872 = vcmp.eq.s32.totalorder %v273, %v3858
        %vm3873 = vcmp.eq.s32.totalorder %v274, %v3858
        %vm3874 = vcmp.eq.s32.totalorder %v275, %v3858
        %v3875 = vsel %vm3859, %v507, 0.0
        %v3876 = vsel %vm3860, %v507, 0.0
        %v3877 = vsel %vm3861, %v507, 0.0
        %v3878 = vsel %vm3862, %v507, 0.0
        %v3879 = vsel %vm3863, %v507, 0.0
        %v3880 = vsel %vm3864, %v507, 0.0
        %v3881 = vsel %vm3865, %v507, 0.0
        %v3882 = vsel %vm3866, %v507, 0.0
        %v3883 = vsel %vm3867, %v507, 0.0
        %v3884 = vsel %vm3868, %v507, 0.0
        %v3885 = vsel %vm3869, %v507, 0.0
        %v3886 = vsel %vm3870, %v507, 0.0
        %v3887 = vsel %vm3871, %v507, 0.0
        %v3888 = vsel %vm3872, %v507, 0.0
        %v3889 = vsel %vm3873, %v507, 0.0
        %v3890 = vsel %vm3874, %v507, 0.0
        %v3891 = vadd.f32 %v3838, %v3875
        %v3892 = vadd.f32 %v3839, %v3876
        %v3893 = vadd.f32 %v3840, %v3877
        %v3894 = vadd.f32 %v3841, %v3878
        %v3895 = vadd.f32 %v3842, %v3879
        %v3896 = vadd.f32 %v3843, %v3880
        %v3897 = vadd.f32 %v3844, %v3881
        %v3898 = vadd.f32 %v3845, %v3882
        %v3899 = vadd.f32 %v3846, %v3883
        %v3900 = vadd.f32 %v3847, %v3884
        %v3901 = vadd.f32 %v3848, %v3885
        %v3902 = vadd.f32 %v3849, %v3886
        %v3903 = vadd.f32 %v3850, %v3887
        %v3904 = vadd.f32 %v3851, %v3888
        %v3905 = vadd.f32 %v3852, %v3889
        %v3906 = vadd.f32 %v3853, %v3890
        %v3907 = vsub.s32 %v249, 896
        %v3908 = vlaneseq
        %v3909 = vshrl.u32 %v3908, 7
        %v3910 = vsub.s32 0, %v3909
        %v3911 = vrot.slane %v3907, %v3910
        %vm3912 = vcmp.eq.s32.totalorder %v260, %v3911
        %vm3913 = vcmp.eq.s32.totalorder %v261, %v3911
        %vm3914 = vcmp.eq.s32.totalorder %v262, %v3911
        %vm3915 = vcmp.eq.s32.totalorder %v263, %v3911
        %vm3916 = vcmp.eq.s32.totalorder %v264, %v3911
        %vm3917 = vcmp.eq.s32.totalorder %v265, %v3911
        %vm3918 = vcmp.eq.s32.totalorder %v266, %v3911
        %vm3919 = vcmp.eq.s32.totalorder %v267, %v3911
        %vm3920 = vcmp.eq.s32.totalorder %v268, %v3911
        %vm3921 = vcmp.eq.s32.totalorder %v269, %v3911
        %vm3922 = vcmp.eq.s32.totalorder %v270, %v3911
        %vm3923 = vcmp.eq.s32.totalorder %v271, %v3911
        %vm3924 = vcmp.eq.s32.totalorder %v272, %v3911
        %vm3925 = vcmp.eq.s32.totalorder %v273, %v3911
        %vm3926 = vcmp.eq.s32.totalorder %v274, %v3911
        %vm3927 = vcmp.eq.s32.totalorder %v275, %v3911
        %v3928 = vsel %vm3912, %v563, 0.0
        %v3929 = vsel %vm3913, %v563, 0.0
        %v3930 = vsel %vm3914, %v563, 0.0
        %v3931 = vsel %vm3915, %v563, 0.0
        %v3932 = vsel %vm3916, %v563, 0.0
        %v3933 = vsel %vm3917, %v563, 0.0
        %v3934 = vsel %vm3918, %v563, 0.0
        %v3935 = vsel %vm3919, %v563, 0.0
        %v3936 = vsel %vm3920, %v563, 0.0
        %v3937 = vsel %vm3921, %v563, 0.0
        %v3938 = vsel %vm3922, %v563, 0.0
        %v3939 = vsel %vm3923, %v563, 0.0
        %v3940 = vsel %vm3924, %v563, 0.0
        %v3941 = vsel %vm3925, %v563, 0.0
        %v3942 = vsel %vm3926, %v563, 0.0
        %v3943 = vsel %vm3927, %v563, 0.0
        %v3944 = vadd.f32 %v3891, %v3928
        %v3945 = vadd.f32 %v3892, %v3929
        %v3946 = vadd.f32 %v3893, %v3930
        %v3947 = vadd.f32 %v3894, %v3931
        %v3948 = vadd.f32 %v3895, %v3932
        %v3949 = vadd.f32 %v3896, %v3933
        %v3950 = vadd.f32 %v3897, %v3934
        %v3951 = vadd.f32 %v3898, %v3935
        %v3952 = vadd.f32 %v3899, %v3936
        %v3953 = vadd.f32 %v3900, %v3937
        %v3954 = vadd.f32 %v3901, %v3938
        %v3955 = vadd.f32 %v3902, %v3939
        %v3956 = vadd.f32 %v3903, %v3940
        %v3957 = vadd.f32 %v3904, %v3941
        %v3958 = vadd.f32 %v3905, %v3942
        %v3959 = vadd.f32 %v3906, %v3943
        %v3960 = vsub.s32 %v253, 896
        %v3961 = vlaneseq
        %v3962 = vshrl.u32 %v3961, 7
        %v3963 = vsub.s32 0, %v3962
        %v3964 = vrot.slane %v3960, %v3963
        %vm3965 = vcmp.eq.s32.totalorder %v260, %v3964
        %vm3966 = vcmp.eq.s32.totalorder %v261, %v3964
        %vm3967 = vcmp.eq.s32.totalorder %v262, %v3964
        %vm3968 = vcmp.eq.s32.totalorder %v263, %v3964
        %vm3969 = vcmp.eq.s32.totalorder %v264, %v3964
        %vm3970 = vcmp.eq.s32.totalorder %v265, %v3964
        %vm3971 = vcmp.eq.s32.totalorder %v266, %v3964
        %vm3972 = vcmp.eq.s32.totalorder %v267, %v3964
        %vm3973 = vcmp.eq.s32.totalorder %v268, %v3964
        %vm3974 = vcmp.eq.s32.totalorder %v269, %v3964
        %vm3975 = vcmp.eq.s32.totalorder %v270, %v3964
        %vm3976 = vcmp.eq.s32.totalorder %v271, %v3964
        %vm3977 = vcmp.eq.s32.totalorder %v272, %v3964
        %vm3978 = vcmp.eq.s32.totalorder %v273, %v3964
        %vm3979 = vcmp.eq.s32.totalorder %v274, %v3964
        %vm3980 = vcmp.eq.s32.totalorder %v275, %v3964
        %v3981 = vsel %vm3965, %v619, 0.0
        %v3982 = vsel %vm3966, %v619, 0.0
        %v3983 = vsel %vm3967, %v619, 0.0
        %v3984 = vsel %vm3968, %v619, 0.0
        %v3985 = vsel %vm3969, %v619, 0.0
        %v3986 = vsel %vm3970, %v619, 0.0
        %v3987 = vsel %vm3971, %v619, 0.0
        %v3988 = vsel %vm3972, %v619, 0.0
        %v3989 = vsel %vm3973, %v619, 0.0
        %v3990 = vsel %vm3974, %v619, 0.0
        %v3991 = vsel %vm3975, %v619, 0.0
        %v3992 = vsel %vm3976, %v619, 0.0
        %v3993 = vsel %vm3977, %v619, 0.0
        %v3994 = vsel %vm3978, %v619, 0.0
        %v3995 = vsel %vm3979, %v619, 0.0
        %v3996 = vsel %vm3980, %v619, 0.0
        %v3997 = vadd.f32 %v3944, %v3981
        %v3998 = vadd.f32 %v3945, %v3982
        %v3999 = vadd.f32 %v3946, %v3983
        %v4000 = vadd.f32 %v3947, %v3984
        %v4001 = vadd.f32 %v3948, %v3985
        %v4002 = vadd.f32 %v3949, %v3986
        %v4003 = vadd.f32 %v3950, %v3987
        %v4004 = vadd.f32 %v3951, %v3988
        %v4005 = vadd.f32 %v3952, %v3989
        %v4006 = vadd.f32 %v3953, %v3990
        %v4007 = vadd.f32 %v3954, %v3991
        %v4008 = vadd.f32 %v3955, %v3992
        %v4009 = vadd.f32 %v3956, %v3993
        %v4010 = vadd.f32 %v3957, %v3994
        %v4011 = vadd.f32 %v3958, %v3995
        %v4012 = vadd.f32 %v3959, %v3996
        %v4013 = vsub.s32 %v257, 896
        %v4014 = vlaneseq
        %v4015 = vshrl.u32 %v4014, 7
        %v4016 = vsub.s32 0, %v4015
        %v4017 = vrot.slane %v4013, %v4016
        %vm4018 = vcmp.eq.s32.totalorder %v260, %v4017
        %vm4019 = vcmp.eq.s32.totalorder %v261, %v4017
        %vm4020 = vcmp.eq.s32.totalorder %v262, %v4017
        %vm4021 = vcmp.eq.s32.totalorder %v263, %v4017
        %vm4022 = vcmp.eq.s32.totalorder %v264, %v4017
        %vm4023 = vcmp.eq.s32.totalorder %v265, %v4017
        %vm4024 = vcmp.eq.s32.totalorder %v266, %v4017
        %vm4025 = vcmp.eq.s32.totalorder %v267, %v4017
        %vm4026 = vcmp.eq.s32.totalorder %v268, %v4017
        %vm4027 = vcmp.eq.s32.totalorder %v269, %v4017
        %vm4028 = vcmp.eq.s32.totalorder %v270, %v4017
        %vm4029 = vcmp.eq.s32.totalorder %v271, %v4017
        %vm4030 = vcmp.eq.s32.totalorder %v272, %v4017
        %vm4031 = vcmp.eq.s32.totalorder %v273, %v4017
        %vm4032 = vcmp.eq.s32.totalorder %v274, %v4017
        %vm4033 = vcmp.eq.s32.totalorder %v275, %v4017
        %v4034 = vsel %vm4018, %v675, 0.0
        %v4035 = vsel %vm4019, %v675, 0.0
        %v4036 = vsel %vm4020, %v675, 0.0
        %v4037 = vsel %vm4021, %v675, 0.0
        %v4038 = vsel %vm4022, %v675, 0.0
        %v4039 = vsel %vm4023, %v675, 0.0
        %v4040 = vsel %vm4024, %v675, 0.0
        %v4041 = vsel %vm4025, %v675, 0.0
        %v4042 = vsel %vm4026, %v675, 0.0
        %v4043 = vsel %vm4027, %v675, 0.0
        %v4044 = vsel %vm4028, %v675, 0.0
        %v4045 = vsel %vm4029, %v675, 0.0
        %v4046 = vsel %vm4030, %v675, 0.0
        %v4047 = vsel %vm4031, %v675, 0.0
        %v4048 = vsel %vm4032, %v675, 0.0
        %v4049 = vsel %vm4033, %v675, 0.0
        %v4050 = vadd.f32 %v3997, %v4034
        %v4051 = vadd.f32 %v3998, %v4035
        %v4052 = vadd.f32 %v3999, %v4036
        %v4053 = vadd.f32 %v4000, %v4037
        %v4054 = vadd.f32 %v4001, %v4038
        %v4055 = vadd.f32 %v4002, %v4039
        %v4056 = vadd.f32 %v4003, %v4040
        %v4057 = vadd.f32 %v4004, %v4041
        %v4058 = vadd.f32 %v4005, %v4042
        %v4059 = vadd.f32 %v4006, %v4043
        %v4060 = vadd.f32 %v4007, %v4044
        %v4061 = vadd.f32 %v4008, %v4045
        %v4062 = vadd.f32 %v4009, %v4046
        %v4063 = vadd.f32 %v4010, %v4047
        %v4064 = vadd.f32 %v4011, %v4048
        %v4065 = vadd.f32 %v4012, %v4049
        %v4066 = vld [vmem:[%s157 + $0x38] sm:$0xff]
        %4067 = vmatprep.subr.mxu0 0.0
        %4068 = vmatpush1.msra.mxu0 %v4050
        %4069 = vmatprep.subr.mxu0 0.0
        %4070 = vmatpush1.msra.mxu0 %v4051
        %4071 = vmatprep.subr.mxu0 0.0
        %4072 = vmatpush1.msra.mxu0 %v4052
        %4073 = vmatprep.subr.mxu0 0.0
        %4074 = vmatpush1.msra.mxu0 %v4053
        %4075 = vmatprep.subr.mxu0 0.0
        %4076 = vmatpush1.msra.mxu0 %v4054
        %4077 = vmatprep.subr.mxu0 0.0
        %4078 = vmatpush1.msra.mxu0 %v4055
        %4079 = vmatprep.subr.mxu0 0.0
        %4080 = vmatpush1.msra.mxu0 %v4056
        %4081 = vmatprep.subr.mxu0 0.0
        %4082 = vmatpush1.msra.mxu0 %v4057
        %4083 = vmatprep.subr.mxu0 0.0
        %4084 = vmatpush1.msra.mxu0 %v4058
        %4085 = vmatprep.subr.mxu0 0.0
        %4086 = vmatpush1.msra.mxu0 %v4059
        %4087 = vmatprep.subr.mxu0 0.0
        %4088 = vmatpush1.msra.mxu0 %v4060
        %4089 = vmatprep.subr.mxu0 0.0
        %4090 = vmatpush1.msra.mxu0 %v4061
        %4091 = vmatprep.subr.mxu0 0.0
        %4092 = vmatpush1.msra.mxu0 %v4062
        %4093 = vmatprep.subr.mxu0 0.0
        %4094 = vmatpush1.msra.mxu0 %v4063
        %4095 = vmatprep.subr.mxu0 0.0
        %4096 = vmatpush1.msra.mxu0 %v4064
        %4097 = vmatprep.subr.mxu0 0.0
        %4098 = vmatpush1.msra.mxu0 %v4065
        %4099 = vmatprep.subr.mxu0 0.0
        %4100 = vmatpush1.msra.mxu0 0.0
        %4101 = vmatprep.subr.mxu0 0.0
        %4102 = vmatpush1.msra.mxu0 0.0
        %4103 = vmatprep.subr.mxu0 0.0
        %4104 = vmatpush1.msra.mxu0 0.0
        %4105 = vmatprep.subr.mxu0 0.0
        %4106 = vmatpush1.msra.mxu0 0.0
        %4107 = vmatprep.subr.mxu0 0.0
        %4108 = vmatpush1.msra.mxu0 0.0
        %4109 = vmatprep.subr.mxu0 0.0
        %4110 = vmatpush1.msra.mxu0 0.0
        %4111 = vmatprep.subr.mxu0 0.0
        %4112 = vmatpush1.msra.mxu0 0.0
        %4113 = vmatprep.subr.mxu0 0.0
        %4114 = vmatpush1.msra.mxu0 0.0
        %4115 = vmatprep.subr.mxu0 0.0
        %4116 = vmatpush1.msra.mxu0 0.0
        %4117 = vmatprep.subr.mxu0 0.0
        %4118 = vmatpush1.msra.mxu0 0.0
        %4119 = vmatprep.subr.mxu0 0.0
        %4120 = vmatpush1.msra.mxu0 0.0
        %4121 = vmatprep.subr.mxu0 0.0
        %4122 = vmatpush1.msra.mxu0 0.0
        %4123 = vmatprep.subr.mxu0 0.0
        %4124 = vmatpush1.msra.mxu0 0.0
        %4125 = vmatprep.subr.mxu0 0.0
        %4126 = vmatpush1.msra.mxu0 0.0
        %4127 = vmatprep.subr.mxu0 0.0
        %4128 = vmatpush1.msra.mxu0 0.0
        %4129 = vmatprep.subr.mxu0 0.0
        %4130 = vmatpush1.msra.mxu0 0.0
        %4131 = vmatprep.mubr.f32.mxu0 0.0
        %4132 = vmatmul.mubr.f32.gmra.mrb[0].mxu0 %v4066
        %v4133 = vpop.f32.mrb[0].mxu0
        %v4134 = vadd.f32 0.0, %v4133
        %v4135 = vpop.f32.mrb[0].mxu0
        %4136 = vdwg.mxu0
        %v4137 = vadd.f32 %v3657, %v4134
        %4138 = vst [vmem:[%s177] sm:$0xff] %v4137
        %s4139 = sand.u32 %s80, 1
        %s4140 = scalar_lea.sflag [#allocation6], %s4139
        %s4141 = sand.u32 %s80, 1
        %s4142 = smul.addr %s4141, 8
        %s4143 = scalar_lea.vmem [#allocation9], %s4142
        // Predicated region
        $region37: #{tpu_custom_call.1} parent=27 // pred_check
          %p4144 = pneg %p90
        $region38: #{tpu_custom_call.1} parent=27 // pred_check_branch
          %4146 = sbr.rel (%p4144) target = $region40
        $region39: #{tpu_custom_call.1} parent=27 // pred_region
          %s4148 = ssub.s32 128, 128
          %4149 = vsyncadd %s4140, %s4148
          %s4150 = smul.addr %s25, 128
          %s4151 = scalar_lea.hbm %s3, %s4150
          %s4153 = sshll.u32 %s4143, 4
          %s4154 = int_to_ptr.vmem [resolvable:$true] %s4153
          %4156 = dma.vmem_to_hbm [thread:$0]  %s4154, 128, %s4151, %s4140
        $region40: #{tpu_custom_call.1} parent=27 // pred_fallthru
          _
      $region28: #{tpu_custom_call.1} parent=5 // pred_fallthru
        _
      %p4157 = scmp.le.s32.totalorder 2, %s20
      // Predicated region
      $region41: #{tpu_custom_call.1} parent=5 // pred_check
        %p4158 = pneg %p4157
      $region42: #{tpu_custom_call.1} parent=5 // pred_check_branch
        %4160 = sbr.rel (%p4158) target = $region44
      $region43: #{tpu_custom_call.1} parent=5 // pred_region
        %s4161 = ssub.s32 %s20, 2
        // Predicated region
        $region45: #{tpu_custom_call.1} parent=43 // pred_check
          %p4162 = pneg %p96
        $region46: #{tpu_custom_call.1} parent=43 // pred_check_branch
          %4164 = sbr.rel (%p4162) target = $region48
        $region47: #{tpu_custom_call.1} parent=43 // pred_region
          %s4165 = sand.u32 %s81, 1
          %s4166 = scalar_lea.sflag [#allocation6], %s4165
          %s4167 = sand.u32 %s81, 1
          %s4168 = smul.addr %s4167, 8
          %s4169 = scalar_lea.vmem [#allocation9], %s4168
          %4170 = dma.done %s4166, 128
        $region48: #{tpu_custom_call.1} parent=43 // pred_fallthru
          _
      $region44: #{tpu_custom_call.1} parent=5 // pred_fallthru
        _
    $region6: #{tpu_custom_call.1} parent=1 // loop_footer
      %s24 = sadd.s32 1, %s20
    $region7: #{tpu_custom_call.1} parent=1 // loop_footer_branch
      %19 = sbr.rel target = $region3
    $region8: #{tpu_custom_call.1} parent=1 // loop_exit
      _
    %4171 = vsyncpa [#allocation5], 1
    %s4172 = scalar_lea.sflag [#allocation5], 1
    %4173 = vsyncpa %s4172, 1
    %4174 = vsyncpa [#allocation8], 1
    %s4175 = scalar_lea.sflag [#allocation8], 1
    %4176 = vsyncpa %s4175, 1
    %4177 = vsyncpa [#allocation6], 1
    %s4178 = scalar_lea.sflag [#allocation6], 1
    %4179 = vsyncpa %s4178, 1

</llo_original>
